<compile_context>
chip_gen: v7x
topology: tpu7x:2x2x1
jax: 0.10.0
libtpu: 0.0.40
codegen_flags: <defaults>
</compile_context>

<pallas_src>
import math
import numpy as np

import jax
import jax.numpy as jnp
from jax.experimental import pallas as pl
from jax.experimental.pallas import tpu as pltpu

# ----- synthetic "opt" hyperparameters (small, consistent with the module) ---
NUM_CHANNELS = 4          # opt.num_channels
IMAGE_SIZE = 16           # opt.image_size
MIN_FEATURE_SIZE = 4      # opt.min_feature_size
NUM_DISC_LAYERS = 2       # opt.num_discriminator_layers
BN_EPS = 1e-5


# ---------------------------------------------------------------------------
# Init-time lowering: Conv2d(k=5, s=2, p=2, bias=False) -> dense matrix
# with NCHW-flat ordering on both sides (rows: (ci, iy, ix), cols: (co, oy, ox)).
# ---------------------------------------------------------------------------
def _conv_to_dense(w_oihw, h_in, w_in, stride=2, pad=2):
    w_np = np.asarray(w_oihw, np.float32)          # (Cout, Cin, 5, 5)
    c_out, c_in, kh, kw = w_np.shape
    h_out = (h_in + 2 * pad - kh) // stride + 1
    w_out = (w_in + 2 * pad - kw) // stride + 1
    d = np.zeros((c_in * h_in * w_in, c_out * h_out * w_out), np.float32)
    for oy in range(h_out):
        for ox in range(w_out):
            col0 = oy * w_out + ox
            for ky in range(kh):
                iy = stride * oy + ky - pad
                if iy < 0 or iy >= h_in:
                    continue
                for kx in range(kw):
                    ix = stride * ox + kx - pad
                    if ix < 0 or ix >= w_in:
                        continue
                    rows = np.arange(c_in) * (h_in * w_in) + iy * w_in + ix
                    cols = np.arange(c_out) * (h_out * w_out) + col0
                    d[np.ix_(rows, cols)] = w_np[:, :, ky, kx].T   # (Cin, Cout)
    return d


def _bn_gather_masks(c, hw):
    """0/1 channel-gather masks for the NCHW-flat layout, built once at init.

    s  (f, c): s[p, ch] = 1 iff p // hw == ch   (flat -> per-channel gather)
    st (c, f): its transpose                     (per-channel -> flat broadcast)
    """
    ch_of_flat = np.repeat(np.arange(c), hw)                       # (f,)
    s = (ch_of_flat[:, None] == np.arange(c)[None, :]).astype(np.float32)
    return jnp.asarray(s), jnp.asarray(np.ascontiguousarray(s.T))


# ---------------------------------------------------------------------------
# In-kernel helpers (f32 elementwise math; no reshapes / transposes / iota)
# ---------------------------------------------------------------------------
def _bn2d_flat(h, hw, gamma, beta, s_mat, st_mat):
    """BatchNorm2d (training mode, biased var) on NCHW-flat h: (M, c*hw).

    Two fused tiny matmuls with precomputed 0/1 masks:
      [col_sum; col_sq] (2,f) @ s_mat (f,c)  -> per-channel sums
      [scale ; shift  ] (2,c) @ st_mat (c,f) -> flat-layout affine params
    """
    f32 = jnp.float32
    m = h.shape[0]
    cnt = float(m * hw)

    col = jnp.concatenate([jnp.sum(h, axis=0, keepdims=True),
                           jnp.sum(h * h, axis=0, keepdims=True)],
                          axis=0)                                   # (2, f)
    chan = jnp.dot(col, s_mat, preferred_element_type=f32)          # (2, c)

    mean_c = chan[0:1, :] / cnt
    var_c = jnp.maximum(chan[1:2, :] / cnt - mean_c * mean_c, 0.0)  # biased var
    inv_c = jax.lax.rsqrt(var_c + BN_EPS)
    scale_c = gamma * inv_c                                          # (1, c)
    shift_c = beta - mean_c * scale_c                                # (1, c)

    aff = jnp.concatenate([scale_c, shift_c], axis=0)                # (2, c)
    aff_f = jnp.dot(aff, st_mat, preferred_element_type=f32)         # (2, f)
    return h * aff_f[0:1, :] + aff_f[1:2, :]


def _make_disc_kernel(n_conv):
    """Build the fused kernel for n_conv Discriminator_Blocks + the MLP head."""

    def kernel(*refs):
        # refs = [x, (d, gamma, beta, s, st) * n_conv, w1, g, b, w2, out]
        x_ref = refs[0]
        conv_refs = refs[1:1 + 5 * n_conv]
        wf1_ref, gf_ref, bf_ref, wf2_ref = refs[1 + 5 * n_conv:-1]
        o_ref = refs[-1]
        f32 = jnp.float32

        h_bf = x_ref[...]                                            # (M, F) bf16
        for li in range(n_conv):
            d_ref, g_ref, b_ref, s_ref, st_ref = conv_refs[5 * li: 5 * li + 5]
            c = g_ref.shape[1]
            hw = d_ref.shape[1] // c
            # Conv layer == one lane-dense big-K matmul (bf16 MXU, f32 acc)
            h = jnp.dot(h_bf, d_ref[...], preferred_element_type=f32)  # (M, c*hw)
            h = _bn2d_flat(h, hw, g_ref[...], b_ref[...],
                           s_ref[...], st_ref[...])                    # BatchNorm2d
            h = jnp.maximum(h, 0.0)                                    # ReLU
            h_bf = h.astype(jnp.bfloat16)

        # MLP head: Linear -> BatchNorm1d -> LeakyReLU(0.2) -> Linear -> Sigmoid
        h = jnp.dot(h_bf, wf1_ref[...], preferred_element_type=f32)    # (M, 512)
        mean = jnp.mean(h, axis=0, keepdims=True)
        var = jnp.mean(jnp.square(h - mean), axis=0, keepdims=True)    # biased
        h = (h - mean) * jax.lax.rsqrt(var + BN_EPS)
        h = h * gf_ref[...] + bf_ref[...]
        h = jnp.where(h > 0.0, h, 0.2 * h)                             # LeakyReLU

        # (512 -> 1) projection on the VPU + lane reduction (no width-1 MXU pass)
        z = jnp.sum(h * wf2_ref[...], axis=-1, keepdims=True)          # (M, 1)
        # numerically-stable sigmoid via tanh (EUP)
        o_ref[...] = 0.5 * (jnp.tanh(0.5 * z) + 1.0)

    return kernel


# ---------------------------------------------------------------------------
# Parameter init (deterministic, synthetic) + dense-matrix / mask precompute
# ---------------------------------------------------------------------------
def init_params(key):
    keys = iter(jax.random.split(key, 3 * NUM_DISC_LAYERS + 4))
    conv = []
    c_in = NUM_CHANNELS
    c_out = MIN_FEATURE_SIZE * 2
    spatial = IMAGE_SIZE
    for _ in range(NUM_DISC_LAYERS):
        bound = 1.0 / float(np.sqrt(c_in * 25.0))
        w = jax.random.uniform(next(keys), (c_out, c_in, 5, 5), jnp.float32,
                               -bound, bound)
        gamma = jax.random.uniform(next(keys), (c_out,), jnp.float32, 0.5, 1.5)
        beta = jax.random.uniform(next(keys), (c_out,), jnp.float32, -0.1, 0.1)
        dense = _conv_to_dense(w, spatial, spatial)       # (Cin*H*W, Cout*Ho*Wo)
        hw_out = (spatial // 2) * (spatial // 2)
        s_mat, st_mat = _bn_gather_masks(c_out, hw_out)
        conv.append({"d": jnp.asarray(dense, jnp.bfloat16),
                     "gamma": gamma.reshape(1, c_out),
                     "beta": beta.reshape(1, c_out),
                     "s": s_mat,
                     "st": st_mat})
        c_in = c_out
        c_out *= 2
        spatial //= 2

    size = c_in
    assert size == MIN_FEATURE_SIZE * 2 ** NUM_DISC_LAYERS
    compressed = IMAGE_SIZE // (2 ** NUM_DISC_LAYERS)
    f_in = size * compressed * compressed                 # NCHW-flat feature count

    b1 = 1.0 / float(np.sqrt(f_in))
    w1 = jax.random.uniform(next(keys), (f_in, 512), jnp.float32, -b1, b1)
    g1 = jax.random.uniform(next(keys), (512,), jnp.float32, 0.5, 1.5)
    be1 = jax.random.uniform(next(keys), (512,), jnp.float32, -0.1, 0.1)
    b2 = 1.0 / float(np.sqrt(512.0))
    w2 = jax.random.uniform(next(keys), (512, 1), jnp.float32, -b2, b2)

    return {
        "conv": conv,
        "end": {"w1": jnp.asarray(w1, jnp.bfloat16),
                "g": g1.reshape(1, 512),
                "b": be1.reshape(1, 512),
                "w2": w2.reshape(1, 512)},
    }


# ---------------------------------------------------------------------------
# Full forward: one fused pallas_call, whole-array VMEM residency
# ---------------------------------------------------------------------------
def discriminator_forward(params, x_nchw):
    n = x_nchw.shape[0]

    # Batch amortization: replicate the whole batch to a multiple of 8 so LHS
    # vregs are sublane-full and the fixed weight DMA is amortized.  Exact
    # whole-batch replication leaves training-mode BatchNorm statistics (and
    # therefore every per-sample output) unchanged.
    reps = 1 if n % 8 == 0 else 8 // math.gcd(n, 8)
    x_rep = jnp.tile(x_nchw, (reps, 1, 1, 1)) if reps > 1 else x_nchw
    m = n * reps

    # NCHW flatten is free and matches the ordering baked into the dense convs
    # (and PyTorch's nn.Flatten before the Linear head).  bf16 cast halves the
    # activation DMA; all BN statistics stay f32 inside the kernel.
    x_flat = x_rep.reshape(m, -1).astype(jnp.bfloat16)    # (M, C*H*W), lane-dense

    ops = [x_flat]
    for layer in params["conv"]:
        ops += [layer["d"], layer["gamma"], layer["beta"], layer["s"], layer["st"]]
    e = params["end"]
    ops += [e["w1"], e["g"], e["b"], e["w2"]]

    # Explicit VMEM budget: operand footprint + output, with headroom for the
    # in-VMEM activations (prevents silent scoped-VMEM failures when scaled).
    footprint = sum(int(a.size) * a.dtype.itemsize for a in ops) + m * 4
    vmem_limit = int(min(4 * footprint + (2 << 20), 64 << 20))

    vmem = pl.BlockSpec(memory_space=pltpu.MemorySpace.VMEM)
    out = pl.pallas_call(
        _make_disc_kernel(len(params["conv"])),
        out_shape=jax.ShapeDtypeStruct((m, 1), jnp.float32),
        in_specs=[vmem] * len(ops),
        out_specs=vmem,
        compiler_params=pltpu.CompilerParams(vmem_limit_bytes=vmem_limit),
    )(*ops)
    return out[:n]


if __name__ == "__main__":
    key = jax.random.PRNGKey(0)
    pkey, xkey = jax.random.split(key)
    params = init_params(pkey)
    x = jax.random.normal(xkey, (2, NUM_CHANNELS, IMAGE_SIZE, IMAGE_SIZE),
                          jnp.float32)

    fwd = jax.jit(discriminator_forward)
    out = jax.block_until_ready(fwd(params, x))

    assert out.shape == (2, 1), out.shape
    assert bool(jnp.all(jnp.isfinite(out)))
    assert bool(jnp.all((out >= 0.0) & (out <= 1.0)))  # sigmoid range
    print("KERNEL_OK")
</pallas_src>

<mosaic_0001>
module attributes {stable_mosaic.version = 11 : i64} {
  func.func @kernel(%arg0: memref<8x1024xbf16, #tpu.memory_space<vmem>>, %arg1: memref<1024x512xbf16, #tpu.memory_space<vmem>>, %arg2: memref<1x8xf32, #tpu.memory_space<vmem>>, %arg3: memref<1x8xf32, #tpu.memory_space<vmem>>, %arg4: memref<512x8xf32, #tpu.memory_space<vmem>>, %arg5: memref<8x512xf32, #tpu.memory_space<vmem>>, %arg6: memref<512x256xbf16, #tpu.memory_space<vmem>>, %arg7: memref<1x16xf32, #tpu.memory_space<vmem>>, %arg8: memref<1x16xf32, #tpu.memory_space<vmem>>, %arg9: memref<256x16xf32, #tpu.memory_space<vmem>>, %arg10: memref<16x256xf32, #tpu.memory_space<vmem>>, %arg11: memref<256x512xbf16, #tpu.memory_space<vmem>>, %arg12: memref<1x512xf32, #tpu.memory_space<vmem>>, %arg13: memref<1x512xf32, #tpu.memory_space<vmem>>, %arg14: memref<1x512xf32, #tpu.memory_space<vmem>>, %arg15: memref<8x1xf32, #tpu.memory_space<vmem>>) attributes {dimension_semantics = [], scalar_prefetch = 0 : i64, scratch_operands = 0 : i64, tpu.core_type = #tpu.core_type<tc>} {
    %c0 = arith.constant 0 : index
    %c0_0 = arith.constant 0 : index
    %0 = vector.load %arg0[%c0, %c0_0] : memref<8x1024xbf16, #tpu.memory_space<vmem>>, vector<8x1024xbf16>
    %c0_1 = arith.constant 0 : index
    %c0_2 = arith.constant 0 : index
    %1 = vector.load %arg1[%c0_1, %c0_2] : memref<1024x512xbf16, #tpu.memory_space<vmem>>, vector<1024x512xbf16>
    %cst = arith.constant dense<0.000000e+00> : vector<8x512xf32>
    %2 = tpu.matmul %0, %1, %cst {dimension_numbers = #tpu.dot_dimension_numbers<[1], [0], [0], [1], [0, 0, 1, 1], [], []>} : vector<8x1024xbf16>, vector<1024x512xbf16>, vector<8x512xf32> -> vector<8x512xf32>
    %c0_3 = arith.constant 0 : index
    %c0_4 = arith.constant 0 : index
    %3 = vector.load %arg2[%c0_3, %c0_4] : memref<1x8xf32, #tpu.memory_space<vmem>>, vector<1x8xf32>
    %c0_5 = arith.constant 0 : index
    %c0_6 = arith.constant 0 : index
    %4 = vector.load %arg3[%c0_5, %c0_6] : memref<1x8xf32, #tpu.memory_space<vmem>>, vector<1x8xf32>
    %c0_7 = arith.constant 0 : index
    %c0_8 = arith.constant 0 : index
    %5 = vector.load %arg4[%c0_7, %c0_8] : memref<512x8xf32, #tpu.memory_space<vmem>>, vector<512x8xf32>
    %c0_9 = arith.constant 0 : index
    %c0_10 = arith.constant 0 : index
    %6 = vector.load %arg5[%c0_9, %c0_10] : memref<8x512xf32, #tpu.memory_space<vmem>>, vector<8x512xf32>
    %cst_11 = arith.constant dense<0.000000e+00> : vector<512xf32>
    %7 = vector.multi_reduction <add>, %2, %cst_11 [0] : vector<8x512xf32> to vector<512xf32>
    %8 = vector.shape_cast %7 : vector<512xf32> to vector<1x512xf32>
    %9 = arith.mulf %2, %2 : vector<8x512xf32>
    %cst_12 = arith.constant dense<0.000000e+00> : vector<512xf32>
    %10 = vector.multi_reduction <add>, %9, %cst_12 [0] : vector<8x512xf32> to vector<512xf32>
    %11 = vector.shape_cast %10 : vector<512xf32> to vector<1x512xf32>
    %12 = tpu.concatenate %8, %11 in 0 : vector<1x512xf32>, vector<1x512xf32> -> vector<2x512xf32>
    %cst_13 = arith.constant dense<0.000000e+00> : vector<2x8xf32>
    %13 = tpu.matmul %12, %5, %cst_13 {dimension_numbers = #tpu.dot_dimension_numbers<[1], [0], [0], [1], [0, 0, 1, 1], [], []>} : vector<2x512xf32>, vector<512x8xf32>, vector<2x8xf32> -> vector<2x8xf32>
    %14 = vector.extract_strided_slice %13 {offsets = [0, 0], sizes = [1, 8], strides = [1, 1]} : vector<2x8xf32> to vector<1x8xf32>
    %cst_14 = arith.constant 5.120000e+02 : f32
    %15 = vector.broadcast %cst_14 : f32 to vector<1x8xf32>
    %16 = arith.divf %14, %15 : vector<1x8xf32>
    %17 = vector.extract_strided_slice %13 {offsets = [1, 0], sizes = [1, 8], strides = [1, 1]} : vector<2x8xf32> to vector<1x8xf32>
    %cst_15 = arith.constant 5.120000e+02 : f32
    %18 = vector.broadcast %cst_15 : f32 to vector<1x8xf32>
    %19 = arith.divf %17, %18 : vector<1x8xf32>
    %20 = arith.mulf %16, %16 : vector<1x8xf32>
    %21 = arith.subf %19, %20 : vector<1x8xf32>
    %cst_16 = arith.constant 0.000000e+00 : f32
    %22 = vector.broadcast %cst_16 : f32 to vector<1x8xf32>
    %23 = arith.maximumf %21, %22 : vector<1x8xf32>
    %cst_17 = arith.constant 9.99999974E-6 : f32
    %24 = vector.broadcast %cst_17 : f32 to vector<1x8xf32>
    %25 = arith.addf %23, %24 : vector<1x8xf32>
    %26 = math.rsqrt %25 : vector<1x8xf32>
    %27 = arith.mulf %3, %26 : vector<1x8xf32>
    %28 = arith.mulf %16, %27 : vector<1x8xf32>
    %29 = arith.subf %4, %28 : vector<1x8xf32>
    %30 = tpu.concatenate %27, %29 in 0 : vector<1x8xf32>, vector<1x8xf32> -> vector<2x8xf32>
    %cst_18 = arith.constant dense<0.000000e+00> : vector<2x512xf32>
    %31 = tpu.matmul %30, %6, %cst_18 {dimension_numbers = #tpu.dot_dimension_numbers<[1], [0], [0], [1], [0, 0, 1, 1], [], []>} : vector<2x8xf32>, vector<8x512xf32>, vector<2x512xf32> -> vector<2x512xf32>
    %32 = vector.extract_strided_slice %31 {offsets = [0, 0], sizes = [1, 512], strides = [1, 1]} : vector<2x512xf32> to vector<1x512xf32>
    %33 = vector.broadcast %32 : vector<1x512xf32> to vector<8x512xf32>
    %34 = arith.mulf %2, %33 : vector<8x512xf32>
    %35 = vector.extract_strided_slice %31 {offsets = [1, 0], sizes = [1, 512], strides = [1, 1]} : vector<2x512xf32> to vector<1x512xf32>
    %36 = vector.broadcast %35 : vector<1x512xf32> to vector<8x512xf32>
    %37 = arith.addf %34, %36 : vector<8x512xf32>
    %cst_19 = arith.constant 0.000000e+00 : f32
    %38 = vector.broadcast %cst_19 : f32 to vector<8x512xf32>
    %39 = arith.maximumf %37, %38 : vector<8x512xf32>
    %40 = arith.truncf %39 : vector<8x512xf32> to vector<8x512xbf16>
    %c0_20 = arith.constant 0 : index
    %c0_21 = arith.constant 0 : index
    %41 = vector.load %arg6[%c0_20, %c0_21] : memref<512x256xbf16, #tpu.memory_space<vmem>>, vector<512x256xbf16>
    %cst_22 = arith.constant dense<0.000000e+00> : vector<8x256xf32>
    %42 = tpu.matmul %40, %41, %cst_22 {dimension_numbers = #tpu.dot_dimension_numbers<[1], [0], [0], [1], [0, 0, 1, 1], [], []>} : vector<8x512xbf16>, vector<512x256xbf16>, vector<8x256xf32> -> vector<8x256xf32>
    %c0_23 = arith.constant 0 : index
    %c0_24 = arith.constant 0 : index
    %43 = vector.load %arg7[%c0_23, %c0_24] : memref<1x16xf32, #tpu.memory_space<vmem>>, vector<1x16xf32>
    %c0_25 = arith.constant 0 : index
    %c0_26 = arith.constant 0 : index
    %44 = vector.load %arg8[%c0_25, %c0_26] : memref<1x16xf32, #tpu.memory_space<vmem>>, vector<1x16xf32>
    %c0_27 = arith.constant 0 : index
    %c0_28 = arith.constant 0 : index
    %45 = vector.load %arg9[%c0_27, %c0_28] : memref<256x16xf32, #tpu.memory_space<vmem>>, vector<256x16xf32>
    %c0_29 = arith.constant 0 : index
    %c0_30 = arith.constant 0 : index
    %46 = vector.load %arg10[%c0_29, %c0_30] : memref<16x256xf32, #tpu.memory_space<vmem>>, vector<16x256xf32>
    %cst_31 = arith.constant dense<0.000000e+00> : vector<256xf32>
    %47 = vector.multi_reduction <add>, %42, %cst_31 [0] : vector<8x256xf32> to vector<256xf32>
    %48 = vector.shape_cast %47 : vector<256xf32> to vector<1x256xf32>
    %49 = arith.mulf %42, %42 : vector<8x256xf32>
    %cst_32 = arith.constant dense<0.000000e+00> : vector<256xf32>
    %50 = vector.multi_reduction <add>, %49, %cst_32 [0] : vector<8x256xf32> to vector<256xf32>
    %51 = vector.shape_cast %50 : vector<256xf32> to vector<1x256xf32>
    %52 = tpu.concatenate %48, %51 in 0 : vector<1x256xf32>, vector<1x256xf32> -> vector<2x256xf32>
    %cst_33 = arith.constant dense<0.000000e+00> : vector<2x16xf32>
    %53 = tpu.matmul %52, %45, %cst_33 {dimension_numbers = #tpu.dot_dimension_numbers<[1], [0], [0], [1], [0, 0, 1, 1], [], []>} : vector<2x256xf32>, vector<256x16xf32>, vector<2x16xf32> -> vector<2x16xf32>
    %54 = vector.extract_strided_slice %53 {offsets = [0, 0], sizes = [1, 16], strides = [1, 1]} : vector<2x16xf32> to vector<1x16xf32>
    %cst_34 = arith.constant 1.280000e+02 : f32
    %55 = vector.broadcast %cst_34 : f32 to vector<1x16xf32>
    %56 = arith.divf %54, %55 : vector<1x16xf32>
    %57 = vector.extract_strided_slice %53 {offsets = [1, 0], sizes = [1, 16], strides = [1, 1]} : vector<2x16xf32> to vector<1x16xf32>
    %cst_35 = arith.constant 1.280000e+02 : f32
    %58 = vector.broadcast %cst_35 : f32 to vector<1x16xf32>
    %59 = arith.divf %57, %58 : vector<1x16xf32>
    %60 = arith.mulf %56, %56 : vector<1x16xf32>
    %61 = arith.subf %59, %60 : vector<1x16xf32>
    %cst_36 = arith.constant 0.000000e+00 : f32
    %62 = vector.broadcast %cst_36 : f32 to vector<1x16xf32>
    %63 = arith.maximumf %61, %62 : vector<1x16xf32>
    %cst_37 = arith.constant 9.99999974E-6 : f32
    %64 = vector.broadcast %cst_37 : f32 to vector<1x16xf32>
    %65 = arith.addf %63, %64 : vector<1x16xf32>
    %66 = math.rsqrt %65 : vector<1x16xf32>
    %67 = arith.mulf %43, %66 : vector<1x16xf32>
    %68 = arith.mulf %56, %67 : vector<1x16xf32>
    %69 = arith.subf %44, %68 : vector<1x16xf32>
    %70 = tpu.concatenate %67, %69 in 0 : vector<1x16xf32>, vector<1x16xf32> -> vector<2x16xf32>
    %cst_38 = arith.constant dense<0.000000e+00> : vector<2x256xf32>
    %71 = tpu.matmul %70, %46, %cst_38 {dimension_numbers = #tpu.dot_dimension_numbers<[1], [0], [0], [1], [0, 0, 1, 1], [], []>} : vector<2x16xf32>, vector<16x256xf32>, vector<2x256xf32> -> vector<2x256xf32>
    %72 = vector.extract_strided_slice %71 {offsets = [0, 0], sizes = [1, 256], strides = [1, 1]} : vector<2x256xf32> to vector<1x256xf32>
    %73 = vector.broadcast %72 : vector<1x256xf32> to vector<8x256xf32>
    %74 = arith.mulf %42, %73 : vector<8x256xf32>
    %75 = vector.extract_strided_slice %71 {offsets = [1, 0], sizes = [1, 256], strides = [1, 1]} : vector<2x256xf32> to vector<1x256xf32>
    %76 = vector.broadcast %75 : vector<1x256xf32> to vector<8x256xf32>
    %77 = arith.addf %74, %76 : vector<8x256xf32>
    %cst_39 = arith.constant 0.000000e+00 : f32
    %78 = vector.broadcast %cst_39 : f32 to vector<8x256xf32>
    %79 = arith.maximumf %77, %78 : vector<8x256xf32>
    %80 = arith.truncf %79 : vector<8x256xf32> to vector<8x256xbf16>
    %c0_40 = arith.constant 0 : index
    %c0_41 = arith.constant 0 : index
    %81 = vector.load %arg11[%c0_40, %c0_41] : memref<256x512xbf16, #tpu.memory_space<vmem>>, vector<256x512xbf16>
    %cst_42 = arith.constant dense<0.000000e+00> : vector<8x512xf32>
    %82 = tpu.matmul %80, %81, %cst_42 {dimension_numbers = #tpu.dot_dimension_numbers<[1], [0], [0], [1], [0, 0, 1, 1], [], []>} : vector<8x256xbf16>, vector<256x512xbf16>, vector<8x512xf32> -> vector<8x512xf32>
    %cst_43 = arith.constant dense<0.000000e+00> : vector<512xf32>
    %83 = vector.multi_reduction <add>, %82, %cst_43 [0] : vector<8x512xf32> to vector<512xf32>
    %84 = vector.shape_cast %83 : vector<512xf32> to vector<1x512xf32>
    %cst_44 = arith.constant 8.000000e+00 : f32
    %85 = vector.broadcast %cst_44 : f32 to vector<1x512xf32>
    %86 = arith.divf %84, %85 : vector<1x512xf32>
    %87 = vector.broadcast %86 : vector<1x512xf32> to vector<8x512xf32>
    %88 = arith.subf %82, %87 : vector<8x512xf32>
    %89 = arith.mulf %88, %88 : vector<8x512xf32>
    %cst_45 = arith.constant dense<0.000000e+00> : vector<512xf32>
    %90 = vector.multi_reduction <add>, %89, %cst_45 [0] : vector<8x512xf32> to vector<512xf32>
    %91 = vector.shape_cast %90 : vector<512xf32> to vector<1x512xf32>
    %cst_46 = arith.constant 8.000000e+00 : f32
    %92 = vector.broadcast %cst_46 : f32 to vector<1x512xf32>
    %93 = arith.divf %91, %92 : vector<1x512xf32>
    %94 = vector.broadcast %86 : vector<1x512xf32> to vector<8x512xf32>
    %95 = arith.subf %82, %94 : vector<8x512xf32>
    %cst_47 = arith.constant 9.99999974E-6 : f32
    %96 = vector.broadcast %cst_47 : f32 to vector<1x512xf32>
    %97 = arith.addf %93, %96 : vector<1x512xf32>
    %98 = math.rsqrt %97 : vector<1x512xf32>
    %99 = vector.broadcast %98 : vector<1x512xf32> to vector<8x512xf32>
    %100 = arith.mulf %95, %99 : vector<8x512xf32>
    %c0_48 = arith.constant 0 : index
    %c0_49 = arith.constant 0 : index
    %101 = vector.load %arg12[%c0_48, %c0_49] : memref<1x512xf32, #tpu.memory_space<vmem>>, vector<1x512xf32>
    %102 = vector.broadcast %101 : vector<1x512xf32> to vector<8x512xf32>
    %103 = arith.mulf %100, %102 : vector<8x512xf32>
    %c0_50 = arith.constant 0 : index
    %c0_51 = arith.constant 0 : index
    %104 = vector.load %arg13[%c0_50, %c0_51] : memref<1x512xf32, #tpu.memory_space<vmem>>, vector<1x512xf32>
    %105 = vector.broadcast %104 : vector<1x512xf32> to vector<8x512xf32>
    %106 = arith.addf %103, %105 : vector<8x512xf32>
    %cst_52 = arith.constant 0.000000e+00 : f32
    %107 = vector.broadcast %cst_52 : f32 to vector<8x512xf32>
    %108 = arith.cmpf ogt, %106, %107 : vector<8x512xf32>
    %cst_53 = arith.constant 2.000000e-01 : f32
    %109 = vector.broadcast %cst_53 : f32 to vector<8x512xf32>
    %110 = arith.mulf %109, %106 : vector<8x512xf32>
    %111 = arith.select %108, %106, %110 : vector<8x512xi1>, vector<8x512xf32>
    %c0_54 = arith.constant 0 : index
    %c0_55 = arith.constant 0 : index
    %112 = vector.load %arg14[%c0_54, %c0_55] : memref<1x512xf32, #tpu.memory_space<vmem>>, vector<1x512xf32>
    %113 = vector.broadcast %112 : vector<1x512xf32> to vector<8x512xf32>
    %114 = arith.mulf %111, %113 : vector<8x512xf32>
    %cst_56 = arith.constant dense<0.000000e+00> : vector<8xf32>
    %115 = vector.multi_reduction <add>, %114, %cst_56 [1] : vector<8x512xf32> to vector<8xf32>
    %116 = vector.shape_cast %115 : vector<8xf32> to vector<8x1xf32>
    %cst_57 = arith.constant 5.000000e-01 : f32
    %117 = vector.broadcast %cst_57 : f32 to vector<8x1xf32>
    %118 = arith.mulf %117, %116 : vector<8x1xf32>
    %119 = math.tanh %118 : vector<8x1xf32>
    %cst_58 = arith.constant 1.000000e+00 : f32
    %120 = vector.broadcast %cst_58 : f32 to vector<8x1xf32>
    %121 = arith.addf %119, %120 : vector<8x1xf32>
    %cst_59 = arith.constant 5.000000e-01 : f32
    %122 = vector.broadcast %cst_59 : f32 to vector<8x1xf32>
    %123 = arith.mulf %122, %121 : vector<8x1xf32>
    %c0_60 = arith.constant 0 : index
    %c0_61 = arith.constant 0 : index
    %124 = vector.load %arg15[%c0_60, %c0_61] : memref<8x1xf32, #tpu.memory_space<vmem>>, vector<8x1xf32>
    tpu.vector_store %arg15[%c0_60, %c0_61], %123 {strides = array<i32>} : memref<8x1xf32, #tpu.memory_space<vmem>>, vector<8x1xf32>,
    return
  }
}

</mosaic_0001>

<llo_original>
// kernel: discriminator_forward.1
$region0: #{discriminator_forward.1}
  #allocation0 [shape = 'u32[]', space=smem, size = 0x4, offset = 0x4, fixed_abs, tag = 'smem constant byte address 0x4 - core index']
  #allocation1 [shape = 'u32[144,128]{1,0:T(1,128)}', space=vmem, size = 0x12000, scoped, tag = 'internal scratch']
  %s0 = inlined_call_operand.vmem [shape: bf16[8,1024], index: 0, kind: input, shape index: {}]
  %s1 = inlined_call_operand.hbm [shape: bf16[1024,512], index: 1, kind: input, shape index: {}]
  %s2 = inlined_call_operand.vmem [shape: f32[1,8], index: 2, kind: input, shape index: {}]
  %s3 = inlined_call_operand.vmem [shape: f32[1,8], index: 3, kind: input, shape index: {}]
  %s4 = inlined_call_operand.vmem [shape: f32[512,8], index: 4, kind: input, shape index: {}]
  %s5 = inlined_call_operand.vmem [shape: f32[8,512], index: 5, kind: input, shape index: {}]
  %s6 = inlined_call_operand.vmem [shape: bf16[512,256], index: 6, kind: input, shape index: {}]
  %s7 = inlined_call_operand.vmem [shape: f32[1,16], index: 7, kind: input, shape index: {}]
  %s8 = inlined_call_operand.vmem [shape: f32[1,16], index: 8, kind: input, shape index: {}]
  %s9 = inlined_call_operand.vmem [shape: f32[256,16], index: 9, kind: input, shape index: {}]
  %s10 = inlined_call_operand.vmem [shape: f32[16,256], index: 10, kind: input, shape index: {}]
  %s11 = inlined_call_operand.vmem [shape: bf16[256,512], index: 11, kind: input, shape index: {}]
  %s12 = inlined_call_operand.vmem [shape: f32[1,512], index: 12, kind: input, shape index: {}]
  %s13 = inlined_call_operand.vmem [shape: f32[1,512], index: 13, kind: input, shape index: {}]
  %s14 = inlined_call_operand.vmem [shape: f32[1,512], index: 14, kind: input, shape index: {}]
  %s15 = inlined_call_operand.vmem [shape: f32[8,1], index: 15, kind: output, shape index: {}]
  %s16 = sld [smem:[#allocation0]]
  $region74: #{discriminator_forward.1} parent=0
    _
  %s18 = ssub.s32 1, %s16
  %s19 = scalar_select 0, %s18, %s16
  $region1: #{discriminator_forward.1} parent=0
    #allocation2 [shape = 'u8[1048576]{0}', space=vmem, size = 0x100000, scoped, tag = 'input window, operand 1, single buffered']
    #allocation3 [shape = 's32[1]{0}', space=sflag, size = 0x4, scoped, tag = 'scoped memory for discriminator_forward.1']
    %20 = vsyncpa [#allocation3], 0
    // Predicated region
    $region2: #{discriminator_forward.1} parent=1 // pred_check
      _
    $region3: #{discriminator_forward.1} parent=1 // pred_check_branch
      %22 = sbr.rel (0) target = $region5
    $region4: #{discriminator_forward.1} parent=1 // pred_region
      _
    $region5: #{discriminator_forward.1} parent=1 // pred_fallthru
      _
    // Predicated region
    $region6: #{discriminator_forward.1} parent=1 // pred_check
      _
    $region7: #{discriminator_forward.1} parent=1 // pred_check_branch
      %24 = sbr.rel (0) target = $region9
    $region8: #{discriminator_forward.1} parent=1 // pred_region
      %s26 = ssub.s32 32768, 32768
      %27 = vsyncadd [#allocation3], %s26
      %s28 = sshll.u32 [#allocation2], 4
      %s29 = int_to_ptr.vmem [resolvable:$true] %s28
      %34 = dma.hbm_to_vmem [thread:$0]  %s1, 32768, %s29, [#allocation3], 256, 256, 16
    $region9: #{discriminator_forward.1} parent=1 // pred_fallthru
      _
    // Predicated region
    $region10: #{discriminator_forward.1} parent=1 // pred_check
      _
    $region11: #{discriminator_forward.1} parent=1 // pred_check_branch
      %36 = sbr.rel (0) target = $region13
    $region12: #{discriminator_forward.1} parent=1 // pred_region
      _
    $region13: #{discriminator_forward.1} parent=1 // pred_fallthru
      _
    // Predicated region
    $region14: #{discriminator_forward.1} parent=1 // pred_check
      _
    $region15: #{discriminator_forward.1} parent=1 // pred_check_branch
      %38 = sbr.rel (0) target = $region17
    $region16: #{discriminator_forward.1} parent=1 // pred_region
      _
    $region17: #{discriminator_forward.1} parent=1 // pred_fallthru
      _
    // Predicated region
    $region18: #{discriminator_forward.1} parent=1 // pred_check
      _
    $region19: #{discriminator_forward.1} parent=1 // pred_check_branch
      %40 = sbr.rel (0) target = $region21
    $region20: #{discriminator_forward.1} parent=1 // pred_region
      _
    $region21: #{discriminator_forward.1} parent=1 // pred_fallthru
      _
    // Predicated region
    $region22: #{discriminator_forward.1} parent=1 // pred_check
      _
    $region23: #{discriminator_forward.1} parent=1 // pred_check_branch
      %42 = sbr.rel (0) target = $region25
    $region24: #{discriminator_forward.1} parent=1 // pred_region
      _
    $region25: #{discriminator_forward.1} parent=1 // pred_fallthru
      _
    // Predicated region
    $region26: #{discriminator_forward.1} parent=1 // pred_check
      _
    $region27: #{discriminator_forward.1} parent=1 // pred_check_branch
      %44 = sbr.rel (0) target = $region29
    $region28: #{discriminator_forward.1} parent=1 // pred_region
      _
    $region29: #{discriminator_forward.1} parent=1 // pred_fallthru
      _
    // Predicated region
    $region30: #{discriminator_forward.1} parent=1 // pred_check
      _
    $region31: #{discriminator_forward.1} parent=1 // pred_check_branch
      %46 = sbr.rel (0) target = $region33
    $region32: #{discriminator_forward.1} parent=1 // pred_region
      _
    $region33: #{discriminator_forward.1} parent=1 // pred_fallthru
      _
    // Predicated region
    $region34: #{discriminator_forward.1} parent=1 // pred_check
      _
    $region35: #{discriminator_forward.1} parent=1 // pred_check_branch
      %48 = sbr.rel (0) target = $region37
    $region36: #{discriminator_forward.1} parent=1 // pred_region
      _
    $region37: #{discriminator_forward.1} parent=1 // pred_fallthru
      _
    // Predicated region
    $region38: #{discriminator_forward.1} parent=1 // pred_check
      _
    $region39: #{discriminator_forward.1} parent=1 // pred_check_branch
      %50 = sbr.rel (0) target = $region41
    $region40: #{discriminator_forward.1} parent=1 // pred_region
      _
    $region41: #{discriminator_forward.1} parent=1 // pred_fallthru
      _
    // Predicated region
    $region42: #{discriminator_forward.1} parent=1 // pred_check
      _
    $region43: #{discriminator_forward.1} parent=1 // pred_check_branch
      %52 = sbr.rel (0) target = $region45
    $region44: #{discriminator_forward.1} parent=1 // pred_region
      _
    $region45: #{discriminator_forward.1} parent=1 // pred_fallthru
      _
    // Predicated region
    $region46: #{discriminator_forward.1} parent=1 // pred_check
      _
    $region47: #{discriminator_forward.1} parent=1 // pred_check_branch
      %54 = sbr.rel (0) target = $region49
    $region48: #{discriminator_forward.1} parent=1 // pred_region
      _
    $region49: #{discriminator_forward.1} parent=1 // pred_fallthru
      _
    // Predicated region
    $region50: #{discriminator_forward.1} parent=1 // pred_check
      _
    $region51: #{discriminator_forward.1} parent=1 // pred_check_branch
      %56 = sbr.rel (0) target = $region53
    $region52: #{discriminator_forward.1} parent=1 // pred_region
      _
    $region53: #{discriminator_forward.1} parent=1 // pred_fallthru
      _
    // Predicated region
    $region54: #{discriminator_forward.1} parent=1 // pred_check
      _
    $region55: #{discriminator_forward.1} parent=1 // pred_check_branch
      %58 = sbr.rel (0) target = $region57
    $region56: #{discriminator_forward.1} parent=1 // pred_region
      _
    $region57: #{discriminator_forward.1} parent=1 // pred_fallthru
      _
    // Predicated region
    $region58: #{discriminator_forward.1} parent=1 // pred_check
      _
    $region59: #{discriminator_forward.1} parent=1 // pred_check_branch
      %60 = sbr.rel (0) target = $region61
    $region60: #{discriminator_forward.1} parent=1 // pred_region
      _
    $region61: #{discriminator_forward.1} parent=1 // pred_fallthru
      _
    // Predicated region
    $region62: #{discriminator_forward.1} parent=1 // pred_check
      _
    $region63: #{discriminator_forward.1} parent=1 // pred_check_branch
      %62 = sbr.rel (0) target = $region65
    $region64: #{discriminator_forward.1} parent=1 // pred_region
      %63 = dma.done [#allocation3], 32768
    $region65: #{discriminator_forward.1} parent=1 // pred_fallthru
      _
    %v64 = vld [vmem:[%s0] sm:$0xff]
    %v65 = vld [vmem:[%s0 + $0x8] sm:$0xff]
    %v66 = vld [vmem:[%s0 + $0x10] sm:$0xff]
    %v67 = vld [vmem:[%s0 + $0x18] sm:$0xff]
    %v68 = vld [vmem:[#allocation2] sm:$0xff]
    %v69 = vld [vmem:[#allocation2 + $0x8] sm:$0xff]
    %v70 = vld [vmem:[#allocation2 + $0x10] sm:$0xff]
    %v71 = vld [vmem:[#allocation2 + $0x18] sm:$0xff]
    %v72 = vld [vmem:[#allocation2 + $0x20] sm:$0xff]
    %v73 = vld [vmem:[#allocation2 + $0x28] sm:$0xff]
    %v74 = vld [vmem:[#allocation2 + $0x30] sm:$0xff]
    %v75 = vld [vmem:[#allocation2 + $0x38] sm:$0xff]
    %v76 = vld [vmem:[#allocation2 + $0x40] sm:$0xff]
    %v77 = vld [vmem:[#allocation2 + $0x48] sm:$0xff]
    %v78 = vld [vmem:[#allocation2 + $0x50] sm:$0xff]
    %v79 = vld [vmem:[#allocation2 + $0x58] sm:$0xff]
    %v80 = vld [vmem:[#allocation2 + $0x60] sm:$0xff]
    %v81 = vld [vmem:[#allocation2 + $0x68] sm:$0xff]
    %v82 = vld [vmem:[#allocation2 + $0x70] sm:$0xff]
    %v83 = vld [vmem:[#allocation2 + $0x78] sm:$0xff]
    %v84 = vld [vmem:[#allocation2 + $0x80] sm:$0xff]
    %v85 = vld [vmem:[#allocation2 + $0x88] sm:$0xff]
    %v86 = vld [vmem:[#allocation2 + $0x90] sm:$0xff]
    %v87 = vld [vmem:[#allocation2 + $0x98] sm:$0xff]
    %v88 = vld [vmem:[#allocation2 + $0xa0] sm:$0xff]
    %v89 = vld [vmem:[#allocation2 + $0xa8] sm:$0xff]
    %v90 = vld [vmem:[#allocation2 + $0xb0] sm:$0xff]
    %v91 = vld [vmem:[#allocation2 + $0xb8] sm:$0xff]
    %v92 = vld [vmem:[#allocation2 + $0xc0] sm:$0xff]
    %v93 = vld [vmem:[#allocation2 + $0xc8] sm:$0xff]
    %v94 = vld [vmem:[#allocation2 + $0xd0] sm:$0xff]
    %v95 = vld [vmem:[#allocation2 + $0xd8] sm:$0xff]
    %v96 = vld [vmem:[#allocation2 + $0xe0] sm:$0xff]
    %v97 = vld [vmem:[#allocation2 + $0xe8] sm:$0xff]
    %v98 = vld [vmem:[#allocation2 + $0xf0] sm:$0xff]
    %v99 = vld [vmem:[#allocation2 + $0xf8] sm:$0xff]
    %v100 = vld [vmem:[#allocation2 + $0x100] sm:$0xff]
    %v101 = vld [vmem:[#allocation2 + $0x108] sm:$0xff]
    %v102 = vld [vmem:[#allocation2 + $0x110] sm:$0xff]
    %v103 = vld [vmem:[#allocation2 + $0x118] sm:$0xff]
    %v104 = vld [vmem:[#allocation2 + $0x120] sm:$0xff]
    %v105 = vld [vmem:[#allocation2 + $0x128] sm:$0xff]
    %v106 = vld [vmem:[#allocation2 + $0x130] sm:$0xff]
    %v107 = vld [vmem:[#allocation2 + $0x138] sm:$0xff]
    %v108 = vld [vmem:[#allocation2 + $0x140] sm:$0xff]
    %v109 = vld [vmem:[#allocation2 + $0x148] sm:$0xff]
    %v110 = vld [vmem:[#allocation2 + $0x150] sm:$0xff]
    %v111 = vld [vmem:[#allocation2 + $0x158] sm:$0xff]
    %v112 = vld [vmem:[#allocation2 + $0x160] sm:$0xff]
    %v113 = vld [vmem:[#allocation2 + $0x168] sm:$0xff]
    %v114 = vld [vmem:[#allocation2 + $0x170] sm:$0xff]
    %v115 = vld [vmem:[#allocation2 + $0x178] sm:$0xff]
    %v116 = vld [vmem:[#allocation2 + $0x180] sm:$0xff]
    %v117 = vld [vmem:[#allocation2 + $0x188] sm:$0xff]
    %v118 = vld [vmem:[#allocation2 + $0x190] sm:$0xff]
    %v119 = vld [vmem:[#allocation2 + $0x198] sm:$0xff]
    %v120 = vld [vmem:[#allocation2 + $0x1a0] sm:$0xff]
    %v121 = vld [vmem:[#allocation2 + $0x1a8] sm:$0xff]
    %v122 = vld [vmem:[#allocation2 + $0x1b0] sm:$0xff]
    %v123 = vld [vmem:[#allocation2 + $0x1b8] sm:$0xff]
    %v124 = vld [vmem:[#allocation2 + $0x1c0] sm:$0xff]
    %v125 = vld [vmem:[#allocation2 + $0x1c8] sm:$0xff]
    %v126 = vld [vmem:[#allocation2 + $0x1d0] sm:$0xff]
    %v127 = vld [vmem:[#allocation2 + $0x1d8] sm:$0xff]
    %v128 = vld [vmem:[#allocation2 + $0x1e0] sm:$0xff]
    %v129 = vld [vmem:[#allocation2 + $0x1e8] sm:$0xff]
    %v130 = vld [vmem:[#allocation2 + $0x1f0] sm:$0xff]
    %v131 = vld [vmem:[#allocation2 + $0x1f8] sm:$0xff]
    %v132 = vld [vmem:[#allocation2 + $0x200] sm:$0xff]
    %v133 = vld [vmem:[#allocation2 + $0x208] sm:$0xff]
    %v134 = vld [vmem:[#allocation2 + $0x210] sm:$0xff]
    %v135 = vld [vmem:[#allocation2 + $0x218] sm:$0xff]
    %v136 = vld [vmem:[#allocation2 + $0x220] sm:$0xff]
    %v137 = vld [vmem:[#allocation2 + $0x228] sm:$0xff]
    %v138 = vld [vmem:[#allocation2 + $0x230] sm:$0xff]
    %v139 = vld [vmem:[#allocation2 + $0x238] sm:$0xff]
    %v140 = vld [vmem:[#allocation2 + $0x240] sm:$0xff]
    %v141 = vld [vmem:[#allocation2 + $0x248] sm:$0xff]
    %v142 = vld [vmem:[#allocation2 + $0x250] sm:$0xff]
    %v143 = vld [vmem:[#allocation2 + $0x258] sm:$0xff]
    %v144 = vld [vmem:[#allocation2 + $0x260] sm:$0xff]
    %v145 = vld [vmem:[#allocation2 + $0x268] sm:$0xff]
    %v146 = vld [vmem:[#allocation2 + $0x270] sm:$0xff]
    %v147 = vld [vmem:[#allocation2 + $0x278] sm:$0xff]
    %v148 = vld [vmem:[#allocation2 + $0x280] sm:$0xff]
    %v149 = vld [vmem:[#allocation2 + $0x288] sm:$0xff]
    %v150 = vld [vmem:[#allocation2 + $0x290] sm:$0xff]
    %v151 = vld [vmem:[#allocation2 + $0x298] sm:$0xff]
    %v152 = vld [vmem:[#allocation2 + $0x2a0] sm:$0xff]
    %v153 = vld [vmem:[#allocation2 + $0x2a8] sm:$0xff]
    %v154 = vld [vmem:[#allocation2 + $0x2b0] sm:$0xff]
    %v155 = vld [vmem:[#allocation2 + $0x2b8] sm:$0xff]
    %v156 = vld [vmem:[#allocation2 + $0x2c0] sm:$0xff]
    %v157 = vld [vmem:[#allocation2 + $0x2c8] sm:$0xff]
    %v158 = vld [vmem:[#allocation2 + $0x2d0] sm:$0xff]
    %v159 = vld [vmem:[#allocation2 + $0x2d8] sm:$0xff]
    %v160 = vld [vmem:[#allocation2 + $0x2e0] sm:$0xff]
    %v161 = vld [vmem:[#allocation2 + $0x2e8] sm:$0xff]
    %v162 = vld [vmem:[#allocation2 + $0x2f0] sm:$0xff]
    %v163 = vld [vmem:[#allocation2 + $0x2f8] sm:$0xff]
    %v164 = vld [vmem:[#allocation2 + $0x300] sm:$0xff]
    %v165 = vld [vmem:[#allocation2 + $0x308] sm:$0xff]
    %v166 = vld [vmem:[#allocation2 + $0x310] sm:$0xff]
    %v167 = vld [vmem:[#allocation2 + $0x318] sm:$0xff]
    %v168 = vld [vmem:[#allocation2 + $0x320] sm:$0xff]
    %v169 = vld [vmem:[#allocation2 + $0x328] sm:$0xff]
    %v170 = vld [vmem:[#allocation2 + $0x330] sm:$0xff]
    %v171 = vld [vmem:[#allocation2 + $0x338] sm:$0xff]
    %v172 = vld [vmem:[#allocation2 + $0x340] sm:$0xff]
    %v173 = vld [vmem:[#allocation2 + $0x348] sm:$0xff]
    %v174 = vld [vmem:[#allocation2 + $0x350] sm:$0xff]
    %v175 = vld [vmem:[#allocation2 + $0x358] sm:$0xff]
    %v176 = vld [vmem:[#allocation2 + $0x360] sm:$0xff]
    %v177 = vld [vmem:[#allocation2 + $0x368] sm:$0xff]
    %v178 = vld [vmem:[#allocation2 + $0x370] sm:$0xff]
    %v179 = vld [vmem:[#allocation2 + $0x378] sm:$0xff]
    %v180 = vld [vmem:[#allocation2 + $0x380] sm:$0xff]
    %v181 = vld [vmem:[#allocation2 + $0x388] sm:$0xff]
    %v182 = vld [vmem:[#allocation2 + $0x390] sm:$0xff]
    %v183 = vld [vmem:[#allocation2 + $0x398] sm:$0xff]
    %v184 = vld [vmem:[#allocation2 + $0x3a0] sm:$0xff]
    %v185 = vld [vmem:[#allocation2 + $0x3a8] sm:$0xff]
    %v186 = vld [vmem:[#allocation2 + $0x3b0] sm:$0xff]
    %v187 = vld [vmem:[#allocation2 + $0x3b8] sm:$0xff]
    %v188 = vld [vmem:[#allocation2 + $0x3c0] sm:$0xff]
    %v189 = vld [vmem:[#allocation2 + $0x3c8] sm:$0xff]
    %v190 = vld [vmem:[#allocation2 + $0x3d0] sm:$0xff]
    %v191 = vld [vmem:[#allocation2 + $0x3d8] sm:$0xff]
    %v192 = vld [vmem:[#allocation2 + $0x3e0] sm:$0xff]
    %v193 = vld [vmem:[#allocation2 + $0x3e8] sm:$0xff]
    %v194 = vld [vmem:[#allocation2 + $0x3f0] sm:$0xff]
    %v195 = vld [vmem:[#allocation2 + $0x3f8] sm:$0xff]
    %v196 = vld [vmem:[#allocation2 + $0x400] sm:$0xff]
    %v197 = vld [vmem:[#allocation2 + $0x408] sm:$0xff]
    %v198 = vld [vmem:[#allocation2 + $0x410] sm:$0xff]
    %v199 = vld [vmem:[#allocation2 + $0x418] sm:$0xff]
    %v200 = vld [vmem:[#allocation2 + $0x420] sm:$0xff]
    %v201 = vld [vmem:[#allocation2 + $0x428] sm:$0xff]
    %v202 = vld [vmem:[#allocation2 + $0x430] sm:$0xff]
    %v203 = vld [vmem:[#allocation2 + $0x438] sm:$0xff]
    %v204 = vld [vmem:[#allocation2 + $0x440] sm:$0xff]
    %v205 = vld [vmem:[#allocation2 + $0x448] sm:$0xff]
    %v206 = vld [vmem:[#allocation2 + $0x450] sm:$0xff]
    %v207 = vld [vmem:[#allocation2 + $0x458] sm:$0xff]
    %v208 = vld [vmem:[#allocation2 + $0x460] sm:$0xff]
    %v209 = vld [vmem:[#allocation2 + $0x468] sm:$0xff]
    %v210 = vld [vmem:[#allocation2 + $0x470] sm:$0xff]
    %v211 = vld [vmem:[#allocation2 + $0x478] sm:$0xff]
    %v212 = vld [vmem:[#allocation2 + $0x480] sm:$0xff]
    %v213 = vld [vmem:[#allocation2 + $0x488] sm:$0xff]
    %v214 = vld [vmem:[#allocation2 + $0x490] sm:$0xff]
    %v215 = vld [vmem:[#allocation2 + $0x498] sm:$0xff]
    %v216 = vld [vmem:[#allocation2 + $0x4a0] sm:$0xff]
    %v217 = vld [vmem:[#allocation2 + $0x4a8] sm:$0xff]
    %v218 = vld [vmem:[#allocation2 + $0x4b0] sm:$0xff]
    %v219 = vld [vmem:[#allocation2 + $0x4b8] sm:$0xff]
    %v220 = vld [vmem:[#allocation2 + $0x4c0] sm:$0xff]
    %v221 = vld [vmem:[#allocation2 + $0x4c8] sm:$0xff]
    %v222 = vld [vmem:[#allocation2 + $0x4d0] sm:$0xff]
    %v223 = vld [vmem:[#allocation2 + $0x4d8] sm:$0xff]
    %v224 = vld [vmem:[#allocation2 + $0x4e0] sm:$0xff]
    %v225 = vld [vmem:[#allocation2 + $0x4e8] sm:$0xff]
    %v226 = vld [vmem:[#allocation2 + $0x4f0] sm:$0xff]
    %v227 = vld [vmem:[#allocation2 + $0x4f8] sm:$0xff]
    %v228 = vld [vmem:[#allocation2 + $0x500] sm:$0xff]
    %v229 = vld [vmem:[#allocation2 + $0x508] sm:$0xff]
    %v230 = vld [vmem:[#allocation2 + $0x510] sm:$0xff]
    %v231 = vld [vmem:[#allocation2 + $0x518] sm:$0xff]
    %v232 = vld [vmem:[#allocation2 + $0x520] sm:$0xff]
    %v233 = vld [vmem:[#allocation2 + $0x528] sm:$0xff]
    %v234 = vld [vmem:[#allocation2 + $0x530] sm:$0xff]
    %v235 = vld [vmem:[#allocation2 + $0x538] sm:$0xff]
    %v236 = vld [vmem:[#allocation2 + $0x540] sm:$0xff]
    %v237 = vld [vmem:[#allocation2 + $0x548] sm:$0xff]
    %v238 = vld [vmem:[#allocation2 + $0x550] sm:$0xff]
    %v239 = vld [vmem:[#allocation2 + $0x558] sm:$0xff]
    %v240 = vld [vmem:[#allocation2 + $0x560] sm:$0xff]
    %v241 = vld [vmem:[#allocation2 + $0x568] sm:$0xff]
    %v242 = vld [vmem:[#allocation2 + $0x570] sm:$0xff]
    %v243 = vld [vmem:[#allocation2 + $0x578] sm:$0xff]
    %v244 = vld [vmem:[#allocation2 + $0x580] sm:$0xff]
    %v245 = vld [vmem:[#allocation2 + $0x588] sm:$0xff]
    %v246 = vld [vmem:[#allocation2 + $0x590] sm:$0xff]
    %v247 = vld [vmem:[#allocation2 + $0x598] sm:$0xff]
    %v248 = vld [vmem:[#allocation2 + $0x5a0] sm:$0xff]
    %v249 = vld [vmem:[#allocation2 + $0x5a8] sm:$0xff]
    %v250 = vld [vmem:[#allocation2 + $0x5b0] sm:$0xff]
    %v251 = vld [vmem:[#allocation2 + $0x5b8] sm:$0xff]
    %v252 = vld [vmem:[#allocation2 + $0x5c0] sm:$0xff]
    %v253 = vld [vmem:[#allocation2 + $0x5c8] sm:$0xff]
    %v254 = vld [vmem:[#allocation2 + $0x5d0] sm:$0xff]
    %v255 = vld [vmem:[#allocation2 + $0x5d8] sm:$0xff]
    %v256 = vld [vmem:[#allocation2 + $0x5e0] sm:$0xff]
    %v257 = vld [vmem:[#allocation2 + $0x5e8] sm:$0xff]
    %v258 = vld [vmem:[#allocation2 + $0x5f0] sm:$0xff]
    %v259 = vld [vmem:[#allocation2 + $0x5f8] sm:$0xff]
    %v260 = vld [vmem:[#allocation2 + $0x600] sm:$0xff]
    %v261 = vld [vmem:[#allocation2 + $0x608] sm:$0xff]
    %v262 = vld [vmem:[#allocation2 + $0x610] sm:$0xff]
    %v263 = vld [vmem:[#allocation2 + $0x618] sm:$0xff]
    %v264 = vld [vmem:[#allocation2 + $0x620] sm:$0xff]
    %v265 = vld [vmem:[#allocation2 + $0x628] sm:$0xff]
    %v266 = vld [vmem:[#allocation2 + $0x630] sm:$0xff]
    %v267 = vld [vmem:[#allocation2 + $0x638] sm:$0xff]
    %v268 = vld [vmem:[#allocation2 + $0x640] sm:$0xff]
    %v269 = vld [vmem:[#allocation2 + $0x648] sm:$0xff]
    %v270 = vld [vmem:[#allocation2 + $0x650] sm:$0xff]
    %v271 = vld [vmem:[#allocation2 + $0x658] sm:$0xff]
    %v272 = vld [vmem:[#allocation2 + $0x660] sm:$0xff]
    %v273 = vld [vmem:[#allocation2 + $0x668] sm:$0xff]
    %v274 = vld [vmem:[#allocation2 + $0x670] sm:$0xff]
    %v275 = vld [vmem:[#allocation2 + $0x678] sm:$0xff]
    %v276 = vld [vmem:[#allocation2 + $0x680] sm:$0xff]
    %v277 = vld [vmem:[#allocation2 + $0x688] sm:$0xff]
    %v278 = vld [vmem:[#allocation2 + $0x690] sm:$0xff]
    %v279 = vld [vmem:[#allocation2 + $0x698] sm:$0xff]
    %v280 = vld [vmem:[#allocation2 + $0x6a0] sm:$0xff]
    %v281 = vld [vmem:[#allocation2 + $0x6a8] sm:$0xff]
    %v282 = vld [vmem:[#allocation2 + $0x6b0] sm:$0xff]
    %v283 = vld [vmem:[#allocation2 + $0x6b8] sm:$0xff]
    %v284 = vld [vmem:[#allocation2 + $0x6c0] sm:$0xff]
    %v285 = vld [vmem:[#allocation2 + $0x6c8] sm:$0xff]
    %v286 = vld [vmem:[#allocation2 + $0x6d0] sm:$0xff]
    %v287 = vld [vmem:[#allocation2 + $0x6d8] sm:$0xff]
    %v288 = vld [vmem:[#allocation2 + $0x6e0] sm:$0xff]
    %v289 = vld [vmem:[#allocation2 + $0x6e8] sm:$0xff]
    %v290 = vld [vmem:[#allocation2 + $0x6f0] sm:$0xff]
    %v291 = vld [vmem:[#allocation2 + $0x6f8] sm:$0xff]
    %v292 = vld [vmem:[#allocation2 + $0x700] sm:$0xff]
    %v293 = vld [vmem:[#allocation2 + $0x708] sm:$0xff]
    %v294 = vld [vmem:[#allocation2 + $0x710] sm:$0xff]
    %v295 = vld [vmem:[#allocation2 + $0x718] sm:$0xff]
    %v296 = vld [vmem:[#allocation2 + $0x720] sm:$0xff]
    %v297 = vld [vmem:[#allocation2 + $0x728] sm:$0xff]
    %v298 = vld [vmem:[#allocation2 + $0x730] sm:$0xff]
    %v299 = vld [vmem:[#allocation2 + $0x738] sm:$0xff]
    %v300 = vld [vmem:[#allocation2 + $0x740] sm:$0xff]
    %v301 = vld [vmem:[#allocation2 + $0x748] sm:$0xff]
    %v302 = vld [vmem:[#allocation2 + $0x750] sm:$0xff]
    %v303 = vld [vmem:[#allocation2 + $0x758] sm:$0xff]
    %v304 = vld [vmem:[#allocation2 + $0x760] sm:$0xff]
    %v305 = vld [vmem:[#allocation2 + $0x768] sm:$0xff]
    %v306 = vld [vmem:[#allocation2 + $0x770] sm:$0xff]
    %v307 = vld [vmem:[#allocation2 + $0x778] sm:$0xff]
    %v308 = vld [vmem:[#allocation2 + $0x780] sm:$0xff]
    %v309 = vld [vmem:[#allocation2 + $0x788] sm:$0xff]
    %v310 = vld [vmem:[#allocation2 + $0x790] sm:$0xff]
    %v311 = vld [vmem:[#allocation2 + $0x798] sm:$0xff]
    %v312 = vld [vmem:[#allocation2 + $0x7a0] sm:$0xff]
    %v313 = vld [vmem:[#allocation2 + $0x7a8] sm:$0xff]
    %v314 = vld [vmem:[#allocation2 + $0x7b0] sm:$0xff]
    %v315 = vld [vmem:[#allocation2 + $0x7b8] sm:$0xff]
    %v316 = vld [vmem:[#allocation2 + $0x7c0] sm:$0xff]
    %v317 = vld [vmem:[#allocation2 + $0x7c8] sm:$0xff]
    %v318 = vld [vmem:[#allocation2 + $0x7d0] sm:$0xff]
    %v319 = vld [vmem:[#allocation2 + $0x7d8] sm:$0xff]
    %v320 = vld [vmem:[#allocation2 + $0x7e0] sm:$0xff]
    %v321 = vld [vmem:[#allocation2 + $0x7e8] sm:$0xff]
    %v322 = vld [vmem:[#allocation2 + $0x7f0] sm:$0xff]
    %v323 = vld [vmem:[#allocation2 + $0x7f8] sm:$0xff]
    %v328 = vunpack.c.l.b16 %v64
    %v329 = vunpack.c.h.b16 %v64
    %v330 = vunpack.c.l.b16 %v65
    %v331 = vunpack.c.h.b16 %v65
    %v332 = vunpack.c.l.b16 %v66
    %v333 = vunpack.c.h.b16 %v66
    %v334 = vunpack.c.l.b16 %v67
    %v335 = vunpack.c.h.b16 %v67
    %v336 = vpack.c.b16 %v328, %v328
    %v337 = vpack.c.b16 %v329, %v329
    %v338 = vpack.c.b16 %v330, %v330
    %v339 = vpack.c.b16 %v331, %v331
    %v340 = vpack.c.b16 %v332, %v332
    %v341 = vpack.c.b16 %v333, %v333
    %v342 = vpack.c.b16 %v334, %v334
    %v343 = vpack.c.b16 %v335, %v335
    %v608 = vunpack.c.l.b16 %v68
    %v609 = vunpack.c.h.b16 %v68
    %v610 = vunpack.c.l.b16 %v69
    %v611 = vunpack.c.h.b16 %v69
    %v612 = vunpack.c.l.b16 %v70
    %v613 = vunpack.c.h.b16 %v70
    %v614 = vunpack.c.l.b16 %v71
    %v615 = vunpack.c.h.b16 %v71
    %v616 = vunpack.c.l.b16 %v72
    %v617 = vunpack.c.h.b16 %v72
    %v618 = vunpack.c.l.b16 %v73
    %v619 = vunpack.c.h.b16 %v73
    %v620 = vunpack.c.l.b16 %v74
    %v621 = vunpack.c.h.b16 %v74
    %v622 = vunpack.c.l.b16 %v75
    %v623 = vunpack.c.h.b16 %v75
    %v624 = vunpack.c.l.b16 %v76
    %v625 = vunpack.c.h.b16 %v76
    %v626 = vunpack.c.l.b16 %v77
    %v627 = vunpack.c.h.b16 %v77
    %v628 = vunpack.c.l.b16 %v78
    %v629 = vunpack.c.h.b16 %v78
    %v630 = vunpack.c.l.b16 %v79
    %v631 = vunpack.c.h.b16 %v79
    %v632 = vunpack.c.l.b16 %v80
    %v633 = vunpack.c.h.b16 %v80
    %v634 = vunpack.c.l.b16 %v81
    %v635 = vunpack.c.h.b16 %v81
    %v636 = vunpack.c.l.b16 %v82
    %v637 = vunpack.c.h.b16 %v82
    %v638 = vunpack.c.l.b16 %v83
    %v639 = vunpack.c.h.b16 %v83
    %v640 = vunpack.c.l.b16 %v84
    %v641 = vunpack.c.h.b16 %v84
    %v642 = vunpack.c.l.b16 %v85
    %v643 = vunpack.c.h.b16 %v85
    %v644 = vunpack.c.l.b16 %v86
    %v645 = vunpack.c.h.b16 %v86
    %v646 = vunpack.c.l.b16 %v87
    %v647 = vunpack.c.h.b16 %v87
    %v648 = vunpack.c.l.b16 %v88
    %v649 = vunpack.c.h.b16 %v88
    %v650 = vunpack.c.l.b16 %v89
    %v651 = vunpack.c.h.b16 %v89
    %v652 = vunpack.c.l.b16 %v90
    %v653 = vunpack.c.h.b16 %v90
    %v654 = vunpack.c.l.b16 %v91
    %v655 = vunpack.c.h.b16 %v91
    %v656 = vunpack.c.l.b16 %v92
    %v657 = vunpack.c.h.b16 %v92
    %v658 = vunpack.c.l.b16 %v93
    %v659 = vunpack.c.h.b16 %v93
    %v660 = vunpack.c.l.b16 %v94
    %v661 = vunpack.c.h.b16 %v94
    %v662 = vunpack.c.l.b16 %v95
    %v663 = vunpack.c.h.b16 %v95
    %v664 = vunpack.c.l.b16 %v96
    %v665 = vunpack.c.h.b16 %v96
    %v666 = vunpack.c.l.b16 %v97
    %v667 = vunpack.c.h.b16 %v97
    %v668 = vunpack.c.l.b16 %v98
    %v669 = vunpack.c.h.b16 %v98
    %v670 = vunpack.c.l.b16 %v99
    %v671 = vunpack.c.h.b16 %v99
    %v672 = vunpack.c.l.b16 %v100
    %v673 = vunpack.c.h.b16 %v100
    %v674 = vunpack.c.l.b16 %v101
    %v675 = vunpack.c.h.b16 %v101
    %v676 = vunpack.c.l.b16 %v102
    %v677 = vunpack.c.h.b16 %v102
    %v678 = vunpack.c.l.b16 %v103
    %v679 = vunpack.c.h.b16 %v103
    %v680 = vunpack.c.l.b16 %v104
    %v681 = vunpack.c.h.b16 %v104
    %v682 = vunpack.c.l.b16 %v105
    %v683 = vunpack.c.h.b16 %v105
    %v684 = vunpack.c.l.b16 %v106
    %v685 = vunpack.c.h.b16 %v106
    %v686 = vunpack.c.l.b16 %v107
    %v687 = vunpack.c.h.b16 %v107
    %v688 = vunpack.c.l.b16 %v108
    %v689 = vunpack.c.h.b16 %v108
    %v690 = vunpack.c.l.b16 %v109
    %v691 = vunpack.c.h.b16 %v109
    %v692 = vunpack.c.l.b16 %v110
    %v693 = vunpack.c.h.b16 %v110
    %v694 = vunpack.c.l.b16 %v111
    %v695 = vunpack.c.h.b16 %v111
    %v696 = vunpack.c.l.b16 %v112
    %v697 = vunpack.c.h.b16 %v112
    %v698 = vunpack.c.l.b16 %v113
    %v699 = vunpack.c.h.b16 %v113
    %v700 = vunpack.c.l.b16 %v114
    %v701 = vunpack.c.h.b16 %v114
    %v702 = vunpack.c.l.b16 %v115
    %v703 = vunpack.c.h.b16 %v115
    %v704 = vunpack.c.l.b16 %v116
    %v705 = vunpack.c.h.b16 %v116
    %v706 = vunpack.c.l.b16 %v117
    %v707 = vunpack.c.h.b16 %v117
    %v708 = vunpack.c.l.b16 %v118
    %v709 = vunpack.c.h.b16 %v118
    %v710 = vunpack.c.l.b16 %v119
    %v711 = vunpack.c.h.b16 %v119
    %v712 = vunpack.c.l.b16 %v120
    %v713 = vunpack.c.h.b16 %v120
    %v714 = vunpack.c.l.b16 %v121
    %v715 = vunpack.c.h.b16 %v121
    %v716 = vunpack.c.l.b16 %v122
    %v717 = vunpack.c.h.b16 %v122
    %v718 = vunpack.c.l.b16 %v123
    %v719 = vunpack.c.h.b16 %v123
    %v720 = vunpack.c.l.b16 %v124
    %v721 = vunpack.c.h.b16 %v124
    %v722 = vunpack.c.l.b16 %v125
    %v723 = vunpack.c.h.b16 %v125
    %v724 = vunpack.c.l.b16 %v126
    %v725 = vunpack.c.h.b16 %v126
    %v726 = vunpack.c.l.b16 %v127
    %v727 = vunpack.c.h.b16 %v127
    %v728 = vunpack.c.l.b16 %v128
    %v729 = vunpack.c.h.b16 %v128
    %v730 = vunpack.c.l.b16 %v129
    %v731 = vunpack.c.h.b16 %v129
    %v732 = vunpack.c.l.b16 %v130
    %v733 = vunpack.c.h.b16 %v130
    %v734 = vunpack.c.l.b16 %v131
    %v735 = vunpack.c.h.b16 %v131
    %v736 = vunpack.c.l.b16 %v132
    %v737 = vunpack.c.h.b16 %v132
    %v738 = vunpack.c.l.b16 %v133
    %v739 = vunpack.c.h.b16 %v133
    %v740 = vunpack.c.l.b16 %v134
    %v741 = vunpack.c.h.b16 %v134
    %v742 = vunpack.c.l.b16 %v135
    %v743 = vunpack.c.h.b16 %v135
    %v744 = vunpack.c.l.b16 %v136
    %v745 = vunpack.c.h.b16 %v136
    %v746 = vunpack.c.l.b16 %v137
    %v747 = vunpack.c.h.b16 %v137
    %v748 = vunpack.c.l.b16 %v138
    %v749 = vunpack.c.h.b16 %v138
    %v750 = vunpack.c.l.b16 %v139
    %v751 = vunpack.c.h.b16 %v139
    %v752 = vunpack.c.l.b16 %v140
    %v753 = vunpack.c.h.b16 %v140
    %v754 = vunpack.c.l.b16 %v141
    %v755 = vunpack.c.h.b16 %v141
    %v756 = vunpack.c.l.b16 %v142
    %v757 = vunpack.c.h.b16 %v142
    %v758 = vunpack.c.l.b16 %v143
    %v759 = vunpack.c.h.b16 %v143
    %v760 = vunpack.c.l.b16 %v144
    %v761 = vunpack.c.h.b16 %v144
    %v762 = vunpack.c.l.b16 %v145
    %v763 = vunpack.c.h.b16 %v145
    %v764 = vunpack.c.l.b16 %v146
    %v765 = vunpack.c.h.b16 %v146
    %v766 = vunpack.c.l.b16 %v147
    %v767 = vunpack.c.h.b16 %v147
    %v768 = vunpack.c.l.b16 %v148
    %v769 = vunpack.c.h.b16 %v148
    %v770 = vunpack.c.l.b16 %v149
    %v771 = vunpack.c.h.b16 %v149
    %v772 = vunpack.c.l.b16 %v150
    %v773 = vunpack.c.h.b16 %v150
    %v774 = vunpack.c.l.b16 %v151
    %v775 = vunpack.c.h.b16 %v151
    %v776 = vunpack.c.l.b16 %v152
    %v777 = vunpack.c.h.b16 %v152
    %v778 = vunpack.c.l.b16 %v153
    %v779 = vunpack.c.h.b16 %v153
    %v780 = vunpack.c.l.b16 %v154
    %v781 = vunpack.c.h.b16 %v154
    %v782 = vunpack.c.l.b16 %v155
    %v783 = vunpack.c.h.b16 %v155
    %v784 = vunpack.c.l.b16 %v156
    %v785 = vunpack.c.h.b16 %v156
    %v786 = vunpack.c.l.b16 %v157
    %v787 = vunpack.c.h.b16 %v157
    %v788 = vunpack.c.l.b16 %v158
    %v789 = vunpack.c.h.b16 %v158
    %v790 = vunpack.c.l.b16 %v159
    %v791 = vunpack.c.h.b16 %v159
    %v792 = vunpack.c.l.b16 %v160
    %v793 = vunpack.c.h.b16 %v160
    %v794 = vunpack.c.l.b16 %v161
    %v795 = vunpack.c.h.b16 %v161
    %v796 = vunpack.c.l.b16 %v162
    %v797 = vunpack.c.h.b16 %v162
    %v798 = vunpack.c.l.b16 %v163
    %v799 = vunpack.c.h.b16 %v163
    %v800 = vunpack.c.l.b16 %v164
    %v801 = vunpack.c.h.b16 %v164
    %v802 = vunpack.c.l.b16 %v165
    %v803 = vunpack.c.h.b16 %v165
    %v804 = vunpack.c.l.b16 %v166
    %v805 = vunpack.c.h.b16 %v166
    %v806 = vunpack.c.l.b16 %v167
    %v807 = vunpack.c.h.b16 %v167
    %v808 = vunpack.c.l.b16 %v168
    %v809 = vunpack.c.h.b16 %v168
    %v810 = vunpack.c.l.b16 %v169
    %v811 = vunpack.c.h.b16 %v169
    %v812 = vunpack.c.l.b16 %v170
    %v813 = vunpack.c.h.b16 %v170
    %v814 = vunpack.c.l.b16 %v171
    %v815 = vunpack.c.h.b16 %v171
    %v816 = vunpack.c.l.b16 %v172
    %v817 = vunpack.c.h.b16 %v172
    %v818 = vunpack.c.l.b16 %v173
    %v819 = vunpack.c.h.b16 %v173
    %v820 = vunpack.c.l.b16 %v174
    %v821 = vunpack.c.h.b16 %v174
    %v822 = vunpack.c.l.b16 %v175
    %v823 = vunpack.c.h.b16 %v175
    %v824 = vunpack.c.l.b16 %v176
    %v825 = vunpack.c.h.b16 %v176
    %v826 = vunpack.c.l.b16 %v177
    %v827 = vunpack.c.h.b16 %v177
    %v828 = vunpack.c.l.b16 %v178
    %v829 = vunpack.c.h.b16 %v178
    %v830 = vunpack.c.l.b16 %v179
    %v831 = vunpack.c.h.b16 %v179
    %v832 = vunpack.c.l.b16 %v180
    %v833 = vunpack.c.h.b16 %v180
    %v834 = vunpack.c.l.b16 %v181
    %v835 = vunpack.c.h.b16 %v181
    %v836 = vunpack.c.l.b16 %v182
    %v837 = vunpack.c.h.b16 %v182
    %v838 = vunpack.c.l.b16 %v183
    %v839 = vunpack.c.h.b16 %v183
    %v840 = vunpack.c.l.b16 %v184
    %v841 = vunpack.c.h.b16 %v184
    %v842 = vunpack.c.l.b16 %v185
    %v843 = vunpack.c.h.b16 %v185
    %v844 = vunpack.c.l.b16 %v186
    %v845 = vunpack.c.h.b16 %v186
    %v846 = vunpack.c.l.b16 %v187
    %v847 = vunpack.c.h.b16 %v187
    %v848 = vunpack.c.l.b16 %v188
    %v849 = vunpack.c.h.b16 %v188
    %v850 = vunpack.c.l.b16 %v189
    %v851 = vunpack.c.h.b16 %v189
    %v852 = vunpack.c.l.b16 %v190
    %v853 = vunpack.c.h.b16 %v190
    %v854 = vunpack.c.l.b16 %v191
    %v855 = vunpack.c.h.b16 %v191
    %v856 = vunpack.c.l.b16 %v192
    %v857 = vunpack.c.h.b16 %v192
    %v858 = vunpack.c.l.b16 %v193
    %v859 = vunpack.c.h.b16 %v193
    %v860 = vunpack.c.l.b16 %v194
    %v861 = vunpack.c.h.b16 %v194
    %v862 = vunpack.c.l.b16 %v195
    %v863 = vunpack.c.h.b16 %v195
    %v864 = vunpack.c.l.b16 %v196
    %v865 = vunpack.c.h.b16 %v196
    %v866 = vunpack.c.l.b16 %v197
    %v867 = vunpack.c.h.b16 %v197
    %v868 = vunpack.c.l.b16 %v198
    %v869 = vunpack.c.h.b16 %v198
    %v870 = vunpack.c.l.b16 %v199
    %v871 = vunpack.c.h.b16 %v199
    %v872 = vunpack.c.l.b16 %v200
    %v873 = vunpack.c.h.b16 %v200
    %v874 = vunpack.c.l.b16 %v201
    %v875 = vunpack.c.h.b16 %v201
    %v876 = vunpack.c.l.b16 %v202
    %v877 = vunpack.c.h.b16 %v202
    %v878 = vunpack.c.l.b16 %v203
    %v879 = vunpack.c.h.b16 %v203
    %v880 = vunpack.c.l.b16 %v204
    %v881 = vunpack.c.h.b16 %v204
    %v882 = vunpack.c.l.b16 %v205
    %v883 = vunpack.c.h.b16 %v205
    %v884 = vunpack.c.l.b16 %v206
    %v885 = vunpack.c.h.b16 %v206
    %v886 = vunpack.c.l.b16 %v207
    %v887 = vunpack.c.h.b16 %v207
    %v888 = vunpack.c.l.b16 %v208
    %v889 = vunpack.c.h.b16 %v208
    %v890 = vunpack.c.l.b16 %v209
    %v891 = vunpack.c.h.b16 %v209
    %v892 = vunpack.c.l.b16 %v210
    %v893 = vunpack.c.h.b16 %v210
    %v894 = vunpack.c.l.b16 %v211
    %v895 = vunpack.c.h.b16 %v211
    %v896 = vunpack.c.l.b16 %v212
    %v897 = vunpack.c.h.b16 %v212
    %v898 = vunpack.c.l.b16 %v213
    %v899 = vunpack.c.h.b16 %v213
    %v900 = vunpack.c.l.b16 %v214
    %v901 = vunpack.c.h.b16 %v214
    %v902 = vunpack.c.l.b16 %v215
    %v903 = vunpack.c.h.b16 %v215
    %v904 = vunpack.c.l.b16 %v216
    %v905 = vunpack.c.h.b16 %v216
    %v906 = vunpack.c.l.b16 %v217
    %v907 = vunpack.c.h.b16 %v217
    %v908 = vunpack.c.l.b16 %v218
    %v909 = vunpack.c.h.b16 %v218
    %v910 = vunpack.c.l.b16 %v219
    %v911 = vunpack.c.h.b16 %v219
    %v912 = vunpack.c.l.b16 %v220
    %v913 = vunpack.c.h.b16 %v220
    %v914 = vunpack.c.l.b16 %v221
    %v915 = vunpack.c.h.b16 %v221
    %v916 = vunpack.c.l.b16 %v222
    %v917 = vunpack.c.h.b16 %v222
    %v918 = vunpack.c.l.b16 %v223
    %v919 = vunpack.c.h.b16 %v223
    %v920 = vunpack.c.l.b16 %v224
    %v921 = vunpack.c.h.b16 %v224
    %v922 = vunpack.c.l.b16 %v225
    %v923 = vunpack.c.h.b16 %v225
    %v924 = vunpack.c.l.b16 %v226
    %v925 = vunpack.c.h.b16 %v226
    %v926 = vunpack.c.l.b16 %v227
    %v927 = vunpack.c.h.b16 %v227
    %v928 = vunpack.c.l.b16 %v228
    %v929 = vunpack.c.h.b16 %v228
    %v930 = vunpack.c.l.b16 %v229
    %v931 = vunpack.c.h.b16 %v229
    %v932 = vunpack.c.l.b16 %v230
    %v933 = vunpack.c.h.b16 %v230
    %v934 = vunpack.c.l.b16 %v231
    %v935 = vunpack.c.h.b16 %v231
    %v936 = vunpack.c.l.b16 %v232
    %v937 = vunpack.c.h.b16 %v232
    %v938 = vunpack.c.l.b16 %v233
    %v939 = vunpack.c.h.b16 %v233
    %v940 = vunpack.c.l.b16 %v234
    %v941 = vunpack.c.h.b16 %v234
    %v942 = vunpack.c.l.b16 %v235
    %v943 = vunpack.c.h.b16 %v235
    %v944 = vunpack.c.l.b16 %v236
    %v945 = vunpack.c.h.b16 %v236
    %v946 = vunpack.c.l.b16 %v237
    %v947 = vunpack.c.h.b16 %v237
    %v948 = vunpack.c.l.b16 %v238
    %v949 = vunpack.c.h.b16 %v238
    %v950 = vunpack.c.l.b16 %v239
    %v951 = vunpack.c.h.b16 %v239
    %v952 = vunpack.c.l.b16 %v240
    %v953 = vunpack.c.h.b16 %v240
    %v954 = vunpack.c.l.b16 %v241
    %v955 = vunpack.c.h.b16 %v241
    %v956 = vunpack.c.l.b16 %v242
    %v957 = vunpack.c.h.b16 %v242
    %v958 = vunpack.c.l.b16 %v243
    %v959 = vunpack.c.h.b16 %v243
    %v960 = vunpack.c.l.b16 %v244
    %v961 = vunpack.c.h.b16 %v244
    %v962 = vunpack.c.l.b16 %v245
    %v963 = vunpack.c.h.b16 %v245
    %v964 = vunpack.c.l.b16 %v246
    %v965 = vunpack.c.h.b16 %v246
    %v966 = vunpack.c.l.b16 %v247
    %v967 = vunpack.c.h.b16 %v247
    %v968 = vunpack.c.l.b16 %v248
    %v969 = vunpack.c.h.b16 %v248
    %v970 = vunpack.c.l.b16 %v249
    %v971 = vunpack.c.h.b16 %v249
    %v972 = vunpack.c.l.b16 %v250
    %v973 = vunpack.c.h.b16 %v250
    %v974 = vunpack.c.l.b16 %v251
    %v975 = vunpack.c.h.b16 %v251
    %v976 = vunpack.c.l.b16 %v252
    %v977 = vunpack.c.h.b16 %v252
    %v978 = vunpack.c.l.b16 %v253
    %v979 = vunpack.c.h.b16 %v253
    %v980 = vunpack.c.l.b16 %v254
    %v981 = vunpack.c.h.b16 %v254
    %v982 = vunpack.c.l.b16 %v255
    %v983 = vunpack.c.h.b16 %v255
    %v984 = vunpack.c.l.b16 %v256
    %v985 = vunpack.c.h.b16 %v256
    %v986 = vunpack.c.l.b16 %v257
    %v987 = vunpack.c.h.b16 %v257
    %v988 = vunpack.c.l.b16 %v258
    %v989 = vunpack.c.h.b16 %v258
    %v990 = vunpack.c.l.b16 %v259
    %v991 = vunpack.c.h.b16 %v259
    %v992 = vunpack.c.l.b16 %v260
    %v993 = vunpack.c.h.b16 %v260
    %v994 = vunpack.c.l.b16 %v261
    %v995 = vunpack.c.h.b16 %v261
    %v996 = vunpack.c.l.b16 %v262
    %v997 = vunpack.c.h.b16 %v262
    %v998 = vunpack.c.l.b16 %v263
    %v999 = vunpack.c.h.b16 %v263
    %v1000 = vunpack.c.l.b16 %v264
    %v1001 = vunpack.c.h.b16 %v264
    %v1002 = vunpack.c.l.b16 %v265
    %v1003 = vunpack.c.h.b16 %v265
    %v1004 = vunpack.c.l.b16 %v266
    %v1005 = vunpack.c.h.b16 %v266
    %v1006 = vunpack.c.l.b16 %v267
    %v1007 = vunpack.c.h.b16 %v267
    %v1008 = vunpack.c.l.b16 %v268
    %v1009 = vunpack.c.h.b16 %v268
    %v1010 = vunpack.c.l.b16 %v269
    %v1011 = vunpack.c.h.b16 %v269
    %v1012 = vunpack.c.l.b16 %v270
    %v1013 = vunpack.c.h.b16 %v270
    %v1014 = vunpack.c.l.b16 %v271
    %v1015 = vunpack.c.h.b16 %v271
    %v1016 = vunpack.c.l.b16 %v272
    %v1017 = vunpack.c.h.b16 %v272
    %v1018 = vunpack.c.l.b16 %v273
    %v1019 = vunpack.c.h.b16 %v273
    %v1020 = vunpack.c.l.b16 %v274
    %v1021 = vunpack.c.h.b16 %v274
    %v1022 = vunpack.c.l.b16 %v275
    %v1023 = vunpack.c.h.b16 %v275
    %v1024 = vunpack.c.l.b16 %v276
    %v1025 = vunpack.c.h.b16 %v276
    %v1026 = vunpack.c.l.b16 %v277
    %v1027 = vunpack.c.h.b16 %v277
    %v1028 = vunpack.c.l.b16 %v278
    %v1029 = vunpack.c.h.b16 %v278
    %v1030 = vunpack.c.l.b16 %v279
    %v1031 = vunpack.c.h.b16 %v279
    %v1032 = vunpack.c.l.b16 %v280
    %v1033 = vunpack.c.h.b16 %v280
    %v1034 = vunpack.c.l.b16 %v281
    %v1035 = vunpack.c.h.b16 %v281
    %v1036 = vunpack.c.l.b16 %v282
    %v1037 = vunpack.c.h.b16 %v282
    %v1038 = vunpack.c.l.b16 %v283
    %v1039 = vunpack.c.h.b16 %v283
    %v1040 = vunpack.c.l.b16 %v284
    %v1041 = vunpack.c.h.b16 %v284
    %v1042 = vunpack.c.l.b16 %v285
    %v1043 = vunpack.c.h.b16 %v285
    %v1044 = vunpack.c.l.b16 %v286
    %v1045 = vunpack.c.h.b16 %v286
    %v1046 = vunpack.c.l.b16 %v287
    %v1047 = vunpack.c.h.b16 %v287
    %v1048 = vunpack.c.l.b16 %v288
    %v1049 = vunpack.c.h.b16 %v288
    %v1050 = vunpack.c.l.b16 %v289
    %v1051 = vunpack.c.h.b16 %v289
    %v1052 = vunpack.c.l.b16 %v290
    %v1053 = vunpack.c.h.b16 %v290
    %v1054 = vunpack.c.l.b16 %v291
    %v1055 = vunpack.c.h.b16 %v291
    %v1056 = vunpack.c.l.b16 %v292
    %v1057 = vunpack.c.h.b16 %v292
    %v1058 = vunpack.c.l.b16 %v293
    %v1059 = vunpack.c.h.b16 %v293
    %v1060 = vunpack.c.l.b16 %v294
    %v1061 = vunpack.c.h.b16 %v294
    %v1062 = vunpack.c.l.b16 %v295
    %v1063 = vunpack.c.h.b16 %v295
    %v1064 = vunpack.c.l.b16 %v296
    %v1065 = vunpack.c.h.b16 %v296
    %v1066 = vunpack.c.l.b16 %v297
    %v1067 = vunpack.c.h.b16 %v297
    %v1068 = vunpack.c.l.b16 %v298
    %v1069 = vunpack.c.h.b16 %v298
    %v1070 = vunpack.c.l.b16 %v299
    %v1071 = vunpack.c.h.b16 %v299
    %v1072 = vunpack.c.l.b16 %v300
    %v1073 = vunpack.c.h.b16 %v300
    %v1074 = vunpack.c.l.b16 %v301
    %v1075 = vunpack.c.h.b16 %v301
    %v1076 = vunpack.c.l.b16 %v302
    %v1077 = vunpack.c.h.b16 %v302
    %v1078 = vunpack.c.l.b16 %v303
    %v1079 = vunpack.c.h.b16 %v303
    %v1080 = vunpack.c.l.b16 %v304
    %v1081 = vunpack.c.h.b16 %v304
    %v1082 = vunpack.c.l.b16 %v305
    %v1083 = vunpack.c.h.b16 %v305
    %v1084 = vunpack.c.l.b16 %v306
    %v1085 = vunpack.c.h.b16 %v306
    %v1086 = vunpack.c.l.b16 %v307
    %v1087 = vunpack.c.h.b16 %v307
    %v1088 = vunpack.c.l.b16 %v308
    %v1089 = vunpack.c.h.b16 %v308
    %v1090 = vunpack.c.l.b16 %v309
    %v1091 = vunpack.c.h.b16 %v309
    %v1092 = vunpack.c.l.b16 %v310
    %v1093 = vunpack.c.h.b16 %v310
    %v1094 = vunpack.c.l.b16 %v311
    %v1095 = vunpack.c.h.b16 %v311
    %v1096 = vunpack.c.l.b16 %v312
    %v1097 = vunpack.c.h.b16 %v312
    %v1098 = vunpack.c.l.b16 %v313
    %v1099 = vunpack.c.h.b16 %v313
    %v1100 = vunpack.c.l.b16 %v314
    %v1101 = vunpack.c.h.b16 %v314
    %v1102 = vunpack.c.l.b16 %v315
    %v1103 = vunpack.c.h.b16 %v315
    %v1104 = vunpack.c.l.b16 %v316
    %v1105 = vunpack.c.h.b16 %v316
    %v1106 = vunpack.c.l.b16 %v317
    %v1107 = vunpack.c.h.b16 %v317
    %v1108 = vunpack.c.l.b16 %v318
    %v1109 = vunpack.c.h.b16 %v318
    %v1110 = vunpack.c.l.b16 %v319
    %v1111 = vunpack.c.h.b16 %v319
    %v1112 = vunpack.c.l.b16 %v320
    %v1113 = vunpack.c.h.b16 %v320
    %v1114 = vunpack.c.l.b16 %v321
    %v1115 = vunpack.c.h.b16 %v321
    %v1116 = vunpack.c.l.b16 %v322
    %v1117 = vunpack.c.h.b16 %v322
    %v1118 = vunpack.c.l.b16 %v323
    %v1119 = vunpack.c.h.b16 %v323
    %v1120 = vpack.c.b16 %v612, %v608
    %v1121 = vpack.c.b16 %v613, %v609
    %v1122 = vpack.c.b16 %v614, %v610
    %v1123 = vpack.c.b16 %v615, %v611
    %v1124 = vpack.c.b16 %v620, %v616
    %v1125 = vpack.c.b16 %v621, %v617
    %v1126 = vpack.c.b16 %v622, %v618
    %v1127 = vpack.c.b16 %v623, %v619
    %v1128 = vpack.c.b16 %v628, %v624
    %v1129 = vpack.c.b16 %v629, %v625
    %v1130 = vpack.c.b16 %v630, %v626
    %v1131 = vpack.c.b16 %v631, %v627
    %v1132 = vpack.c.b16 %v636, %v632
    %v1133 = vpack.c.b16 %v637, %v633
    %v1134 = vpack.c.b16 %v638, %v634
    %v1135 = vpack.c.b16 %v639, %v635
    %v1136 = vpack.c.b16 %v644, %v640
    %v1137 = vpack.c.b16 %v645, %v641
    %v1138 = vpack.c.b16 %v646, %v642
    %v1139 = vpack.c.b16 %v647, %v643
    %v1140 = vpack.c.b16 %v652, %v648
    %v1141 = vpack.c.b16 %v653, %v649
    %v1142 = vpack.c.b16 %v654, %v650
    %v1143 = vpack.c.b16 %v655, %v651
    %v1144 = vpack.c.b16 %v660, %v656
    %v1145 = vpack.c.b16 %v661, %v657
    %v1146 = vpack.c.b16 %v662, %v658
    %v1147 = vpack.c.b16 %v663, %v659
    %v1148 = vpack.c.b16 %v668, %v664
    %v1149 = vpack.c.b16 %v669, %v665
    %v1150 = vpack.c.b16 %v670, %v666
    %v1151 = vpack.c.b16 %v671, %v667
    %v1152 = vpack.c.b16 %v676, %v672
    %v1153 = vpack.c.b16 %v677, %v673
    %v1154 = vpack.c.b16 %v678, %v674
    %v1155 = vpack.c.b16 %v679, %v675
    %v1156 = vpack.c.b16 %v684, %v680
    %v1157 = vpack.c.b16 %v685, %v681
    %v1158 = vpack.c.b16 %v686, %v682
    %v1159 = vpack.c.b16 %v687, %v683
    %v1160 = vpack.c.b16 %v692, %v688
    %v1161 = vpack.c.b16 %v693, %v689
    %v1162 = vpack.c.b16 %v694, %v690
    %v1163 = vpack.c.b16 %v695, %v691
    %v1164 = vpack.c.b16 %v700, %v696
    %v1165 = vpack.c.b16 %v701, %v697
    %v1166 = vpack.c.b16 %v702, %v698
    %v1167 = vpack.c.b16 %v703, %v699
    %v1168 = vpack.c.b16 %v708, %v704
    %v1169 = vpack.c.b16 %v709, %v705
    %v1170 = vpack.c.b16 %v710, %v706
    %v1171 = vpack.c.b16 %v711, %v707
    %v1172 = vpack.c.b16 %v716, %v712
    %v1173 = vpack.c.b16 %v717, %v713
    %v1174 = vpack.c.b16 %v718, %v714
    %v1175 = vpack.c.b16 %v719, %v715
    %v1176 = vpack.c.b16 %v724, %v720
    %v1177 = vpack.c.b16 %v725, %v721
    %v1178 = vpack.c.b16 %v726, %v722
    %v1179 = vpack.c.b16 %v727, %v723
    %v1180 = vpack.c.b16 %v732, %v728
    %v1181 = vpack.c.b16 %v733, %v729
    %v1182 = vpack.c.b16 %v734, %v730
    %v1183 = vpack.c.b16 %v735, %v731
    %v1184 = vpack.c.b16 %v740, %v736
    %v1185 = vpack.c.b16 %v741, %v737
    %v1186 = vpack.c.b16 %v742, %v738
    %v1187 = vpack.c.b16 %v743, %v739
    %v1188 = vpack.c.b16 %v748, %v744
    %v1189 = vpack.c.b16 %v749, %v745
    %v1190 = vpack.c.b16 %v750, %v746
    %v1191 = vpack.c.b16 %v751, %v747
    %v1192 = vpack.c.b16 %v756, %v752
    %v1193 = vpack.c.b16 %v757, %v753
    %v1194 = vpack.c.b16 %v758, %v754
    %v1195 = vpack.c.b16 %v759, %v755
    %v1196 = vpack.c.b16 %v764, %v760
    %v1197 = vpack.c.b16 %v765, %v761
    %v1198 = vpack.c.b16 %v766, %v762
    %v1199 = vpack.c.b16 %v767, %v763
    %v1200 = vpack.c.b16 %v772, %v768
    %v1201 = vpack.c.b16 %v773, %v769
    %v1202 = vpack.c.b16 %v774, %v770
    %v1203 = vpack.c.b16 %v775, %v771
    %v1204 = vpack.c.b16 %v780, %v776
    %v1205 = vpack.c.b16 %v781, %v777
    %v1206 = vpack.c.b16 %v782, %v778
    %v1207 = vpack.c.b16 %v783, %v779
    %v1208 = vpack.c.b16 %v788, %v784
    %v1209 = vpack.c.b16 %v789, %v785
    %v1210 = vpack.c.b16 %v790, %v786
    %v1211 = vpack.c.b16 %v791, %v787
    %v1212 = vpack.c.b16 %v796, %v792
    %v1213 = vpack.c.b16 %v797, %v793
    %v1214 = vpack.c.b16 %v798, %v794
    %v1215 = vpack.c.b16 %v799, %v795
    %v1216 = vpack.c.b16 %v804, %v800
    %v1217 = vpack.c.b16 %v805, %v801
    %v1218 = vpack.c.b16 %v806, %v802
    %v1219 = vpack.c.b16 %v807, %v803
    %v1220 = vpack.c.b16 %v812, %v808
    %v1221 = vpack.c.b16 %v813, %v809
    %v1222 = vpack.c.b16 %v814, %v810
    %v1223 = vpack.c.b16 %v815, %v811
    %v1224 = vpack.c.b16 %v820, %v816
    %v1225 = vpack.c.b16 %v821, %v817
    %v1226 = vpack.c.b16 %v822, %v818
    %v1227 = vpack.c.b16 %v823, %v819
    %v1228 = vpack.c.b16 %v828, %v824
    %v1229 = vpack.c.b16 %v829, %v825
    %v1230 = vpack.c.b16 %v830, %v826
    %v1231 = vpack.c.b16 %v831, %v827
    %v1232 = vpack.c.b16 %v836, %v832
    %v1233 = vpack.c.b16 %v837, %v833
    %v1234 = vpack.c.b16 %v838, %v834
    %v1235 = vpack.c.b16 %v839, %v835
    %v1236 = vpack.c.b16 %v844, %v840
    %v1237 = vpack.c.b16 %v845, %v841
    %v1238 = vpack.c.b16 %v846, %v842
    %v1239 = vpack.c.b16 %v847, %v843
    %v1240 = vpack.c.b16 %v852, %v848
    %v1241 = vpack.c.b16 %v853, %v849
    %v1242 = vpack.c.b16 %v854, %v850
    %v1243 = vpack.c.b16 %v855, %v851
    %v1244 = vpack.c.b16 %v860, %v856
    %v1245 = vpack.c.b16 %v861, %v857
    %v1246 = vpack.c.b16 %v862, %v858
    %v1247 = vpack.c.b16 %v863, %v859
    %v1248 = vpack.c.b16 %v868, %v864
    %v1249 = vpack.c.b16 %v869, %v865
    %v1250 = vpack.c.b16 %v870, %v866
    %v1251 = vpack.c.b16 %v871, %v867
    %v1252 = vpack.c.b16 %v876, %v872
    %v1253 = vpack.c.b16 %v877, %v873
    %v1254 = vpack.c.b16 %v878, %v874
    %v1255 = vpack.c.b16 %v879, %v875
    %v1256 = vpack.c.b16 %v884, %v880
    %v1257 = vpack.c.b16 %v885, %v881
    %v1258 = vpack.c.b16 %v886, %v882
    %v1259 = vpack.c.b16 %v887, %v883
    %v1260 = vpack.c.b16 %v892, %v888
    %v1261 = vpack.c.b16 %v893, %v889
    %v1262 = vpack.c.b16 %v894, %v890
    %v1263 = vpack.c.b16 %v895, %v891
    %v1264 = vpack.c.b16 %v900, %v896
    %v1265 = vpack.c.b16 %v901, %v897
    %v1266 = vpack.c.b16 %v902, %v898
    %v1267 = vpack.c.b16 %v903, %v899
    %v1268 = vpack.c.b16 %v908, %v904
    %v1269 = vpack.c.b16 %v909, %v905
    %v1270 = vpack.c.b16 %v910, %v906
    %v1271 = vpack.c.b16 %v911, %v907
    %v1272 = vpack.c.b16 %v916, %v912
    %v1273 = vpack.c.b16 %v917, %v913
    %v1274 = vpack.c.b16 %v918, %v914
    %v1275 = vpack.c.b16 %v919, %v915
    %v1276 = vpack.c.b16 %v924, %v920
    %v1277 = vpack.c.b16 %v925, %v921
    %v1278 = vpack.c.b16 %v926, %v922
    %v1279 = vpack.c.b16 %v927, %v923
    %v1280 = vpack.c.b16 %v932, %v928
    %v1281 = vpack.c.b16 %v933, %v929
    %v1282 = vpack.c.b16 %v934, %v930
    %v1283 = vpack.c.b16 %v935, %v931
    %v1284 = vpack.c.b16 %v940, %v936
    %v1285 = vpack.c.b16 %v941, %v937
    %v1286 = vpack.c.b16 %v942, %v938
    %v1287 = vpack.c.b16 %v943, %v939
    %v1288 = vpack.c.b16 %v948, %v944
    %v1289 = vpack.c.b16 %v949, %v945
    %v1290 = vpack.c.b16 %v950, %v946
    %v1291 = vpack.c.b16 %v951, %v947
    %v1292 = vpack.c.b16 %v956, %v952
    %v1293 = vpack.c.b16 %v957, %v953
    %v1294 = vpack.c.b16 %v958, %v954
    %v1295 = vpack.c.b16 %v959, %v955
    %v1296 = vpack.c.b16 %v964, %v960
    %v1297 = vpack.c.b16 %v965, %v961
    %v1298 = vpack.c.b16 %v966, %v962
    %v1299 = vpack.c.b16 %v967, %v963
    %v1300 = vpack.c.b16 %v972, %v968
    %v1301 = vpack.c.b16 %v973, %v969
    %v1302 = vpack.c.b16 %v974, %v970
    %v1303 = vpack.c.b16 %v975, %v971
    %v1304 = vpack.c.b16 %v980, %v976
    %v1305 = vpack.c.b16 %v981, %v977
    %v1306 = vpack.c.b16 %v982, %v978
    %v1307 = vpack.c.b16 %v983, %v979
    %v1308 = vpack.c.b16 %v988, %v984
    %v1309 = vpack.c.b16 %v989, %v985
    %v1310 = vpack.c.b16 %v990, %v986
    %v1311 = vpack.c.b16 %v991, %v987
    %v1312 = vpack.c.b16 %v996, %v992
    %v1313 = vpack.c.b16 %v997, %v993
    %v1314 = vpack.c.b16 %v998, %v994
    %v1315 = vpack.c.b16 %v999, %v995
    %v1316 = vpack.c.b16 %v1004, %v1000
    %v1317 = vpack.c.b16 %v1005, %v1001
    %v1318 = vpack.c.b16 %v1006, %v1002
    %v1319 = vpack.c.b16 %v1007, %v1003
    %v1320 = vpack.c.b16 %v1012, %v1008
    %v1321 = vpack.c.b16 %v1013, %v1009
    %v1322 = vpack.c.b16 %v1014, %v1010
    %v1323 = vpack.c.b16 %v1015, %v1011
    %v1324 = vpack.c.b16 %v1020, %v1016
    %v1325 = vpack.c.b16 %v1021, %v1017
    %v1326 = vpack.c.b16 %v1022, %v1018
    %v1327 = vpack.c.b16 %v1023, %v1019
    %v1328 = vpack.c.b16 %v1028, %v1024
    %v1329 = vpack.c.b16 %v1029, %v1025
    %v1330 = vpack.c.b16 %v1030, %v1026
    %v1331 = vpack.c.b16 %v1031, %v1027
    %v1332 = vpack.c.b16 %v1036, %v1032
    %v1333 = vpack.c.b16 %v1037, %v1033
    %v1334 = vpack.c.b16 %v1038, %v1034
    %v1335 = vpack.c.b16 %v1039, %v1035
    %v1336 = vpack.c.b16 %v1044, %v1040
    %v1337 = vpack.c.b16 %v1045, %v1041
    %v1338 = vpack.c.b16 %v1046, %v1042
    %v1339 = vpack.c.b16 %v1047, %v1043
    %v1340 = vpack.c.b16 %v1052, %v1048
    %v1341 = vpack.c.b16 %v1053, %v1049
    %v1342 = vpack.c.b16 %v1054, %v1050
    %v1343 = vpack.c.b16 %v1055, %v1051
    %v1344 = vpack.c.b16 %v1060, %v1056
    %v1345 = vpack.c.b16 %v1061, %v1057
    %v1346 = vpack.c.b16 %v1062, %v1058
    %v1347 = vpack.c.b16 %v1063, %v1059
    %v1348 = vpack.c.b16 %v1068, %v1064
    %v1349 = vpack.c.b16 %v1069, %v1065
    %v1350 = vpack.c.b16 %v1070, %v1066
    %v1351 = vpack.c.b16 %v1071, %v1067
    %v1352 = vpack.c.b16 %v1076, %v1072
    %v1353 = vpack.c.b16 %v1077, %v1073
    %v1354 = vpack.c.b16 %v1078, %v1074
    %v1355 = vpack.c.b16 %v1079, %v1075
    %v1356 = vpack.c.b16 %v1084, %v1080
    %v1357 = vpack.c.b16 %v1085, %v1081
    %v1358 = vpack.c.b16 %v1086, %v1082
    %v1359 = vpack.c.b16 %v1087, %v1083
    %v1360 = vpack.c.b16 %v1092, %v1088
    %v1361 = vpack.c.b16 %v1093, %v1089
    %v1362 = vpack.c.b16 %v1094, %v1090
    %v1363 = vpack.c.b16 %v1095, %v1091
    %v1364 = vpack.c.b16 %v1100, %v1096
    %v1365 = vpack.c.b16 %v1101, %v1097
    %v1366 = vpack.c.b16 %v1102, %v1098
    %v1367 = vpack.c.b16 %v1103, %v1099
    %v1368 = vpack.c.b16 %v1108, %v1104
    %v1369 = vpack.c.b16 %v1109, %v1105
    %v1370 = vpack.c.b16 %v1110, %v1106
    %v1371 = vpack.c.b16 %v1111, %v1107
    %v1372 = vpack.c.b16 %v1116, %v1112
    %v1373 = vpack.c.b16 %v1117, %v1113
    %v1374 = vpack.c.b16 %v1118, %v1114
    %v1375 = vpack.c.b16 %v1119, %v1115
    %1632 = vmatprep.subr.bf16.mxu0 %v1121
    %1633 = vmatpush1.bf16.msra.mxu0 %v1120
    %1634 = vmatprep.subr.bf16.mxu0 %v1125
    %1635 = vmatpush1.bf16.msra.mxu0 %v1124
    %1636 = vmatprep.subr.bf16.mxu0 %v1129
    %1637 = vmatpush1.bf16.msra.mxu0 %v1128
    %1638 = vmatprep.subr.bf16.mxu0 %v1133
    %1639 = vmatpush1.bf16.msra.mxu0 %v1132
    %1640 = vmatprep.subr.bf16.mxu0 %v1137
    %1641 = vmatpush1.bf16.msra.mxu0 %v1136
    %1642 = vmatprep.subr.bf16.mxu0 %v1141
    %1643 = vmatpush1.bf16.msra.mxu0 %v1140
    %1644 = vmatprep.subr.bf16.mxu0 %v1145
    %1645 = vmatpush1.bf16.msra.mxu0 %v1144
    %1646 = vmatprep.subr.bf16.mxu0 %v1149
    %1647 = vmatpush1.bf16.msra.mxu0 %v1148
    %1648 = vmatprep.subr.bf16.mxu0 %v1153
    %1649 = vmatpush1.bf16.msra.mxu0 %v1152
    %1650 = vmatprep.subr.bf16.mxu0 %v1157
    %1651 = vmatpush1.bf16.msra.mxu0 %v1156
    %1652 = vmatprep.subr.bf16.mxu0 %v1161
    %1653 = vmatpush1.bf16.msra.mxu0 %v1160
    %1654 = vmatprep.subr.bf16.mxu0 %v1165
    %1655 = vmatpush1.bf16.msra.mxu0 %v1164
    %1656 = vmatprep.subr.bf16.mxu0 %v1169
    %1657 = vmatpush1.bf16.msra.mxu0 %v1168
    %1658 = vmatprep.subr.bf16.mxu0 %v1173
    %1659 = vmatpush1.bf16.msra.mxu0 %v1172
    %1660 = vmatprep.subr.bf16.mxu0 %v1177
    %1661 = vmatpush1.bf16.msra.mxu0 %v1176
    %1662 = vmatprep.subr.bf16.mxu0 %v1181
    %1663 = vmatpush1.bf16.msra.mxu0 %v1180
    %1664 = vmatprep.mubr.bf16.mxu0 %v337
    %1665 = vmatmul.mubr.bf16.gmra.mrb[0].mxu0 %v336
    %v1666 = vpop.f32.mrb[0].mxu0
    %v1667 = vadd.f32 0.0, %v1666
    %v1668 = vpop.f32.mrb[0].mxu0
    %v1669 = vadd.f32 0.0, %v1668
    %v1670 = vpop.f32.mrb[0].mxu0
    %v1671 = vpop.f32.mrb[0].mxu0
    %1672 = vdwg.mxu0
    %1673 = vmatprep.subr.bf16.mxu0 %v1185
    %1674 = vmatpush1.bf16.msra.mxu0 %v1184
    %1675 = vmatprep.subr.bf16.mxu0 %v1189
    %1676 = vmatpush1.bf16.msra.mxu0 %v1188
    %1677 = vmatprep.subr.bf16.mxu0 %v1193
    %1678 = vmatpush1.bf16.msra.mxu0 %v1192
    %1679 = vmatprep.subr.bf16.mxu0 %v1197
    %1680 = vmatpush1.bf16.msra.mxu0 %v1196
    %1681 = vmatprep.subr.bf16.mxu0 %v1201
    %1682 = vmatpush1.bf16.msra.mxu0 %v1200
    %1683 = vmatprep.subr.bf16.mxu0 %v1205
    %1684 = vmatpush1.bf16.msra.mxu0 %v1204
    %1685 = vmatprep.subr.bf16.mxu0 %v1209
    %1686 = vmatpush1.bf16.msra.mxu0 %v1208
    %1687 = vmatprep.subr.bf16.mxu0 %v1213
    %1688 = vmatpush1.bf16.msra.mxu0 %v1212
    %1689 = vmatprep.subr.bf16.mxu0 %v1217
    %1690 = vmatpush1.bf16.msra.mxu0 %v1216
    %1691 = vmatprep.subr.bf16.mxu0 %v1221
    %1692 = vmatpush1.bf16.msra.mxu0 %v1220
    %1693 = vmatprep.subr.bf16.mxu0 %v1225
    %1694 = vmatpush1.bf16.msra.mxu0 %v1224
    %1695 = vmatprep.subr.bf16.mxu0 %v1229
    %1696 = vmatpush1.bf16.msra.mxu0 %v1228
    %1697 = vmatprep.subr.bf16.mxu0 %v1233
    %1698 = vmatpush1.bf16.msra.mxu0 %v1232
    %1699 = vmatprep.subr.bf16.mxu0 %v1237
    %1700 = vmatpush1.bf16.msra.mxu0 %v1236
    %1701 = vmatprep.subr.bf16.mxu0 %v1241
    %1702 = vmatpush1.bf16.msra.mxu0 %v1240
    %1703 = vmatprep.subr.bf16.mxu0 %v1245
    %1704 = vmatpush1.bf16.msra.mxu0 %v1244
    %1705 = vmatprep.mubr.bf16.mxu0 %v339
    %1706 = vmatmul.mubr.bf16.gmra.mrb[0].mxu0 %v338
    %v1707 = vpop.f32.mrb[0].mxu0
    %v1708 = vadd.f32 %v1667, %v1707
    %v1709 = vpop.f32.mrb[0].mxu0
    %v1710 = vadd.f32 %v1669, %v1709
    %v1711 = vpop.f32.mrb[0].mxu0
    %v1712 = vpop.f32.mrb[0].mxu0
    %1713 = vdwg.mxu0
    %1714 = vmatprep.subr.bf16.mxu0 %v1249
    %1715 = vmatpush1.bf16.msra.mxu0 %v1248
    %1716 = vmatprep.subr.bf16.mxu0 %v1253
    %1717 = vmatpush1.bf16.msra.mxu0 %v1252
    %1718 = vmatprep.subr.bf16.mxu0 %v1257
    %1719 = vmatpush1.bf16.msra.mxu0 %v1256
    %1720 = vmatprep.subr.bf16.mxu0 %v1261
    %1721 = vmatpush1.bf16.msra.mxu0 %v1260
    %1722 = vmatprep.subr.bf16.mxu0 %v1265
    %1723 = vmatpush1.bf16.msra.mxu0 %v1264
    %1724 = vmatprep.subr.bf16.mxu0 %v1269
    %1725 = vmatpush1.bf16.msra.mxu0 %v1268
    %1726 = vmatprep.subr.bf16.mxu0 %v1273
    %1727 = vmatpush1.bf16.msra.mxu0 %v1272
    %1728 = vmatprep.subr.bf16.mxu0 %v1277
    %1729 = vmatpush1.bf16.msra.mxu0 %v1276
    %1730 = vmatprep.subr.bf16.mxu0 %v1281
    %1731 = vmatpush1.bf16.msra.mxu0 %v1280
    %1732 = vmatprep.subr.bf16.mxu0 %v1285
    %1733 = vmatpush1.bf16.msra.mxu0 %v1284
    %1734 = vmatprep.subr.bf16.mxu0 %v1289
    %1735 = vmatpush1.bf16.msra.mxu0 %v1288
    %1736 = vmatprep.subr.bf16.mxu0 %v1293
    %1737 = vmatpush1.bf16.msra.mxu0 %v1292
    %1738 = vmatprep.subr.bf16.mxu0 %v1297
    %1739 = vmatpush1.bf16.msra.mxu0 %v1296
    %1740 = vmatprep.subr.bf16.mxu0 %v1301
    %1741 = vmatpush1.bf16.msra.mxu0 %v1300
    %1742 = vmatprep.subr.bf16.mxu0 %v1305
    %1743 = vmatpush1.bf16.msra.mxu0 %v1304
    %1744 = vmatprep.subr.bf16.mxu0 %v1309
    %1745 = vmatpush1.bf16.msra.mxu0 %v1308
    %1746 = vmatprep.mubr.bf16.mxu0 %v341
    %1747 = vmatmul.mubr.bf16.gmra.mrb[0].mxu0 %v340
    %v1748 = vpop.f32.mrb[0].mxu0
    %v1749 = vadd.f32 %v1708, %v1748
    %v1750 = vpop.f32.mrb[0].mxu0
    %v1751 = vadd.f32 %v1710, %v1750
    %v1752 = vpop.f32.mrb[0].mxu0
    %v1753 = vpop.f32.mrb[0].mxu0
    %1754 = vdwg.mxu0
    %1755 = vmatprep.subr.bf16.mxu0 %v1313
    %1756 = vmatpush1.bf16.msra.mxu0 %v1312
    %1757 = vmatprep.subr.bf16.mxu0 %v1317
    %1758 = vmatpush1.bf16.msra.mxu0 %v1316
    %1759 = vmatprep.subr.bf16.mxu0 %v1321
    %1760 = vmatpush1.bf16.msra.mxu0 %v1320
    %1761 = vmatprep.subr.bf16.mxu0 %v1325
    %1762 = vmatpush1.bf16.msra.mxu0 %v1324
    %1763 = vmatprep.subr.bf16.mxu0 %v1329
    %1764 = vmatpush1.bf16.msra.mxu0 %v1328
    %1765 = vmatprep.subr.bf16.mxu0 %v1333
    %1766 = vmatpush1.bf16.msra.mxu0 %v1332
    %1767 = vmatprep.subr.bf16.mxu0 %v1337
    %1768 = vmatpush1.bf16.msra.mxu0 %v1336
    %1769 = vmatprep.subr.bf16.mxu0 %v1341
    %1770 = vmatpush1.bf16.msra.mxu0 %v1340
    %1771 = vmatprep.subr.bf16.mxu0 %v1345
    %1772 = vmatpush1.bf16.msra.mxu0 %v1344
    %1773 = vmatprep.subr.bf16.mxu0 %v1349
    %1774 = vmatpush1.bf16.msra.mxu0 %v1348
    %1775 = vmatprep.subr.bf16.mxu0 %v1353
    %1776 = vmatpush1.bf16.msra.mxu0 %v1352
    %1777 = vmatprep.subr.bf16.mxu0 %v1357
    %1778 = vmatpush1.bf16.msra.mxu0 %v1356
    %1779 = vmatprep.subr.bf16.mxu0 %v1361
    %1780 = vmatpush1.bf16.msra.mxu0 %v1360
    %1781 = vmatprep.subr.bf16.mxu0 %v1365
    %1782 = vmatpush1.bf16.msra.mxu0 %v1364
    %1783 = vmatprep.subr.bf16.mxu0 %v1369
    %1784 = vmatpush1.bf16.msra.mxu0 %v1368
    %1785 = vmatprep.subr.bf16.mxu0 %v1373
    %1786 = vmatpush1.bf16.msra.mxu0 %v1372
    %1787 = vmatprep.mubr.bf16.mxu0 %v343
    %1788 = vmatmul.mubr.bf16.gmra.mrb[0].mxu0 %v342
    %v1789 = vpop.f32.mrb[0].mxu0
    %v1790 = vadd.f32 %v1749, %v1789
    %v1791 = vpop.f32.mrb[0].mxu0
    %v1792 = vadd.f32 %v1751, %v1791
    %v1793 = vpop.f32.mrb[0].mxu0
    %v1794 = vpop.f32.mrb[0].mxu0
    %1795 = vdwg.mxu0
    %1796 = vmatprep.subr.bf16.mxu0 %v1123
    %1797 = vmatpush1.bf16.msra.mxu0 %v1122
    %1798 = vmatprep.subr.bf16.mxu0 %v1127
    %1799 = vmatpush1.bf16.msra.mxu0 %v1126
    %1800 = vmatprep.subr.bf16.mxu0 %v1131
    %1801 = vmatpush1.bf16.msra.mxu0 %v1130
    %1802 = vmatprep.subr.bf16.mxu0 %v1135
    %1803 = vmatpush1.bf16.msra.mxu0 %v1134
    %1804 = vmatprep.subr.bf16.mxu0 %v1139
    %1805 = vmatpush1.bf16.msra.mxu0 %v1138
    %1806 = vmatprep.subr.bf16.mxu0 %v1143
    %1807 = vmatpush1.bf16.msra.mxu0 %v1142
    %1808 = vmatprep.subr.bf16.mxu0 %v1147
    %1809 = vmatpush1.bf16.msra.mxu0 %v1146
    %1810 = vmatprep.subr.bf16.mxu0 %v1151
    %1811 = vmatpush1.bf16.msra.mxu0 %v1150
    %1812 = vmatprep.subr.bf16.mxu0 %v1155
    %1813 = vmatpush1.bf16.msra.mxu0 %v1154
    %1814 = vmatprep.subr.bf16.mxu0 %v1159
    %1815 = vmatpush1.bf16.msra.mxu0 %v1158
    %1816 = vmatprep.subr.bf16.mxu0 %v1163
    %1817 = vmatpush1.bf16.msra.mxu0 %v1162
    %1818 = vmatprep.subr.bf16.mxu0 %v1167
    %1819 = vmatpush1.bf16.msra.mxu0 %v1166
    %1820 = vmatprep.subr.bf16.mxu0 %v1171
    %1821 = vmatpush1.bf16.msra.mxu0 %v1170
    %1822 = vmatprep.subr.bf16.mxu0 %v1175
    %1823 = vmatpush1.bf16.msra.mxu0 %v1174
    %1824 = vmatprep.subr.bf16.mxu0 %v1179
    %1825 = vmatpush1.bf16.msra.mxu0 %v1178
    %1826 = vmatprep.subr.bf16.mxu0 %v1183
    %1827 = vmatpush1.bf16.msra.mxu0 %v1182
    %1828 = vmatprep.mubr.bf16.mxu0 %v337
    %1829 = vmatmul.mubr.bf16.gmra.mrb[0].mxu0 %v336
    %v1830 = vpop.f32.mrb[0].mxu0
    %v1831 = vadd.f32 0.0, %v1830
    %v1832 = vpop.f32.mrb[0].mxu0
    %v1833 = vadd.f32 0.0, %v1832
    %v1834 = vpop.f32.mrb[0].mxu0
    %v1835 = vpop.f32.mrb[0].mxu0
    %1836 = vdwg.mxu0
    %1837 = vmatprep.subr.bf16.mxu0 %v1187
    %1838 = vmatpush1.bf16.msra.mxu0 %v1186
    %1839 = vmatprep.subr.bf16.mxu0 %v1191
    %1840 = vmatpush1.bf16.msra.mxu0 %v1190
    %1841 = vmatprep.subr.bf16.mxu0 %v1195
    %1842 = vmatpush1.bf16.msra.mxu0 %v1194
    %1843 = vmatprep.subr.bf16.mxu0 %v1199
    %1844 = vmatpush1.bf16.msra.mxu0 %v1198
    %1845 = vmatprep.subr.bf16.mxu0 %v1203
    %1846 = vmatpush1.bf16.msra.mxu0 %v1202
    %1847 = vmatprep.subr.bf16.mxu0 %v1207
    %1848 = vmatpush1.bf16.msra.mxu0 %v1206
    %1849 = vmatprep.subr.bf16.mxu0 %v1211
    %1850 = vmatpush1.bf16.msra.mxu0 %v1210
    %1851 = vmatprep.subr.bf16.mxu0 %v1215
    %1852 = vmatpush1.bf16.msra.mxu0 %v1214
    %1853 = vmatprep.subr.bf16.mxu0 %v1219
    %1854 = vmatpush1.bf16.msra.mxu0 %v1218
    %1855 = vmatprep.subr.bf16.mxu0 %v1223
    %1856 = vmatpush1.bf16.msra.mxu0 %v1222
    %1857 = vmatprep.subr.bf16.mxu0 %v1227
    %1858 = vmatpush1.bf16.msra.mxu0 %v1226
    %1859 = vmatprep.subr.bf16.mxu0 %v1231
    %1860 = vmatpush1.bf16.msra.mxu0 %v1230
    %1861 = vmatprep.subr.bf16.mxu0 %v1235
    %1862 = vmatpush1.bf16.msra.mxu0 %v1234
    %1863 = vmatprep.subr.bf16.mxu0 %v1239
    %1864 = vmatpush1.bf16.msra.mxu0 %v1238
    %1865 = vmatprep.subr.bf16.mxu0 %v1243
    %1866 = vmatpush1.bf16.msra.mxu0 %v1242
    %1867 = vmatprep.subr.bf16.mxu0 %v1247
    %1868 = vmatpush1.bf16.msra.mxu0 %v1246
    %1869 = vmatprep.mubr.bf16.mxu0 %v339
    %1870 = vmatmul.mubr.bf16.gmra.mrb[0].mxu0 %v338
    %v1871 = vpop.f32.mrb[0].mxu0
    %v1872 = vadd.f32 %v1831, %v1871
    %v1873 = vpop.f32.mrb[0].mxu0
    %v1874 = vadd.f32 %v1833, %v1873
    %v1875 = vpop.f32.mrb[0].mxu0
    %v1876 = vpop.f32.mrb[0].mxu0
    %1877 = vdwg.mxu0
    %1878 = vmatprep.subr.bf16.mxu0 %v1251
    %1879 = vmatpush1.bf16.msra.mxu0 %v1250
    %1880 = vmatprep.subr.bf16.mxu0 %v1255
    %1881 = vmatpush1.bf16.msra.mxu0 %v1254
    %1882 = vmatprep.subr.bf16.mxu0 %v1259
    %1883 = vmatpush1.bf16.msra.mxu0 %v1258
    %1884 = vmatprep.subr.bf16.mxu0 %v1263
    %1885 = vmatpush1.bf16.msra.mxu0 %v1262
    %1886 = vmatprep.subr.bf16.mxu0 %v1267
    %1887 = vmatpush1.bf16.msra.mxu0 %v1266
    %1888 = vmatprep.subr.bf16.mxu0 %v1271
    %1889 = vmatpush1.bf16.msra.mxu0 %v1270
    %1890 = vmatprep.subr.bf16.mxu0 %v1275
    %1891 = vmatpush1.bf16.msra.mxu0 %v1274
    %1892 = vmatprep.subr.bf16.mxu0 %v1279
    %1893 = vmatpush1.bf16.msra.mxu0 %v1278
    %1894 = vmatprep.subr.bf16.mxu0 %v1283
    %1895 = vmatpush1.bf16.msra.mxu0 %v1282
    %1896 = vmatprep.subr.bf16.mxu0 %v1287
    %1897 = vmatpush1.bf16.msra.mxu0 %v1286
    %1898 = vmatprep.subr.bf16.mxu0 %v1291
    %1899 = vmatpush1.bf16.msra.mxu0 %v1290
    %1900 = vmatprep.subr.bf16.mxu0 %v1295
    %1901 = vmatpush1.bf16.msra.mxu0 %v1294
    %1902 = vmatprep.subr.bf16.mxu0 %v1299
    %1903 = vmatpush1.bf16.msra.mxu0 %v1298
    %1904 = vmatprep.subr.bf16.mxu0 %v1303
    %1905 = vmatpush1.bf16.msra.mxu0 %v1302
    %1906 = vmatprep.subr.bf16.mxu0 %v1307
    %1907 = vmatpush1.bf16.msra.mxu0 %v1306
    %1908 = vmatprep.subr.bf16.mxu0 %v1311
    %1909 = vmatpush1.bf16.msra.mxu0 %v1310
    %1910 = vmatprep.mubr.bf16.mxu0 %v341
    %1911 = vmatmul.mubr.bf16.gmra.mrb[0].mxu0 %v340
    %v1912 = vpop.f32.mrb[0].mxu0
    %v1913 = vadd.f32 %v1872, %v1912
    %v1914 = vpop.f32.mrb[0].mxu0
    %v1915 = vadd.f32 %v1874, %v1914
    %v1916 = vpop.f32.mrb[0].mxu0
    %v1917 = vpop.f32.mrb[0].mxu0
    %1918 = vdwg.mxu0
    %1919 = vmatprep.subr.bf16.mxu0 %v1315
    %1920 = vmatpush1.bf16.msra.mxu0 %v1314
    %1921 = vmatprep.subr.bf16.mxu0 %v1319
    %1922 = vmatpush1.bf16.msra.mxu0 %v1318
    %1923 = vmatprep.subr.bf16.mxu0 %v1323
    %1924 = vmatpush1.bf16.msra.mxu0 %v1322
    %1925 = vmatprep.subr.bf16.mxu0 %v1327
    %1926 = vmatpush1.bf16.msra.mxu0 %v1326
    %1927 = vmatprep.subr.bf16.mxu0 %v1331
    %1928 = vmatpush1.bf16.msra.mxu0 %v1330
    %1929 = vmatprep.subr.bf16.mxu0 %v1335
    %1930 = vmatpush1.bf16.msra.mxu0 %v1334
    %1931 = vmatprep.subr.bf16.mxu0 %v1339
    %1932 = vmatpush1.bf16.msra.mxu0 %v1338
    %1933 = vmatprep.subr.bf16.mxu0 %v1343
    %1934 = vmatpush1.bf16.msra.mxu0 %v1342
    %1935 = vmatprep.subr.bf16.mxu0 %v1347
    %1936 = vmatpush1.bf16.msra.mxu0 %v1346
    %1937 = vmatprep.subr.bf16.mxu0 %v1351
    %1938 = vmatpush1.bf16.msra.mxu0 %v1350
    %1939 = vmatprep.subr.bf16.mxu0 %v1355
    %1940 = vmatpush1.bf16.msra.mxu0 %v1354
    %1941 = vmatprep.subr.bf16.mxu0 %v1359
    %1942 = vmatpush1.bf16.msra.mxu0 %v1358
    %1943 = vmatprep.subr.bf16.mxu0 %v1363
    %1944 = vmatpush1.bf16.msra.mxu0 %v1362
    %1945 = vmatprep.subr.bf16.mxu0 %v1367
    %1946 = vmatpush1.bf16.msra.mxu0 %v1366
    %1947 = vmatprep.subr.bf16.mxu0 %v1371
    %1948 = vmatpush1.bf16.msra.mxu0 %v1370
    %1949 = vmatprep.subr.bf16.mxu0 %v1375
    %1950 = vmatpush1.bf16.msra.mxu0 %v1374
    %1951 = vmatprep.mubr.bf16.mxu0 %v343
    %1952 = vmatmul.mubr.bf16.gmra.mrb[0].mxu0 %v342
    %v1953 = vpop.f32.mrb[0].mxu0
    %v1954 = vadd.f32 %v1913, %v1953
    %v1955 = vpop.f32.mrb[0].mxu0
    %v1956 = vadd.f32 %v1915, %v1955
    %v1957 = vpop.f32.mrb[0].mxu0
    %v1958 = vpop.f32.mrb[0].mxu0
    %1959 = vdwg.mxu0
    %v1960 = vld [vmem:[%s2] sm:$0x1]
    %v1961 = vld [vmem:[%s3] sm:$0x1]
    %v1962 = vld [vmem:[%s4] sm:$0xff]
    %v1963 = vld [vmem:[%s4 + $0x8] sm:$0xff]
    %v1964 = vld [vmem:[%s4 + $0x10] sm:$0xff]
    %v1965 = vld [vmem:[%s4 + $0x18] sm:$0xff]
    %v1966 = vld [vmem:[%s4 + $0x20] sm:$0xff]
    %v1967 = vld [vmem:[%s4 + $0x28] sm:$0xff]
    %v1968 = vld [vmem:[%s4 + $0x30] sm:$0xff]
    %v1969 = vld [vmem:[%s4 + $0x38] sm:$0xff]
    %v1970 = vld [vmem:[%s4 + $0x40] sm:$0xff]
    %v1971 = vld [vmem:[%s4 + $0x48] sm:$0xff]
    %v1972 = vld [vmem:[%s4 + $0x50] sm:$0xff]
    %v1973 = vld [vmem:[%s4 + $0x58] sm:$0xff]
    %v1974 = vld [vmem:[%s4 + $0x60] sm:$0xff]
    %v1975 = vld [vmem:[%s4 + $0x68] sm:$0xff]
    %v1976 = vld [vmem:[%s4 + $0x70] sm:$0xff]
    %v1977 = vld [vmem:[%s4 + $0x78] sm:$0xff]
    %v1978 = vld [vmem:[%s4 + $0x80] sm:$0xff]
    %v1979 = vld [vmem:[%s4 + $0x88] sm:$0xff]
    %v1980 = vld [vmem:[%s4 + $0x90] sm:$0xff]
    %v1981 = vld [vmem:[%s4 + $0x98] sm:$0xff]
    %v1982 = vld [vmem:[%s4 + $0xa0] sm:$0xff]
    %v1983 = vld [vmem:[%s4 + $0xa8] sm:$0xff]
    %v1984 = vld [vmem:[%s4 + $0xb0] sm:$0xff]
    %v1985 = vld [vmem:[%s4 + $0xb8] sm:$0xff]
    %v1986 = vld [vmem:[%s4 + $0xc0] sm:$0xff]
    %v1987 = vld [vmem:[%s4 + $0xc8] sm:$0xff]
    %v1988 = vld [vmem:[%s4 + $0xd0] sm:$0xff]
    %v1989 = vld [vmem:[%s4 + $0xd8] sm:$0xff]
    %v1990 = vld [vmem:[%s4 + $0xe0] sm:$0xff]
    %v1991 = vld [vmem:[%s4 + $0xe8] sm:$0xff]
    %v1992 = vld [vmem:[%s4 + $0xf0] sm:$0xff]
    %v1993 = vld [vmem:[%s4 + $0xf8] sm:$0xff]
    %v1994 = vld [vmem:[%s4 + $0x100] sm:$0xff]
    %v1995 = vld [vmem:[%s4 + $0x108] sm:$0xff]
    %v1996 = vld [vmem:[%s4 + $0x110] sm:$0xff]
    %v1997 = vld [vmem:[%s4 + $0x118] sm:$0xff]
    %v1998 = vld [vmem:[%s4 + $0x120] sm:$0xff]
    %v1999 = vld [vmem:[%s4 + $0x128] sm:$0xff]
    %v2000 = vld [vmem:[%s4 + $0x130] sm:$0xff]
    %v2001 = vld [vmem:[%s4 + $0x138] sm:$0xff]
    %v2002 = vld [vmem:[%s4 + $0x140] sm:$0xff]
    %v2003 = vld [vmem:[%s4 + $0x148] sm:$0xff]
    %v2004 = vld [vmem:[%s4 + $0x150] sm:$0xff]
    %v2005 = vld [vmem:[%s4 + $0x158] sm:$0xff]
    %v2006 = vld [vmem:[%s4 + $0x160] sm:$0xff]
    %v2007 = vld [vmem:[%s4 + $0x168] sm:$0xff]
    %v2008 = vld [vmem:[%s4 + $0x170] sm:$0xff]
    %v2009 = vld [vmem:[%s4 + $0x178] sm:$0xff]
    %v2010 = vld [vmem:[%s4 + $0x180] sm:$0xff]
    %v2011 = vld [vmem:[%s4 + $0x188] sm:$0xff]
    %v2012 = vld [vmem:[%s4 + $0x190] sm:$0xff]
    %v2013 = vld [vmem:[%s4 + $0x198] sm:$0xff]
    %v2014 = vld [vmem:[%s4 + $0x1a0] sm:$0xff]
    %v2015 = vld [vmem:[%s4 + $0x1a8] sm:$0xff]
    %v2016 = vld [vmem:[%s4 + $0x1b0] sm:$0xff]
    %v2017 = vld [vmem:[%s4 + $0x1b8] sm:$0xff]
    %v2018 = vld [vmem:[%s4 + $0x1c0] sm:$0xff]
    %v2019 = vld [vmem:[%s4 + $0x1c8] sm:$0xff]
    %v2020 = vld [vmem:[%s4 + $0x1d0] sm:$0xff]
    %v2021 = vld [vmem:[%s4 + $0x1d8] sm:$0xff]
    %v2022 = vld [vmem:[%s4 + $0x1e0] sm:$0xff]
    %v2023 = vld [vmem:[%s4 + $0x1e8] sm:$0xff]
    %v2024 = vld [vmem:[%s4 + $0x1f0] sm:$0xff]
    %v2025 = vld [vmem:[%s4 + $0x1f8] sm:$0xff]
    %v2026 = vld [vmem:[%s5] sm:$0xff]
    %v2027 = vld [vmem:[%s5 + $0x8] sm:$0xff]
    %v2028 = vld [vmem:[%s5 + $0x10] sm:$0xff]
    %v2029 = vld [vmem:[%s5 + $0x18] sm:$0xff]
    %v2030 = vrot.slane %v1790, 4
    %v2031 = vadd.f32 %v1790, %v2030
    %v2032 = vrot.slane %v2031, 2
    %v2033 = vadd.f32 %v2031, %v2032
    %v2034 = vrot.slane %v2033, 1
    %v2035 = vadd.f32 %v2033, %v2034
    %v2036 = vrot.slane %v1792, 4
    %v2037 = vadd.f32 %v1792, %v2036
    %v2038 = vrot.slane %v2037, 2
    %v2039 = vadd.f32 %v2037, %v2038
    %v2040 = vrot.slane %v2039, 1
    %v2041 = vadd.f32 %v2039, %v2040
    %v2042 = vrot.slane %v1954, 4
    %v2043 = vadd.f32 %v1954, %v2042
    %v2044 = vrot.slane %v2043, 2
    %v2045 = vadd.f32 %v2043, %v2044
    %v2046 = vrot.slane %v2045, 1
    %v2047 = vadd.f32 %v2045, %v2046
    %v2048 = vrot.slane %v1956, 4
    %v2049 = vadd.f32 %v1956, %v2048
    %v2050 = vrot.slane %v2049, 2
    %v2051 = vadd.f32 %v2049, %v2050
    %v2052 = vrot.slane %v2051, 1
    %v2053 = vadd.f32 %v2051, %v2052
    %v2054 = vmul.f32 %v1790, %v1790
    %v2055 = vmul.f32 %v1792, %v1792
    %v2056 = vmul.f32 %v1954, %v1954
    %v2057 = vmul.f32 %v1956, %v1956
    %v2058 = vrot.slane %v2054, 4
    %v2059 = vadd.f32 %v2054, %v2058
    %v2060 = vrot.slane %v2059, 2
    %v2061 = vadd.f32 %v2059, %v2060
    %v2062 = vrot.slane %v2061, 1
    %v2063 = vadd.f32 %v2061, %v2062
    %v2064 = vrot.slane %v2055, 4
    %v2065 = vadd.f32 %v2055, %v2064
    %v2066 = vrot.slane %v2065, 2
    %v2067 = vadd.f32 %v2065, %v2066
    %v2068 = vrot.slane %v2067, 1
    %v2069 = vadd.f32 %v2067, %v2068
    %v2070 = vrot.slane %v2056, 4
    %v2071 = vadd.f32 %v2056, %v2070
    %v2072 = vrot.slane %v2071, 2
    %v2073 = vadd.f32 %v2071, %v2072
    %v2074 = vrot.slane %v2073, 1
    %v2075 = vadd.f32 %v2073, %v2074
    %v2076 = vrot.slane %v2057, 4
    %v2077 = vadd.f32 %v2057, %v2076
    %v2078 = vrot.slane %v2077, 2
    %v2079 = vadd.f32 %v2077, %v2078
    %v2080 = vrot.slane %v2079, 1
    %v2081 = vadd.f32 %v2079, %v2080
    %vm2082 = vcmask 1040384
    %v2083 = vsel %vm2082, %v2035, %v2063
    %v2084 = vsel %vm2082, %v2041, %v2069
    %v2085 = vsel %vm2082, %v2047, %v2075
    %v2086 = vsel %vm2082, %v2053, %v2081
    %2087 = vmatprep.subr.mxu0 0.0
    %2088 = vmatpush1.msra.mxu0 %v1962
    %2089 = vmatprep.subr.mxu0 0.0
    %2090 = vmatpush1.msra.mxu0 %v1963
    %2091 = vmatprep.subr.mxu0 0.0
    %2092 = vmatpush1.msra.mxu0 %v1964
    %2093 = vmatprep.subr.mxu0 0.0
    %2094 = vmatpush1.msra.mxu0 %v1965
    %2095 = vmatprep.subr.mxu0 0.0
    %2096 = vmatpush1.msra.mxu0 %v1966
    %2097 = vmatprep.subr.mxu0 0.0
    %2098 = vmatpush1.msra.mxu0 %v1967
    %2099 = vmatprep.subr.mxu0 0.0
    %2100 = vmatpush1.msra.mxu0 %v1968
    %2101 = vmatprep.subr.mxu0 0.0
    %2102 = vmatpush1.msra.mxu0 %v1969
    %2103 = vmatprep.subr.mxu0 0.0
    %2104 = vmatpush1.msra.mxu0 %v1970
    %2105 = vmatprep.subr.mxu0 0.0
    %2106 = vmatpush1.msra.mxu0 %v1971
    %2107 = vmatprep.subr.mxu0 0.0
    %2108 = vmatpush1.msra.mxu0 %v1972
    %2109 = vmatprep.subr.mxu0 0.0
    %2110 = vmatpush1.msra.mxu0 %v1973
    %2111 = vmatprep.subr.mxu0 0.0
    %2112 = vmatpush1.msra.mxu0 %v1974
    %2113 = vmatprep.subr.mxu0 0.0
    %2114 = vmatpush1.msra.mxu0 %v1975
    %2115 = vmatprep.subr.mxu0 0.0
    %2116 = vmatpush1.msra.mxu0 %v1976
    %2117 = vmatprep.subr.mxu0 0.0
    %2118 = vmatpush1.msra.mxu0 %v1977
    %2119 = vmatprep.subr.mxu0 0.0
    %2120 = vmatpush1.msra.mxu0 %v1978
    %2121 = vmatprep.subr.mxu0 0.0
    %2122 = vmatpush1.msra.mxu0 %v1979
    %2123 = vmatprep.subr.mxu0 0.0
    %2124 = vmatpush1.msra.mxu0 %v1980
    %2125 = vmatprep.subr.mxu0 0.0
    %2126 = vmatpush1.msra.mxu0 %v1981
    %2127 = vmatprep.subr.mxu0 0.0
    %2128 = vmatpush1.msra.mxu0 %v1982
    %2129 = vmatprep.subr.mxu0 0.0
    %2130 = vmatpush1.msra.mxu0 %v1983
    %2131 = vmatprep.subr.mxu0 0.0
    %2132 = vmatpush1.msra.mxu0 %v1984
    %2133 = vmatprep.subr.mxu0 0.0
    %2134 = vmatpush1.msra.mxu0 %v1985
    %2135 = vmatprep.subr.mxu0 0.0
    %2136 = vmatpush1.msra.mxu0 %v1986
    %2137 = vmatprep.subr.mxu0 0.0
    %2138 = vmatpush1.msra.mxu0 %v1987
    %2139 = vmatprep.subr.mxu0 0.0
    %2140 = vmatpush1.msra.mxu0 %v1988
    %2141 = vmatprep.subr.mxu0 0.0
    %2142 = vmatpush1.msra.mxu0 %v1989
    %2143 = vmatprep.subr.mxu0 0.0
    %2144 = vmatpush1.msra.mxu0 %v1990
    %2145 = vmatprep.subr.mxu0 0.0
    %2146 = vmatpush1.msra.mxu0 %v1991
    %2147 = vmatprep.subr.mxu0 0.0
    %2148 = vmatpush1.msra.mxu0 %v1992
    %2149 = vmatprep.subr.mxu0 0.0
    %2150 = vmatpush1.msra.mxu0 %v1993
    %2151 = vmatprep.mubr.f32.mxu0 %v2084
    %2152 = vmatmul.mubr.f32.gmra.mrb[0].mxu0 %v2083
    %v2153 = vpop.f32.mrb[0].mxu0
    %v2154 = vadd.f32 0.0, %v2153
    %v2155 = vpop.f32.mrb[0].mxu0
    %2156 = vdwg.mxu0
    %2157 = vmatprep.subr.mxu0 0.0
    %2158 = vmatpush1.msra.mxu0 %v1994
    %2159 = vmatprep.subr.mxu0 0.0
    %2160 = vmatpush1.msra.mxu0 %v1995
    %2161 = vmatprep.subr.mxu0 0.0
    %2162 = vmatpush1.msra.mxu0 %v1996
    %2163 = vmatprep.subr.mxu0 0.0
    %2164 = vmatpush1.msra.mxu0 %v1997
    %2165 = vmatprep.subr.mxu0 0.0
    %2166 = vmatpush1.msra.mxu0 %v1998
    %2167 = vmatprep.subr.mxu0 0.0
    %2168 = vmatpush1.msra.mxu0 %v1999
    %2169 = vmatprep.subr.mxu0 0.0
    %2170 = vmatpush1.msra.mxu0 %v2000
    %2171 = vmatprep.subr.mxu0 0.0
    %2172 = vmatpush1.msra.mxu0 %v2001
    %2173 = vmatprep.subr.mxu0 0.0
    %2174 = vmatpush1.msra.mxu0 %v2002
    %2175 = vmatprep.subr.mxu0 0.0
    %2176 = vmatpush1.msra.mxu0 %v2003
    %2177 = vmatprep.subr.mxu0 0.0
    %2178 = vmatpush1.msra.mxu0 %v2004
    %2179 = vmatprep.subr.mxu0 0.0
    %2180 = vmatpush1.msra.mxu0 %v2005
    %2181 = vmatprep.subr.mxu0 0.0
    %2182 = vmatpush1.msra.mxu0 %v2006
    %2183 = vmatprep.subr.mxu0 0.0
    %2184 = vmatpush1.msra.mxu0 %v2007
    %2185 = vmatprep.subr.mxu0 0.0
    %2186 = vmatpush1.msra.mxu0 %v2008
    %2187 = vmatprep.subr.mxu0 0.0
    %2188 = vmatpush1.msra.mxu0 %v2009
    %2189 = vmatprep.subr.mxu0 0.0
    %2190 = vmatpush1.msra.mxu0 %v2010
    %2191 = vmatprep.subr.mxu0 0.0
    %2192 = vmatpush1.msra.mxu0 %v2011
    %2193 = vmatprep.subr.mxu0 0.0
    %2194 = vmatpush1.msra.mxu0 %v2012
    %2195 = vmatprep.subr.mxu0 0.0
    %2196 = vmatpush1.msra.mxu0 %v2013
    %2197 = vmatprep.subr.mxu0 0.0
    %2198 = vmatpush1.msra.mxu0 %v2014
    %2199 = vmatprep.subr.mxu0 0.0
    %2200 = vmatpush1.msra.mxu0 %v2015
    %2201 = vmatprep.subr.mxu0 0.0
    %2202 = vmatpush1.msra.mxu0 %v2016
    %2203 = vmatprep.subr.mxu0 0.0
    %2204 = vmatpush1.msra.mxu0 %v2017
    %2205 = vmatprep.subr.mxu0 0.0
    %2206 = vmatpush1.msra.mxu0 %v2018
    %2207 = vmatprep.subr.mxu0 0.0
    %2208 = vmatpush1.msra.mxu0 %v2019
    %2209 = vmatprep.subr.mxu0 0.0
    %2210 = vmatpush1.msra.mxu0 %v2020
    %2211 = vmatprep.subr.mxu0 0.0
    %2212 = vmatpush1.msra.mxu0 %v2021
    %2213 = vmatprep.subr.mxu0 0.0
    %2214 = vmatpush1.msra.mxu0 %v2022
    %2215 = vmatprep.subr.mxu0 0.0
    %2216 = vmatpush1.msra.mxu0 %v2023
    %2217 = vmatprep.subr.mxu0 0.0
    %2218 = vmatpush1.msra.mxu0 %v2024
    %2219 = vmatprep.subr.mxu0 0.0
    %2220 = vmatpush1.msra.mxu0 %v2025
    %2221 = vmatprep.mubr.f32.mxu0 %v2086
    %2222 = vmatmul.mubr.f32.gmra.mrb[0].mxu0 %v2085
    %v2223 = vpop.f32.mrb[0].mxu0
    %v2224 = vadd.f32 %v2154, %v2223
    %v2225 = vpop.f32.mrb[0].mxu0
    %2226 = vdwg.mxu0
    %v2227 = vrcp.pop 512.0
    %v2228 = vmul.f32 %v2224, %v2227
    %v2229 = vmul.f32 %v2228, %v2228
    %v2231 = vrot.slane %v2229, 7
    %v2233 = vsub.f32 %v2228, %v2231
    %v2234 = vmax.f32 %v2233, 0.0
    %v2235 = vadd.f32 %v2234, 1e-05
    %v2236 = vrsqrt.pop %v2235
    %v2239 = vunpack.c.l.s4 1966171168
    %v2240 = vunpack.c.0.s8 %v2239
    %v2241 = vlaneseq
    %v2242 = vshrl.u32 %v2241, 7
    %v2243 = vsub.s32 %v2240, %v2242
    %v2244 = vrot.slane %v2236, %v2243
    %v2245 = vcombine.high %v2244, %v2244
    %v2247 = vunpack.c.l.s4 1966171168
    %v2248 = vunpack.c.0.s8 %v2247
    %v2249 = vlaneseq
    %v2250 = vshrl.u32 %v2249, 7
    %v2251 = vsub.s32 %v2248, %v2250
    %v2252 = vrot.slane %v2245, %v2251
    %v2254 = vmul.f32 %v1960, %v2252
    %v2255 = vmul.f32 %v2228, %v2254
    %v2256 = vsub.f32 %v1961, %v2255
    %v2258 = vlaneseq
    %v2259 = vshrl.u32 %v2258, 7
    %v2260 = vsub.s32 0, %v2259
    %v2261 = vrot.slane %v2256, %v2260
    %v2263 = vsel %vm2082, %v2254, %v2261
    %vm2264 = vcmask 64512
    %v2266 = vsel %vm2264, %v2263, 0
    %2268 = vmatprep.subr.mxu0 %v2027
    %2269 = vmatpush1.msra.mxu0 %v2026
    %2270 = vmatprep.subr.mxu0 0.0
    %2271 = vmatpush1.msra.mxu0 0.0
    %2272 = vmatprep.subr.mxu0 0.0
    %2273 = vmatpush1.msra.mxu0 0.0
    %2274 = vmatprep.subr.mxu0 0.0
    %2275 = vmatpush1.msra.mxu0 0.0
    %2276 = vmatprep.subr.mxu0 0.0
    %2277 = vmatpush1.msra.mxu0 0.0
    %2278 = vmatprep.subr.mxu0 0.0
    %2279 = vmatpush1.msra.mxu0 0.0
    %2280 = vmatprep.subr.mxu0 0.0
    %2281 = vmatpush1.msra.mxu0 0.0
    %2282 = vmatprep.subr.mxu0 0.0
    %2283 = vmatpush1.msra.mxu0 0.0
    %2284 = vmatprep.subr.mxu0 0.0
    %2285 = vmatpush1.msra.mxu0 0.0
    %2286 = vmatprep.subr.mxu0 0.0
    %2287 = vmatpush1.msra.mxu0 0.0
    %2288 = vmatprep.subr.mxu0 0.0
    %2289 = vmatpush1.msra.mxu0 0.0
    %2290 = vmatprep.subr.mxu0 0.0
    %2291 = vmatpush1.msra.mxu0 0.0
    %2292 = vmatprep.subr.mxu0 0.0
    %2293 = vmatpush1.msra.mxu0 0.0
    %2294 = vmatprep.subr.mxu0 0.0
    %2295 = vmatpush1.msra.mxu0 0.0
    %2296 = vmatprep.subr.mxu0 0.0
    %2297 = vmatpush1.msra.mxu0 0.0
    %2298 = vmatprep.subr.mxu0 0.0
    %2299 = vmatpush1.msra.mxu0 0.0
    %2300 = vmatprep.subr.mxu0 0.0
    %2301 = vmatpush1.msra.mxu0 0.0
    %2302 = vmatprep.subr.mxu0 0.0
    %2303 = vmatpush1.msra.mxu0 0.0
    %2304 = vmatprep.subr.mxu0 0.0
    %2305 = vmatpush1.msra.mxu0 0.0
    %2306 = vmatprep.subr.mxu0 0.0
    %2307 = vmatpush1.msra.mxu0 0.0
    %2308 = vmatprep.subr.mxu0 0.0
    %2309 = vmatpush1.msra.mxu0 0.0
    %2310 = vmatprep.subr.mxu0 0.0
    %2311 = vmatpush1.msra.mxu0 0.0
    %2312 = vmatprep.subr.mxu0 0.0
    %2313 = vmatpush1.msra.mxu0 0.0
    %2314 = vmatprep.subr.mxu0 0.0
    %2315 = vmatpush1.msra.mxu0 0.0
    %2316 = vmatprep.subr.mxu0 0.0
    %2317 = vmatpush1.msra.mxu0 0.0
    %2318 = vmatprep.subr.mxu0 0.0
    %2319 = vmatpush1.msra.mxu0 0.0
    %2320 = vmatprep.subr.mxu0 0.0
    %2321 = vmatpush1.msra.mxu0 0.0
    %2322 = vmatprep.subr.mxu0 0.0
    %2323 = vmatpush1.msra.mxu0 0.0
    %2324 = vmatprep.subr.mxu0 0.0
    %2325 = vmatpush1.msra.mxu0 0.0
    %2326 = vmatprep.subr.mxu0 0.0
    %2327 = vmatpush1.msra.mxu0 0.0
    %2328 = vmatprep.subr.mxu0 0.0
    %2329 = vmatpush1.msra.mxu0 0.0
    %2330 = vmatprep.subr.mxu0 0.0
    %2331 = vmatpush1.msra.mxu0 0.0
    %2332 = vmatprep.mubr.f32.mxu0 0.0
    %2333 = vmatmul.mubr.f32.gmra.mrb[0].mxu0 %v2266
    %v2334 = vpop.f32.mrb[0].mxu0
    %v2335 = vadd.f32 0.0, %v2334
    %v2336 = vpop.f32.mrb[0].mxu0
    %v2337 = vadd.f32 0.0, %v2336
    %2338 = vdwg.mxu0
    %2339 = vmatprep.subr.mxu0 %v2029
    %2340 = vmatpush1.msra.mxu0 %v2028
    %2341 = vmatprep.subr.mxu0 0.0
    %2342 = vmatpush1.msra.mxu0 0.0
    %2343 = vmatprep.subr.mxu0 0.0
    %2344 = vmatpush1.msra.mxu0 0.0
    %2345 = vmatprep.subr.mxu0 0.0
    %2346 = vmatpush1.msra.mxu0 0.0
    %2347 = vmatprep.subr.mxu0 0.0
    %2348 = vmatpush1.msra.mxu0 0.0
    %2349 = vmatprep.subr.mxu0 0.0
    %2350 = vmatpush1.msra.mxu0 0.0
    %2351 = vmatprep.subr.mxu0 0.0
    %2352 = vmatpush1.msra.mxu0 0.0
    %2353 = vmatprep.subr.mxu0 0.0
    %2354 = vmatpush1.msra.mxu0 0.0
    %2355 = vmatprep.subr.mxu0 0.0
    %2356 = vmatpush1.msra.mxu0 0.0
    %2357 = vmatprep.subr.mxu0 0.0
    %2358 = vmatpush1.msra.mxu0 0.0
    %2359 = vmatprep.subr.mxu0 0.0
    %2360 = vmatpush1.msra.mxu0 0.0
    %2361 = vmatprep.subr.mxu0 0.0
    %2362 = vmatpush1.msra.mxu0 0.0
    %2363 = vmatprep.subr.mxu0 0.0
    %2364 = vmatpush1.msra.mxu0 0.0
    %2365 = vmatprep.subr.mxu0 0.0
    %2366 = vmatpush1.msra.mxu0 0.0
    %2367 = vmatprep.subr.mxu0 0.0
    %2368 = vmatpush1.msra.mxu0 0.0
    %2369 = vmatprep.subr.mxu0 0.0
    %2370 = vmatpush1.msra.mxu0 0.0
    %2371 = vmatprep.subr.mxu0 0.0
    %2372 = vmatpush1.msra.mxu0 0.0
    %2373 = vmatprep.subr.mxu0 0.0
    %2374 = vmatpush1.msra.mxu0 0.0
    %2375 = vmatprep.subr.mxu0 0.0
    %2376 = vmatpush1.msra.mxu0 0.0
    %2377 = vmatprep.subr.mxu0 0.0
    %2378 = vmatpush1.msra.mxu0 0.0
    %2379 = vmatprep.subr.mxu0 0.0
    %2380 = vmatpush1.msra.mxu0 0.0
    %2381 = vmatprep.subr.mxu0 0.0
    %2382 = vmatpush1.msra.mxu0 0.0
    %2383 = vmatprep.subr.mxu0 0.0
    %2384 = vmatpush1.msra.mxu0 0.0
    %2385 = vmatprep.subr.mxu0 0.0
    %2386 = vmatpush1.msra.mxu0 0.0
    %2387 = vmatprep.subr.mxu0 0.0
    %2388 = vmatpush1.msra.mxu0 0.0
    %2389 = vmatprep.subr.mxu0 0.0
    %2390 = vmatpush1.msra.mxu0 0.0
    %2391 = vmatprep.subr.mxu0 0.0
    %2392 = vmatpush1.msra.mxu0 0.0
    %2393 = vmatprep.subr.mxu0 0.0
    %2394 = vmatpush1.msra.mxu0 0.0
    %2395 = vmatprep.subr.mxu0 0.0
    %2396 = vmatpush1.msra.mxu0 0.0
    %2397 = vmatprep.subr.mxu0 0.0
    %2398 = vmatpush1.msra.mxu0 0.0
    %2399 = vmatprep.subr.mxu0 0.0
    %2400 = vmatpush1.msra.mxu0 0.0
    %2401 = vmatprep.subr.mxu0 0.0
    %2402 = vmatpush1.msra.mxu0 0.0
    %2403 = vmatprep.mubr.f32.mxu0 0.0
    %2404 = vmatmul.mubr.f32.gmra.mrb[0].mxu0 %v2266
    %v2405 = vpop.f32.mrb[0].mxu0
    %v2406 = vadd.f32 0.0, %v2405
    %v2407 = vpop.f32.mrb[0].mxu0
    %v2408 = vadd.f32 0.0, %v2407
    %2409 = vdwg.mxu0
    %v2410 = vlaneseq
    %v2411 = vshrl.u32 %v2410, 7
    %v2412 = vsub.s32 0, %v2411
    %v2413 = vrot.slane %v2335, %v2412
    %v2414 = vlaneseq
    %v2415 = vshrl.u32 %v2414, 7
    %v2416 = vsub.s32 0, %v2415
    %v2417 = vrot.slane %v2337, %v2416
    %v2418 = vlaneseq
    %v2419 = vshrl.u32 %v2418, 7
    %v2420 = vsub.s32 0, %v2419
    %v2421 = vrot.slane %v2406, %v2420
    %v2422 = vlaneseq
    %v2423 = vshrl.u32 %v2422, 7
    %v2424 = vsub.s32 0, %v2423
    %v2425 = vrot.slane %v2408, %v2424
    %v2426 = vmul.f32 %v1790, %v2413
    %v2427 = vmul.f32 %v1792, %v2417
    %v2428 = vmul.f32 %v1954, %v2421
    %v2429 = vmul.f32 %v1956, %v2425
    %v2430 = vlaneseq
    %v2431 = vshrl.u32 %v2430, 7
    %v2432 = vsub.s32 1, %v2431
    %v2433 = vrot.slane %v2335, %v2432
    %v2434 = vlaneseq
    %v2435 = vshrl.u32 %v2434, 7
    %v2436 = vsub.s32 1, %v2435
    %v2437 = vrot.slane %v2337, %v2436
    %v2438 = vlaneseq
    %v2439 = vshrl.u32 %v2438, 7
    %v2440 = vsub.s32 1, %v2439
    %v2441 = vrot.slane %v2406, %v2440
    %v2442 = vlaneseq
    %v2443 = vshrl.u32 %v2442, 7
    %v2444 = vsub.s32 1, %v2443
    %v2445 = vrot.slane %v2408, %v2444
    %v2446 = vadd.f32 %v2426, %v2433
    %v2447 = vadd.f32 %v2427, %v2437
    %v2448 = vadd.f32 %v2428, %v2441
    %v2449 = vadd.f32 %v2429, %v2445
    %v2450 = vmax.f32 %v2446, 0.0
    %v2451 = vmax.f32 %v2447, 0.0
    %v2452 = vmax.f32 %v2448, 0.0
    %v2453 = vmax.f32 %v2449, 0.0
    %v2454 = vpack.c.bf16 %v2450, %v2450
    %v2455 = vpack.c.bf16 %v2451, %v2451
    %v2456 = vpack.c.bf16 %v2452, %v2452
    %v2457 = vpack.c.bf16 %v2453, %v2453
    %v2458 = vld [vmem:[%s6] sm:$0xff]
    %v2459 = vld [vmem:[%s6 + $0x8] sm:$0xff]
    %v2460 = vld [vmem:[%s6 + $0x10] sm:$0xff]
    %v2461 = vld [vmem:[%s6 + $0x18] sm:$0xff]
    %v2462 = vld [vmem:[%s6 + $0x20] sm:$0xff]
    %v2463 = vld [vmem:[%s6 + $0x28] sm:$0xff]
    %v2464 = vld [vmem:[%s6 + $0x30] sm:$0xff]
    %v2465 = vld [vmem:[%s6 + $0x38] sm:$0xff]
    %v2466 = vld [vmem:[%s6 + $0x40] sm:$0xff]
    %v2467 = vld [vmem:[%s6 + $0x48] sm:$0xff]
    %v2468 = vld [vmem:[%s6 + $0x50] sm:$0xff]
    %v2469 = vld [vmem:[%s6 + $0x58] sm:$0xff]
    %v2470 = vld [vmem:[%s6 + $0x60] sm:$0xff]
    %v2471 = vld [vmem:[%s6 + $0x68] sm:$0xff]
    %v2472 = vld [vmem:[%s6 + $0x70] sm:$0xff]
    %v2473 = vld [vmem:[%s6 + $0x78] sm:$0xff]
    %v2474 = vld [vmem:[%s6 + $0x80] sm:$0xff]
    %v2475 = vld [vmem:[%s6 + $0x88] sm:$0xff]
    %v2476 = vld [vmem:[%s6 + $0x90] sm:$0xff]
    %v2477 = vld [vmem:[%s6 + $0x98] sm:$0xff]
    %v2478 = vld [vmem:[%s6 + $0xa0] sm:$0xff]
    %v2479 = vld [vmem:[%s6 + $0xa8] sm:$0xff]
    %v2480 = vld [vmem:[%s6 + $0xb0] sm:$0xff]
    %v2481 = vld [vmem:[%s6 + $0xb8] sm:$0xff]
    %v2482 = vld [vmem:[%s6 + $0xc0] sm:$0xff]
    %v2483 = vld [vmem:[%s6 + $0xc8] sm:$0xff]
    %v2484 = vld [vmem:[%s6 + $0xd0] sm:$0xff]
    %v2485 = vld [vmem:[%s6 + $0xd8] sm:$0xff]
    %v2486 = vld [vmem:[%s6 + $0xe0] sm:$0xff]
    %v2487 = vld [vmem:[%s6 + $0xe8] sm:$0xff]
    %v2488 = vld [vmem:[%s6 + $0xf0] sm:$0xff]
    %v2489 = vld [vmem:[%s6 + $0xf8] sm:$0xff]
    %v2490 = vld [vmem:[%s6 + $0x100] sm:$0xff]
    %v2491 = vld [vmem:[%s6 + $0x108] sm:$0xff]
    %v2492 = vld [vmem:[%s6 + $0x110] sm:$0xff]
    %v2493 = vld [vmem:[%s6 + $0x118] sm:$0xff]
    %v2494 = vld [vmem:[%s6 + $0x120] sm:$0xff]
    %v2495 = vld [vmem:[%s6 + $0x128] sm:$0xff]
    %v2496 = vld [vmem:[%s6 + $0x130] sm:$0xff]
    %v2497 = vld [vmem:[%s6 + $0x138] sm:$0xff]
    %v2498 = vld [vmem:[%s6 + $0x140] sm:$0xff]
    %v2499 = vld [vmem:[%s6 + $0x148] sm:$0xff]
    %v2500 = vld [vmem:[%s6 + $0x150] sm:$0xff]
    %v2501 = vld [vmem:[%s6 + $0x158] sm:$0xff]
    %v2502 = vld [vmem:[%s6 + $0x160] sm:$0xff]
    %v2503 = vld [vmem:[%s6 + $0x168] sm:$0xff]
    %v2504 = vld [vmem:[%s6 + $0x170] sm:$0xff]
    %v2505 = vld [vmem:[%s6 + $0x178] sm:$0xff]
    %v2506 = vld [vmem:[%s6 + $0x180] sm:$0xff]
    %v2507 = vld [vmem:[%s6 + $0x188] sm:$0xff]
    %v2508 = vld [vmem:[%s6 + $0x190] sm:$0xff]
    %v2509 = vld [vmem:[%s6 + $0x198] sm:$0xff]
    %v2510 = vld [vmem:[%s6 + $0x1a0] sm:$0xff]
    %v2511 = vld [vmem:[%s6 + $0x1a8] sm:$0xff]
    %v2512 = vld [vmem:[%s6 + $0x1b0] sm:$0xff]
    %v2513 = vld [vmem:[%s6 + $0x1b8] sm:$0xff]
    %v2514 = vld [vmem:[%s6 + $0x1c0] sm:$0xff]
    %v2515 = vld [vmem:[%s6 + $0x1c8] sm:$0xff]
    %v2516 = vld [vmem:[%s6 + $0x1d0] sm:$0xff]
    %v2517 = vld [vmem:[%s6 + $0x1d8] sm:$0xff]
    %v2518 = vld [vmem:[%s6 + $0x1e0] sm:$0xff]
    %v2519 = vld [vmem:[%s6 + $0x1e8] sm:$0xff]
    %v2520 = vld [vmem:[%s6 + $0x1f0] sm:$0xff]
    %v2521 = vld [vmem:[%s6 + $0x1f8] sm:$0xff]
    %v2586 = vunpack.c.l.b16 %v2458
    %v2587 = vunpack.c.h.b16 %v2458
    %v2588 = vunpack.c.l.b16 %v2459
    %v2589 = vunpack.c.h.b16 %v2459
    %v2590 = vunpack.c.l.b16 %v2460
    %v2591 = vunpack.c.h.b16 %v2460
    %v2592 = vunpack.c.l.b16 %v2461
    %v2593 = vunpack.c.h.b16 %v2461
    %v2594 = vunpack.c.l.b16 %v2462
    %v2595 = vunpack.c.h.b16 %v2462
    %v2596 = vunpack.c.l.b16 %v2463
    %v2597 = vunpack.c.h.b16 %v2463
    %v2598 = vunpack.c.l.b16 %v2464
    %v2599 = vunpack.c.h.b16 %v2464
    %v2600 = vunpack.c.l.b16 %v2465
    %v2601 = vunpack.c.h.b16 %v2465
    %v2602 = vunpack.c.l.b16 %v2466
    %v2603 = vunpack.c.h.b16 %v2466
    %v2604 = vunpack.c.l.b16 %v2467
    %v2605 = vunpack.c.h.b16 %v2467
    %v2606 = vunpack.c.l.b16 %v2468
    %v2607 = vunpack.c.h.b16 %v2468
    %v2608 = vunpack.c.l.b16 %v2469
    %v2609 = vunpack.c.h.b16 %v2469
    %v2610 = vunpack.c.l.b16 %v2470
    %v2611 = vunpack.c.h.b16 %v2470
    %v2612 = vunpack.c.l.b16 %v2471
    %v2613 = vunpack.c.h.b16 %v2471
    %v2614 = vunpack.c.l.b16 %v2472
    %v2615 = vunpack.c.h.b16 %v2472
    %v2616 = vunpack.c.l.b16 %v2473
    %v2617 = vunpack.c.h.b16 %v2473
    %v2618 = vunpack.c.l.b16 %v2474
    %v2619 = vunpack.c.h.b16 %v2474
    %v2620 = vunpack.c.l.b16 %v2475
    %v2621 = vunpack.c.h.b16 %v2475
    %v2622 = vunpack.c.l.b16 %v2476
    %v2623 = vunpack.c.h.b16 %v2476
    %v2624 = vunpack.c.l.b16 %v2477
    %v2625 = vunpack.c.h.b16 %v2477
    %v2626 = vunpack.c.l.b16 %v2478
    %v2627 = vunpack.c.h.b16 %v2478
    %v2628 = vunpack.c.l.b16 %v2479
    %v2629 = vunpack.c.h.b16 %v2479
    %v2630 = vunpack.c.l.b16 %v2480
    %v2631 = vunpack.c.h.b16 %v2480
    %v2632 = vunpack.c.l.b16 %v2481
    %v2633 = vunpack.c.h.b16 %v2481
    %v2634 = vunpack.c.l.b16 %v2482
    %v2635 = vunpack.c.h.b16 %v2482
    %v2636 = vunpack.c.l.b16 %v2483
    %v2637 = vunpack.c.h.b16 %v2483
    %v2638 = vunpack.c.l.b16 %v2484
    %v2639 = vunpack.c.h.b16 %v2484
    %v2640 = vunpack.c.l.b16 %v2485
    %v2641 = vunpack.c.h.b16 %v2485
    %v2642 = vunpack.c.l.b16 %v2486
    %v2643 = vunpack.c.h.b16 %v2486
    %v2644 = vunpack.c.l.b16 %v2487
    %v2645 = vunpack.c.h.b16 %v2487
    %v2646 = vunpack.c.l.b16 %v2488
    %v2647 = vunpack.c.h.b16 %v2488
    %v2648 = vunpack.c.l.b16 %v2489
    %v2649 = vunpack.c.h.b16 %v2489
    %v2650 = vunpack.c.l.b16 %v2490
    %v2651 = vunpack.c.h.b16 %v2490
    %v2652 = vunpack.c.l.b16 %v2491
    %v2653 = vunpack.c.h.b16 %v2491
    %v2654 = vunpack.c.l.b16 %v2492
    %v2655 = vunpack.c.h.b16 %v2492
    %v2656 = vunpack.c.l.b16 %v2493
    %v2657 = vunpack.c.h.b16 %v2493
    %v2658 = vunpack.c.l.b16 %v2494
    %v2659 = vunpack.c.h.b16 %v2494
    %v2660 = vunpack.c.l.b16 %v2495
    %v2661 = vunpack.c.h.b16 %v2495
    %v2662 = vunpack.c.l.b16 %v2496
    %v2663 = vunpack.c.h.b16 %v2496
    %v2664 = vunpack.c.l.b16 %v2497
    %v2665 = vunpack.c.h.b16 %v2497
    %v2666 = vunpack.c.l.b16 %v2498
    %v2667 = vunpack.c.h.b16 %v2498
    %v2668 = vunpack.c.l.b16 %v2499
    %v2669 = vunpack.c.h.b16 %v2499
    %v2670 = vunpack.c.l.b16 %v2500
    %v2671 = vunpack.c.h.b16 %v2500
    %v2672 = vunpack.c.l.b16 %v2501
    %v2673 = vunpack.c.h.b16 %v2501
    %v2674 = vunpack.c.l.b16 %v2502
    %v2675 = vunpack.c.h.b16 %v2502
    %v2676 = vunpack.c.l.b16 %v2503
    %v2677 = vunpack.c.h.b16 %v2503
    %v2678 = vunpack.c.l.b16 %v2504
    %v2679 = vunpack.c.h.b16 %v2504
    %v2680 = vunpack.c.l.b16 %v2505
    %v2681 = vunpack.c.h.b16 %v2505
    %v2682 = vunpack.c.l.b16 %v2506
    %v2683 = vunpack.c.h.b16 %v2506
    %v2684 = vunpack.c.l.b16 %v2507
    %v2685 = vunpack.c.h.b16 %v2507
    %v2686 = vunpack.c.l.b16 %v2508
    %v2687 = vunpack.c.h.b16 %v2508
    %v2688 = vunpack.c.l.b16 %v2509
    %v2689 = vunpack.c.h.b16 %v2509
    %v2690 = vunpack.c.l.b16 %v2510
    %v2691 = vunpack.c.h.b16 %v2510
    %v2692 = vunpack.c.l.b16 %v2511
    %v2693 = vunpack.c.h.b16 %v2511
    %v2694 = vunpack.c.l.b16 %v2512
    %v2695 = vunpack.c.h.b16 %v2512
    %v2696 = vunpack.c.l.b16 %v2513
    %v2697 = vunpack.c.h.b16 %v2513
    %v2698 = vunpack.c.l.b16 %v2514
    %v2699 = vunpack.c.h.b16 %v2514
    %v2700 = vunpack.c.l.b16 %v2515
    %v2701 = vunpack.c.h.b16 %v2515
    %v2702 = vunpack.c.l.b16 %v2516
    %v2703 = vunpack.c.h.b16 %v2516
    %v2704 = vunpack.c.l.b16 %v2517
    %v2705 = vunpack.c.h.b16 %v2517
    %v2706 = vunpack.c.l.b16 %v2518
    %v2707 = vunpack.c.h.b16 %v2518
    %v2708 = vunpack.c.l.b16 %v2519
    %v2709 = vunpack.c.h.b16 %v2519
    %v2710 = vunpack.c.l.b16 %v2520
    %v2711 = vunpack.c.h.b16 %v2520
    %v2712 = vunpack.c.l.b16 %v2521
    %v2713 = vunpack.c.h.b16 %v2521
    %v2714 = vpack.c.b16 %v2588, %v2586
    %v2715 = vpack.c.b16 %v2589, %v2587
    %v2716 = vpack.c.b16 %v2592, %v2590
    %v2717 = vpack.c.b16 %v2593, %v2591
    %v2718 = vpack.c.b16 %v2596, %v2594
    %v2719 = vpack.c.b16 %v2597, %v2595
    %v2720 = vpack.c.b16 %v2600, %v2598
    %v2721 = vpack.c.b16 %v2601, %v2599
    %v2722 = vpack.c.b16 %v2604, %v2602
    %v2723 = vpack.c.b16 %v2605, %v2603
    %v2724 = vpack.c.b16 %v2608, %v2606
    %v2725 = vpack.c.b16 %v2609, %v2607
    %v2726 = vpack.c.b16 %v2612, %v2610
    %v2727 = vpack.c.b16 %v2613, %v2611
    %v2728 = vpack.c.b16 %v2616, %v2614
    %v2729 = vpack.c.b16 %v2617, %v2615
    %v2730 = vpack.c.b16 %v2620, %v2618
    %v2731 = vpack.c.b16 %v2621, %v2619
    %v2732 = vpack.c.b16 %v2624, %v2622
    %v2733 = vpack.c.b16 %v2625, %v2623
    %v2734 = vpack.c.b16 %v2628, %v2626
    %v2735 = vpack.c.b16 %v2629, %v2627
    %v2736 = vpack.c.b16 %v2632, %v2630
    %v2737 = vpack.c.b16 %v2633, %v2631
    %v2738 = vpack.c.b16 %v2636, %v2634
    %v2739 = vpack.c.b16 %v2637, %v2635
    %v2740 = vpack.c.b16 %v2640, %v2638
    %v2741 = vpack.c.b16 %v2641, %v2639
    %v2742 = vpack.c.b16 %v2644, %v2642
    %v2743 = vpack.c.b16 %v2645, %v2643
    %v2744 = vpack.c.b16 %v2648, %v2646
    %v2745 = vpack.c.b16 %v2649, %v2647
    %v2746 = vpack.c.b16 %v2652, %v2650
    %v2747 = vpack.c.b16 %v2653, %v2651
    %v2748 = vpack.c.b16 %v2656, %v2654
    %v2749 = vpack.c.b16 %v2657, %v2655
    %v2750 = vpack.c.b16 %v2660, %v2658
    %v2751 = vpack.c.b16 %v2661, %v2659
    %v2752 = vpack.c.b16 %v2664, %v2662
    %v2753 = vpack.c.b16 %v2665, %v2663
    %v2754 = vpack.c.b16 %v2668, %v2666
    %v2755 = vpack.c.b16 %v2669, %v2667
    %v2756 = vpack.c.b16 %v2672, %v2670
    %v2757 = vpack.c.b16 %v2673, %v2671
    %v2758 = vpack.c.b16 %v2676, %v2674
    %v2759 = vpack.c.b16 %v2677, %v2675
    %v2760 = vpack.c.b16 %v2680, %v2678
    %v2761 = vpack.c.b16 %v2681, %v2679
    %v2762 = vpack.c.b16 %v2684, %v2682
    %v2763 = vpack.c.b16 %v2685, %v2683
    %v2764 = vpack.c.b16 %v2688, %v2686
    %v2765 = vpack.c.b16 %v2689, %v2687
    %v2766 = vpack.c.b16 %v2692, %v2690
    %v2767 = vpack.c.b16 %v2693, %v2691
    %v2768 = vpack.c.b16 %v2696, %v2694
    %v2769 = vpack.c.b16 %v2697, %v2695
    %v2770 = vpack.c.b16 %v2700, %v2698
    %v2771 = vpack.c.b16 %v2701, %v2699
    %v2772 = vpack.c.b16 %v2704, %v2702
    %v2773 = vpack.c.b16 %v2705, %v2703
    %v2774 = vpack.c.b16 %v2708, %v2706
    %v2775 = vpack.c.b16 %v2709, %v2707
    %v2776 = vpack.c.b16 %v2712, %v2710
    %v2777 = vpack.c.b16 %v2713, %v2711
    %2842 = vmatprep.subr.bf16.mxu0 %v2715
    %2843 = vmatpush1.bf16.msra.mxu0 %v2714
    %2844 = vmatprep.subr.bf16.mxu0 %v2717
    %2845 = vmatpush1.bf16.msra.mxu0 %v2716
    %2846 = vmatprep.subr.bf16.mxu0 %v2719
    %2847 = vmatpush1.bf16.msra.mxu0 %v2718
    %2848 = vmatprep.subr.bf16.mxu0 %v2721
    %2849 = vmatpush1.bf16.msra.mxu0 %v2720
    %2850 = vmatprep.subr.bf16.mxu0 %v2723
    %2851 = vmatpush1.bf16.msra.mxu0 %v2722
    %2852 = vmatprep.subr.bf16.mxu0 %v2725
    %2853 = vmatpush1.bf16.msra.mxu0 %v2724
    %2854 = vmatprep.subr.bf16.mxu0 %v2727
    %2855 = vmatpush1.bf16.msra.mxu0 %v2726
    %2856 = vmatprep.subr.bf16.mxu0 %v2729
    %2857 = vmatpush1.bf16.msra.mxu0 %v2728
    %2858 = vmatprep.subr.bf16.mxu0 %v2731
    %2859 = vmatpush1.bf16.msra.mxu0 %v2730
    %2860 = vmatprep.subr.bf16.mxu0 %v2733
    %2861 = vmatpush1.bf16.msra.mxu0 %v2732
    %2862 = vmatprep.subr.bf16.mxu0 %v2735
    %2863 = vmatpush1.bf16.msra.mxu0 %v2734
    %2864 = vmatprep.subr.bf16.mxu0 %v2737
    %2865 = vmatpush1.bf16.msra.mxu0 %v2736
    %2866 = vmatprep.subr.bf16.mxu0 %v2739
    %2867 = vmatpush1.bf16.msra.mxu0 %v2738
    %2868 = vmatprep.subr.bf16.mxu0 %v2741
    %2869 = vmatpush1.bf16.msra.mxu0 %v2740
    %2870 = vmatprep.subr.bf16.mxu0 %v2743
    %2871 = vmatpush1.bf16.msra.mxu0 %v2742
    %2872 = vmatprep.subr.bf16.mxu0 %v2745
    %2873 = vmatpush1.bf16.msra.mxu0 %v2744
    %2874 = vmatprep.mubr.bf16.mxu0 %v2455
    %2875 = vmatmul.mubr.bf16.gmra.mrb[0].mxu0 %v2454
    %v2876 = vpop.f32.mrb[0].mxu0
    %v2877 = vadd.f32 0.0, %v2876
    %v2878 = vpop.f32.mrb[0].mxu0
    %v2879 = vadd.f32 0.0, %v2878
    %v2880 = vpop.f32.mrb[0].mxu0
    %v2881 = vpop.f32.mrb[0].mxu0
    %2882 = vdwg.mxu0
    %2883 = vmatprep.subr.bf16.mxu0 %v2747
    %2884 = vmatpush1.bf16.msra.mxu0 %v2746
    %2885 = vmatprep.subr.bf16.mxu0 %v2749
    %2886 = vmatpush1.bf16.msra.mxu0 %v2748
    %2887 = vmatprep.subr.bf16.mxu0 %v2751
    %2888 = vmatpush1.bf16.msra.mxu0 %v2750
    %2889 = vmatprep.subr.bf16.mxu0 %v2753
    %2890 = vmatpush1.bf16.msra.mxu0 %v2752
    %2891 = vmatprep.subr.bf16.mxu0 %v2755
    %2892 = vmatpush1.bf16.msra.mxu0 %v2754
    %2893 = vmatprep.subr.bf16.mxu0 %v2757
    %2894 = vmatpush1.bf16.msra.mxu0 %v2756
    %2895 = vmatprep.subr.bf16.mxu0 %v2759
    %2896 = vmatpush1.bf16.msra.mxu0 %v2758
    %2897 = vmatprep.subr.bf16.mxu0 %v2761
    %2898 = vmatpush1.bf16.msra.mxu0 %v2760
    %2899 = vmatprep.subr.bf16.mxu0 %v2763
    %2900 = vmatpush1.bf16.msra.mxu0 %v2762
    %2901 = vmatprep.subr.bf16.mxu0 %v2765
    %2902 = vmatpush1.bf16.msra.mxu0 %v2764
    %2903 = vmatprep.subr.bf16.mxu0 %v2767
    %2904 = vmatpush1.bf16.msra.mxu0 %v2766
    %2905 = vmatprep.subr.bf16.mxu0 %v2769
    %2906 = vmatpush1.bf16.msra.mxu0 %v2768
    %2907 = vmatprep.subr.bf16.mxu0 %v2771
    %2908 = vmatpush1.bf16.msra.mxu0 %v2770
    %2909 = vmatprep.subr.bf16.mxu0 %v2773
    %2910 = vmatpush1.bf16.msra.mxu0 %v2772
    %2911 = vmatprep.subr.bf16.mxu0 %v2775
    %2912 = vmatpush1.bf16.msra.mxu0 %v2774
    %2913 = vmatprep.subr.bf16.mxu0 %v2777
    %2914 = vmatpush1.bf16.msra.mxu0 %v2776
    %2915 = vmatprep.mubr.bf16.mxu0 %v2457
    %2916 = vmatmul.mubr.bf16.gmra.mrb[0].mxu0 %v2456
    %v2917 = vpop.f32.mrb[0].mxu0
    %v2918 = vadd.f32 %v2877, %v2917
    %v2919 = vpop.f32.mrb[0].mxu0
    %v2920 = vadd.f32 %v2879, %v2919
    %v2921 = vpop.f32.mrb[0].mxu0
    %v2922 = vpop.f32.mrb[0].mxu0
    %2923 = vdwg.mxu0
    %v2924 = vld [vmem:[%s7] sm:$0x1]
    %v2925 = vld [vmem:[%s8] sm:$0x1]
    %v2926 = vld [vmem:[%s9] sm:$0xff]
    %v2927 = vld [vmem:[%s9 + $0x8] sm:$0xff]
    %v2928 = vld [vmem:[%s9 + $0x10] sm:$0xff]
    %v2929 = vld [vmem:[%s9 + $0x18] sm:$0xff]
    %v2930 = vld [vmem:[%s9 + $0x20] sm:$0xff]
    %v2931 = vld [vmem:[%s9 + $0x28] sm:$0xff]
    %v2932 = vld [vmem:[%s9 + $0x30] sm:$0xff]
    %v2933 = vld [vmem:[%s9 + $0x38] sm:$0xff]
    %v2934 = vld [vmem:[%s9 + $0x40] sm:$0xff]
    %v2935 = vld [vmem:[%s9 + $0x48] sm:$0xff]
    %v2936 = vld [vmem:[%s9 + $0x50] sm:$0xff]
    %v2937 = vld [vmem:[%s9 + $0x58] sm:$0xff]
    %v2938 = vld [vmem:[%s9 + $0x60] sm:$0xff]
    %v2939 = vld [vmem:[%s9 + $0x68] sm:$0xff]
    %v2940 = vld [vmem:[%s9 + $0x70] sm:$0xff]
    %v2941 = vld [vmem:[%s9 + $0x78] sm:$0xff]
    %v2942 = vld [vmem:[%s9 + $0x80] sm:$0xff]
    %v2943 = vld [vmem:[%s9 + $0x88] sm:$0xff]
    %v2944 = vld [vmem:[%s9 + $0x90] sm:$0xff]
    %v2945 = vld [vmem:[%s9 + $0x98] sm:$0xff]
    %v2946 = vld [vmem:[%s9 + $0xa0] sm:$0xff]
    %v2947 = vld [vmem:[%s9 + $0xa8] sm:$0xff]
    %v2948 = vld [vmem:[%s9 + $0xb0] sm:$0xff]
    %v2949 = vld [vmem:[%s9 + $0xb8] sm:$0xff]
    %v2950 = vld [vmem:[%s9 + $0xc0] sm:$0xff]
    %v2951 = vld [vmem:[%s9 + $0xc8] sm:$0xff]
    %v2952 = vld [vmem:[%s9 + $0xd0] sm:$0xff]
    %v2953 = vld [vmem:[%s9 + $0xd8] sm:$0xff]
    %v2954 = vld [vmem:[%s9 + $0xe0] sm:$0xff]
    %v2955 = vld [vmem:[%s9 + $0xe8] sm:$0xff]
    %v2956 = vld [vmem:[%s9 + $0xf0] sm:$0xff]
    %v2957 = vld [vmem:[%s9 + $0xf8] sm:$0xff]
    %v2958 = vld [vmem:[%s10] sm:$0xff]
    %v2959 = vld [vmem:[%s10 + $0x8] sm:$0xff]
    %v2960 = vld [vmem:[%s10 + $0x10] sm:$0xff]
    %v2961 = vld [vmem:[%s10 + $0x18] sm:$0xff]
    %v2962 = vrot.slane %v2918, 4
    %v2963 = vadd.f32 %v2918, %v2962
    %v2964 = vrot.slane %v2963, 2
    %v2965 = vadd.f32 %v2963, %v2964
    %v2966 = vrot.slane %v2965, 1
    %v2967 = vadd.f32 %v2965, %v2966
    %v2968 = vrot.slane %v2920, 4
    %v2969 = vadd.f32 %v2920, %v2968
    %v2970 = vrot.slane %v2969, 2
    %v2971 = vadd.f32 %v2969, %v2970
    %v2972 = vrot.slane %v2971, 1
    %v2973 = vadd.f32 %v2971, %v2972
    %v2974 = vmul.f32 %v2918, %v2918
    %v2975 = vmul.f32 %v2920, %v2920
    %v2976 = vrot.slane %v2974, 4
    %v2977 = vadd.f32 %v2974, %v2976
    %v2978 = vrot.slane %v2977, 2
    %v2979 = vadd.f32 %v2977, %v2978
    %v2980 = vrot.slane %v2979, 1
    %v2981 = vadd.f32 %v2979, %v2980
    %v2982 = vrot.slane %v2975, 4
    %v2983 = vadd.f32 %v2975, %v2982
    %v2984 = vrot.slane %v2983, 2
    %v2985 = vadd.f32 %v2983, %v2984
    %v2986 = vrot.slane %v2985, 1
    %v2987 = vadd.f32 %v2985, %v2986
    %v2988 = vsel %vm2082, %v2967, %v2981
    %v2989 = vsel %vm2082, %v2973, %v2987
    %2990 = vmatprep.subr.mxu0 0.0
    %2991 = vmatpush1.msra.mxu0 %v2926
    %2992 = vmatprep.subr.mxu0 0.0
    %2993 = vmatpush1.msra.mxu0 %v2927
    %2994 = vmatprep.subr.mxu0 0.0
    %2995 = vmatpush1.msra.mxu0 %v2928
    %2996 = vmatprep.subr.mxu0 0.0
    %2997 = vmatpush1.msra.mxu0 %v2929
    %2998 = vmatprep.subr.mxu0 0.0
    %2999 = vmatpush1.msra.mxu0 %v2930
    %3000 = vmatprep.subr.mxu0 0.0
    %3001 = vmatpush1.msra.mxu0 %v2931
    %3002 = vmatprep.subr.mxu0 0.0
    %3003 = vmatpush1.msra.mxu0 %v2932
    %3004 = vmatprep.subr.mxu0 0.0
    %3005 = vmatpush1.msra.mxu0 %v2933
    %3006 = vmatprep.subr.mxu0 0.0
    %3007 = vmatpush1.msra.mxu0 %v2934
    %3008 = vmatprep.subr.mxu0 0.0
    %3009 = vmatpush1.msra.mxu0 %v2935
    %3010 = vmatprep.subr.mxu0 0.0
    %3011 = vmatpush1.msra.mxu0 %v2936
    %3012 = vmatprep.subr.mxu0 0.0
    %3013 = vmatpush1.msra.mxu0 %v2937
    %3014 = vmatprep.subr.mxu0 0.0
    %3015 = vmatpush1.msra.mxu0 %v2938
    %3016 = vmatprep.subr.mxu0 0.0
    %3017 = vmatpush1.msra.mxu0 %v2939
    %3018 = vmatprep.subr.mxu0 0.0
    %3019 = vmatpush1.msra.mxu0 %v2940
    %3020 = vmatprep.subr.mxu0 0.0
    %3021 = vmatpush1.msra.mxu0 %v2941
    %3022 = vmatprep.subr.mxu0 0.0
    %3023 = vmatpush1.msra.mxu0 %v2942
    %3024 = vmatprep.subr.mxu0 0.0
    %3025 = vmatpush1.msra.mxu0 %v2943
    %3026 = vmatprep.subr.mxu0 0.0
    %3027 = vmatpush1.msra.mxu0 %v2944
    %3028 = vmatprep.subr.mxu0 0.0
    %3029 = vmatpush1.msra.mxu0 %v2945
    %3030 = vmatprep.subr.mxu0 0.0
    %3031 = vmatpush1.msra.mxu0 %v2946
    %3032 = vmatprep.subr.mxu0 0.0
    %3033 = vmatpush1.msra.mxu0 %v2947
    %3034 = vmatprep.subr.mxu0 0.0
    %3035 = vmatpush1.msra.mxu0 %v2948
    %3036 = vmatprep.subr.mxu0 0.0
    %3037 = vmatpush1.msra.mxu0 %v2949
    %3038 = vmatprep.subr.mxu0 0.0
    %3039 = vmatpush1.msra.mxu0 %v2950
    %3040 = vmatprep.subr.mxu0 0.0
    %3041 = vmatpush1.msra.mxu0 %v2951
    %3042 = vmatprep.subr.mxu0 0.0
    %3043 = vmatpush1.msra.mxu0 %v2952
    %3044 = vmatprep.subr.mxu0 0.0
    %3045 = vmatpush1.msra.mxu0 %v2953
    %3046 = vmatprep.subr.mxu0 0.0
    %3047 = vmatpush1.msra.mxu0 %v2954
    %3048 = vmatprep.subr.mxu0 0.0
    %3049 = vmatpush1.msra.mxu0 %v2955
    %3050 = vmatprep.subr.mxu0 0.0
    %3051 = vmatpush1.msra.mxu0 %v2956
    %3052 = vmatprep.subr.mxu0 0.0
    %3053 = vmatpush1.msra.mxu0 %v2957
    %3054 = vmatprep.mubr.f32.mxu0 %v2989
    %3055 = vmatmul.mubr.f32.gmra.mrb[0].mxu0 %v2988
    %v3056 = vpop.f32.mrb[0].mxu0
    %v3057 = vadd.f32 0.0, %v3056
    %v3058 = vpop.f32.mrb[0].mxu0
    %3059 = vdwg.mxu0
    %v3060 = vrcp.pop 128.0
    %v3061 = vmul.f32 %v3057, %v3060
    %v3062 = vmul.f32 %v3061, %v3061
    %v3064 = vrot.slane %v3062, 7
    %v3066 = vsub.f32 %v3061, %v3064
    %v3067 = vmax.f32 %v3066, 0.0
    %v3068 = vadd.f32 %v3067, 1e-05
    %v3069 = vrsqrt.pop %v3068
    %v3072 = vunpack.c.l.s4 1966171168
    %v3073 = vunpack.c.0.s8 %v3072
    %v3074 = vlaneseq
    %v3075 = vshrl.u32 %v3074, 7
    %v3076 = vsub.s32 %v3073, %v3075
    %v3077 = vrot.slane %v3069, %v3076
    %v3078 = vcombine.high %v3077, %v3077
    %v3080 = vunpack.c.l.s4 1966171168
    %v3081 = vunpack.c.0.s8 %v3080
    %v3082 = vlaneseq
    %v3083 = vshrl.u32 %v3082, 7
    %v3084 = vsub.s32 %v3081, %v3083
    %v3085 = vrot.slane %v3078, %v3084
    %v3087 = vmul.f32 %v2924, %v3085
    %v3088 = vmul.f32 %v3061, %v3087
    %v3089 = vsub.f32 %v2925, %v3088
    %v3091 = vlaneseq
    %v3092 = vshrl.u32 %v3091, 7
    %v3093 = vsub.s32 0, %v3092
    %v3094 = vrot.slane %v3089, %v3093
    %v3096 = vsel %vm2082, %v3087, %v3094
    %vm3097 = vcmask 130048
    %v3099 = vsel %vm3097, %v3096, 0
    %3101 = vmatprep.subr.mxu0 %v2959
    %3102 = vmatpush1.msra.mxu0 %v2958
    %3103 = vmatprep.subr.mxu0 %v2961
    %3104 = vmatpush1.msra.mxu0 %v2960
    %3105 = vmatprep.subr.mxu0 0.0
    %3106 = vmatpush1.msra.mxu0 0.0
    %3107 = vmatprep.subr.mxu0 0.0
    %3108 = vmatpush1.msra.mxu0 0.0
    %3109 = vmatprep.subr.mxu0 0.0
    %3110 = vmatpush1.msra.mxu0 0.0
    %3111 = vmatprep.subr.mxu0 0.0
    %3112 = vmatpush1.msra.mxu0 0.0
    %3113 = vmatprep.subr.mxu0 0.0
    %3114 = vmatpush1.msra.mxu0 0.0
    %3115 = vmatprep.subr.mxu0 0.0
    %3116 = vmatpush1.msra.mxu0 0.0
    %3117 = vmatprep.subr.mxu0 0.0
    %3118 = vmatpush1.msra.mxu0 0.0
    %3119 = vmatprep.subr.mxu0 0.0
    %3120 = vmatpush1.msra.mxu0 0.0
    %3121 = vmatprep.subr.mxu0 0.0
    %3122 = vmatpush1.msra.mxu0 0.0
    %3123 = vmatprep.subr.mxu0 0.0
    %3124 = vmatpush1.msra.mxu0 0.0
    %3125 = vmatprep.subr.mxu0 0.0
    %3126 = vmatpush1.msra.mxu0 0.0
    %3127 = vmatprep.subr.mxu0 0.0
    %3128 = vmatpush1.msra.mxu0 0.0
    %3129 = vmatprep.subr.mxu0 0.0
    %3130 = vmatpush1.msra.mxu0 0.0
    %3131 = vmatprep.subr.mxu0 0.0
    %3132 = vmatpush1.msra.mxu0 0.0
    %3133 = vmatprep.subr.mxu0 0.0
    %3134 = vmatpush1.msra.mxu0 0.0
    %3135 = vmatprep.subr.mxu0 0.0
    %3136 = vmatpush1.msra.mxu0 0.0
    %3137 = vmatprep.subr.mxu0 0.0
    %3138 = vmatpush1.msra.mxu0 0.0
    %3139 = vmatprep.subr.mxu0 0.0
    %3140 = vmatpush1.msra.mxu0 0.0
    %3141 = vmatprep.subr.mxu0 0.0
    %3142 = vmatpush1.msra.mxu0 0.0
    %3143 = vmatprep.subr.mxu0 0.0
    %3144 = vmatpush1.msra.mxu0 0.0
    %3145 = vmatprep.subr.mxu0 0.0
    %3146 = vmatpush1.msra.mxu0 0.0
    %3147 = vmatprep.subr.mxu0 0.0
    %3148 = vmatpush1.msra.mxu0 0.0
    %3149 = vmatprep.subr.mxu0 0.0
    %3150 = vmatpush1.msra.mxu0 0.0
    %3151 = vmatprep.subr.mxu0 0.0
    %3152 = vmatpush1.msra.mxu0 0.0
    %3153 = vmatprep.subr.mxu0 0.0
    %3154 = vmatpush1.msra.mxu0 0.0
    %3155 = vmatprep.subr.mxu0 0.0
    %3156 = vmatpush1.msra.mxu0 0.0
    %3157 = vmatprep.subr.mxu0 0.0
    %3158 = vmatpush1.msra.mxu0 0.0
    %3159 = vmatprep.subr.mxu0 0.0
    %3160 = vmatpush1.msra.mxu0 0.0
    %3161 = vmatprep.subr.mxu0 0.0
    %3162 = vmatpush1.msra.mxu0 0.0
    %3163 = vmatprep.subr.mxu0 0.0
    %3164 = vmatpush1.msra.mxu0 0.0
    %3165 = vmatprep.mubr.f32.mxu0 0.0
    %3166 = vmatmul.mubr.f32.gmra.mrb[0].mxu0 %v3099
    %v3167 = vpop.f32.mrb[0].mxu0
    %v3168 = vadd.f32 0.0, %v3167
    %v3169 = vpop.f32.mrb[0].mxu0
    %v3170 = vadd.f32 0.0, %v3169
    %3171 = vdwg.mxu0
    %v3172 = vlaneseq
    %v3173 = vshrl.u32 %v3172, 7
    %v3174 = vsub.s32 0, %v3173
    %v3175 = vrot.slane %v3168, %v3174
    %v3176 = vlaneseq
    %v3177 = vshrl.u32 %v3176, 7
    %v3178 = vsub.s32 0, %v3177
    %v3179 = vrot.slane %v3170, %v3178
    %v3180 = vmul.f32 %v2918, %v3175
    %v3181 = vmul.f32 %v2920, %v3179
    %v3182 = vlaneseq
    %v3183 = vshrl.u32 %v3182, 7
    %v3184 = vsub.s32 1, %v3183
    %v3185 = vrot.slane %v3168, %v3184
    %v3186 = vlaneseq
    %v3187 = vshrl.u32 %v3186, 7
    %v3188 = vsub.s32 1, %v3187
    %v3189 = vrot.slane %v3170, %v3188
    %v3190 = vadd.f32 %v3180, %v3185
    %v3191 = vadd.f32 %v3181, %v3189
    %v3192 = vmax.f32 %v3190, 0.0
    %v3193 = vmax.f32 %v3191, 0.0
    %v3194 = vpack.c.bf16 %v3192, %v3192
    %v3195 = vpack.c.bf16 %v3193, %v3193
    %v3196 = vld [vmem:[%s11] sm:$0xff]
    %v3197 = vld [vmem:[%s11 + $0x8] sm:$0xff]
    %v3198 = vld [vmem:[%s11 + $0x10] sm:$0xff]
    %v3199 = vld [vmem:[%s11 + $0x18] sm:$0xff]
    %v3200 = vld [vmem:[%s11 + $0x20] sm:$0xff]
    %v3201 = vld [vmem:[%s11 + $0x28] sm:$0xff]
    %v3202 = vld [vmem:[%s11 + $0x30] sm:$0xff]
    %v3203 = vld [vmem:[%s11 + $0x38] sm:$0xff]
    %v3204 = vld [vmem:[%s11 + $0x40] sm:$0xff]
    %v3205 = vld [vmem:[%s11 + $0x48] sm:$0xff]
    %v3206 = vld [vmem:[%s11 + $0x50] sm:$0xff]
    %v3207 = vld [vmem:[%s11 + $0x58] sm:$0xff]
    %v3208 = vld [vmem:[%s11 + $0x60] sm:$0xff]
    %v3209 = vld [vmem:[%s11 + $0x68] sm:$0xff]
    %v3210 = vld [vmem:[%s11 + $0x70] sm:$0xff]
    %v3211 = vld [vmem:[%s11 + $0x78] sm:$0xff]
    %v3212 = vld [vmem:[%s11 + $0x80] sm:$0xff]
    %v3213 = vld [vmem:[%s11 + $0x88] sm:$0xff]
    %v3214 = vld [vmem:[%s11 + $0x90] sm:$0xff]
    %v3215 = vld [vmem:[%s11 + $0x98] sm:$0xff]
    %v3216 = vld [vmem:[%s11 + $0xa0] sm:$0xff]
    %v3217 = vld [vmem:[%s11 + $0xa8] sm:$0xff]
    %v3218 = vld [vmem:[%s11 + $0xb0] sm:$0xff]
    %v3219 = vld [vmem:[%s11 + $0xb8] sm:$0xff]
    %v3220 = vld [vmem:[%s11 + $0xc0] sm:$0xff]
    %v3221 = vld [vmem:[%s11 + $0xc8] sm:$0xff]
    %v3222 = vld [vmem:[%s11 + $0xd0] sm:$0xff]
    %v3223 = vld [vmem:[%s11 + $0xd8] sm:$0xff]
    %v3224 = vld [vmem:[%s11 + $0xe0] sm:$0xff]
    %v3225 = vld [vmem:[%s11 + $0xe8] sm:$0xff]
    %v3226 = vld [vmem:[%s11 + $0xf0] sm:$0xff]
    %v3227 = vld [vmem:[%s11 + $0xf8] sm:$0xff]
    %v3228 = vld [vmem:[%s11 + $0x100] sm:$0xff]
    %v3229 = vld [vmem:[%s11 + $0x108] sm:$0xff]
    %v3230 = vld [vmem:[%s11 + $0x110] sm:$0xff]
    %v3231 = vld [vmem:[%s11 + $0x118] sm:$0xff]
    %v3232 = vld [vmem:[%s11 + $0x120] sm:$0xff]
    %v3233 = vld [vmem:[%s11 + $0x128] sm:$0xff]
    %v3234 = vld [vmem:[%s11 + $0x130] sm:$0xff]
    %v3235 = vld [vmem:[%s11 + $0x138] sm:$0xff]
    %v3236 = vld [vmem:[%s11 + $0x140] sm:$0xff]
    %v3237 = vld [vmem:[%s11 + $0x148] sm:$0xff]
    %v3238 = vld [vmem:[%s11 + $0x150] sm:$0xff]
    %v3239 = vld [vmem:[%s11 + $0x158] sm:$0xff]
    %v3240 = vld [vmem:[%s11 + $0x160] sm:$0xff]
    %v3241 = vld [vmem:[%s11 + $0x168] sm:$0xff]
    %v3242 = vld [vmem:[%s11 + $0x170] sm:$0xff]
    %v3243 = vld [vmem:[%s11 + $0x178] sm:$0xff]
    %v3244 = vld [vmem:[%s11 + $0x180] sm:$0xff]
    %v3245 = vld [vmem:[%s11 + $0x188] sm:$0xff]
    %v3246 = vld [vmem:[%s11 + $0x190] sm:$0xff]
    %v3247 = vld [vmem:[%s11 + $0x198] sm:$0xff]
    %v3248 = vld [vmem:[%s11 + $0x1a0] sm:$0xff]
    %v3249 = vld [vmem:[%s11 + $0x1a8] sm:$0xff]
    %v3250 = vld [vmem:[%s11 + $0x1b0] sm:$0xff]
    %v3251 = vld [vmem:[%s11 + $0x1b8] sm:$0xff]
    %v3252 = vld [vmem:[%s11 + $0x1c0] sm:$0xff]
    %v3253 = vld [vmem:[%s11 + $0x1c8] sm:$0xff]
    %v3254 = vld [vmem:[%s11 + $0x1d0] sm:$0xff]
    %v3255 = vld [vmem:[%s11 + $0x1d8] sm:$0xff]
    %v3256 = vld [vmem:[%s11 + $0x1e0] sm:$0xff]
    %v3257 = vld [vmem:[%s11 + $0x1e8] sm:$0xff]
    %v3258 = vld [vmem:[%s11 + $0x1f0] sm:$0xff]
    %v3259 = vld [vmem:[%s11 + $0x1f8] sm:$0xff]
    %v3324 = vunpack.c.l.b16 %v3196
    %v3325 = vunpack.c.h.b16 %v3196
    %v3326 = vunpack.c.l.b16 %v3197
    %v3327 = vunpack.c.h.b16 %v3197
    %v3328 = vunpack.c.l.b16 %v3198
    %v3329 = vunpack.c.h.b16 %v3198
    %v3330 = vunpack.c.l.b16 %v3199
    %v3331 = vunpack.c.h.b16 %v3199
    %v3332 = vunpack.c.l.b16 %v3200
    %v3333 = vunpack.c.h.b16 %v3200
    %v3334 = vunpack.c.l.b16 %v3201
    %v3335 = vunpack.c.h.b16 %v3201
    %v3336 = vunpack.c.l.b16 %v3202
    %v3337 = vunpack.c.h.b16 %v3202
    %v3338 = vunpack.c.l.b16 %v3203
    %v3339 = vunpack.c.h.b16 %v3203
    %v3340 = vunpack.c.l.b16 %v3204
    %v3341 = vunpack.c.h.b16 %v3204
    %v3342 = vunpack.c.l.b16 %v3205
    %v3343 = vunpack.c.h.b16 %v3205
    %v3344 = vunpack.c.l.b16 %v3206
    %v3345 = vunpack.c.h.b16 %v3206
    %v3346 = vunpack.c.l.b16 %v3207
    %v3347 = vunpack.c.h.b16 %v3207
    %v3348 = vunpack.c.l.b16 %v3208
    %v3349 = vunpack.c.h.b16 %v3208
    %v3350 = vunpack.c.l.b16 %v3209
    %v3351 = vunpack.c.h.b16 %v3209
    %v3352 = vunpack.c.l.b16 %v3210
    %v3353 = vunpack.c.h.b16 %v3210
    %v3354 = vunpack.c.l.b16 %v3211
    %v3355 = vunpack.c.h.b16 %v3211
    %v3356 = vunpack.c.l.b16 %v3212
    %v3357 = vunpack.c.h.b16 %v3212
    %v3358 = vunpack.c.l.b16 %v3213
    %v3359 = vunpack.c.h.b16 %v3213
    %v3360 = vunpack.c.l.b16 %v3214
    %v3361 = vunpack.c.h.b16 %v3214
    %v3362 = vunpack.c.l.b16 %v3215
    %v3363 = vunpack.c.h.b16 %v3215
    %v3364 = vunpack.c.l.b16 %v3216
    %v3365 = vunpack.c.h.b16 %v3216
    %v3366 = vunpack.c.l.b16 %v3217
    %v3367 = vunpack.c.h.b16 %v3217
    %v3368 = vunpack.c.l.b16 %v3218
    %v3369 = vunpack.c.h.b16 %v3218
    %v3370 = vunpack.c.l.b16 %v3219
    %v3371 = vunpack.c.h.b16 %v3219
    %v3372 = vunpack.c.l.b16 %v3220
    %v3373 = vunpack.c.h.b16 %v3220
    %v3374 = vunpack.c.l.b16 %v3221
    %v3375 = vunpack.c.h.b16 %v3221
    %v3376 = vunpack.c.l.b16 %v3222
    %v3377 = vunpack.c.h.b16 %v3222
    %v3378 = vunpack.c.l.b16 %v3223
    %v3379 = vunpack.c.h.b16 %v3223
    %v3380 = vunpack.c.l.b16 %v3224
    %v3381 = vunpack.c.h.b16 %v3224
    %v3382 = vunpack.c.l.b16 %v3225
    %v3383 = vunpack.c.h.b16 %v3225
    %v3384 = vunpack.c.l.b16 %v3226
    %v3385 = vunpack.c.h.b16 %v3226
    %v3386 = vunpack.c.l.b16 %v3227
    %v3387 = vunpack.c.h.b16 %v3227
    %v3388 = vunpack.c.l.b16 %v3228
    %v3389 = vunpack.c.h.b16 %v3228
    %v3390 = vunpack.c.l.b16 %v3229
    %v3391 = vunpack.c.h.b16 %v3229
    %v3392 = vunpack.c.l.b16 %v3230
    %v3393 = vunpack.c.h.b16 %v3230
    %v3394 = vunpack.c.l.b16 %v3231
    %v3395 = vunpack.c.h.b16 %v3231
    %v3396 = vunpack.c.l.b16 %v3232
    %v3397 = vunpack.c.h.b16 %v3232
    %v3398 = vunpack.c.l.b16 %v3233
    %v3399 = vunpack.c.h.b16 %v3233
    %v3400 = vunpack.c.l.b16 %v3234
    %v3401 = vunpack.c.h.b16 %v3234
    %v3402 = vunpack.c.l.b16 %v3235
    %v3403 = vunpack.c.h.b16 %v3235
    %v3404 = vunpack.c.l.b16 %v3236
    %v3405 = vunpack.c.h.b16 %v3236
    %v3406 = vunpack.c.l.b16 %v3237
    %v3407 = vunpack.c.h.b16 %v3237
    %v3408 = vunpack.c.l.b16 %v3238
    %v3409 = vunpack.c.h.b16 %v3238
    %v3410 = vunpack.c.l.b16 %v3239
    %v3411 = vunpack.c.h.b16 %v3239
    %v3412 = vunpack.c.l.b16 %v3240
    %v3413 = vunpack.c.h.b16 %v3240
    %v3414 = vunpack.c.l.b16 %v3241
    %v3415 = vunpack.c.h.b16 %v3241
    %v3416 = vunpack.c.l.b16 %v3242
    %v3417 = vunpack.c.h.b16 %v3242
    %v3418 = vunpack.c.l.b16 %v3243
    %v3419 = vunpack.c.h.b16 %v3243
    %v3420 = vunpack.c.l.b16 %v3244
    %v3421 = vunpack.c.h.b16 %v3244
    %v3422 = vunpack.c.l.b16 %v3245
    %v3423 = vunpack.c.h.b16 %v3245
    %v3424 = vunpack.c.l.b16 %v3246
    %v3425 = vunpack.c.h.b16 %v3246
    %v3426 = vunpack.c.l.b16 %v3247
    %v3427 = vunpack.c.h.b16 %v3247
    %v3428 = vunpack.c.l.b16 %v3248
    %v3429 = vunpack.c.h.b16 %v3248
    %v3430 = vunpack.c.l.b16 %v3249
    %v3431 = vunpack.c.h.b16 %v3249
    %v3432 = vunpack.c.l.b16 %v3250
    %v3433 = vunpack.c.h.b16 %v3250
    %v3434 = vunpack.c.l.b16 %v3251
    %v3435 = vunpack.c.h.b16 %v3251
    %v3436 = vunpack.c.l.b16 %v3252
    %v3437 = vunpack.c.h.b16 %v3252
    %v3438 = vunpack.c.l.b16 %v3253
    %v3439 = vunpack.c.h.b16 %v3253
    %v3440 = vunpack.c.l.b16 %v3254
    %v3441 = vunpack.c.h.b16 %v3254
    %v3442 = vunpack.c.l.b16 %v3255
    %v3443 = vunpack.c.h.b16 %v3255
    %v3444 = vunpack.c.l.b16 %v3256
    %v3445 = vunpack.c.h.b16 %v3256
    %v3446 = vunpack.c.l.b16 %v3257
    %v3447 = vunpack.c.h.b16 %v3257
    %v3448 = vunpack.c.l.b16 %v3258
    %v3449 = vunpack.c.h.b16 %v3258
    %v3450 = vunpack.c.l.b16 %v3259
    %v3451 = vunpack.c.h.b16 %v3259
    %v3452 = vpack.c.b16 %v3328, %v3324
    %v3453 = vpack.c.b16 %v3329, %v3325
    %v3454 = vpack.c.b16 %v3330, %v3326
    %v3455 = vpack.c.b16 %v3331, %v3327
    %v3456 = vpack.c.b16 %v3336, %v3332
    %v3457 = vpack.c.b16 %v3337, %v3333
    %v3458 = vpack.c.b16 %v3338, %v3334
    %v3459 = vpack.c.b16 %v3339, %v3335
    %v3460 = vpack.c.b16 %v3344, %v3340
    %v3461 = vpack.c.b16 %v3345, %v3341
    %v3462 = vpack.c.b16 %v3346, %v3342
    %v3463 = vpack.c.b16 %v3347, %v3343
    %v3464 = vpack.c.b16 %v3352, %v3348
    %v3465 = vpack.c.b16 %v3353, %v3349
    %v3466 = vpack.c.b16 %v3354, %v3350
    %v3467 = vpack.c.b16 %v3355, %v3351
    %v3468 = vpack.c.b16 %v3360, %v3356
    %v3469 = vpack.c.b16 %v3361, %v3357
    %v3470 = vpack.c.b16 %v3362, %v3358
    %v3471 = vpack.c.b16 %v3363, %v3359
    %v3472 = vpack.c.b16 %v3368, %v3364
    %v3473 = vpack.c.b16 %v3369, %v3365
    %v3474 = vpack.c.b16 %v3370, %v3366
    %v3475 = vpack.c.b16 %v3371, %v3367
    %v3476 = vpack.c.b16 %v3376, %v3372
    %v3477 = vpack.c.b16 %v3377, %v3373
    %v3478 = vpack.c.b16 %v3378, %v3374
    %v3479 = vpack.c.b16 %v3379, %v3375
    %v3480 = vpack.c.b16 %v3384, %v3380
    %v3481 = vpack.c.b16 %v3385, %v3381
    %v3482 = vpack.c.b16 %v3386, %v3382
    %v3483 = vpack.c.b16 %v3387, %v3383
    %v3484 = vpack.c.b16 %v3392, %v3388
    %v3485 = vpack.c.b16 %v3393, %v3389
    %v3486 = vpack.c.b16 %v3394, %v3390
    %v3487 = vpack.c.b16 %v3395, %v3391
    %v3488 = vpack.c.b16 %v3400, %v3396
    %v3489 = vpack.c.b16 %v3401, %v3397
    %v3490 = vpack.c.b16 %v3402, %v3398
    %v3491 = vpack.c.b16 %v3403, %v3399
    %v3492 = vpack.c.b16 %v3408, %v3404
    %v3493 = vpack.c.b16 %v3409, %v3405
    %v3494 = vpack.c.b16 %v3410, %v3406
    %v3495 = vpack.c.b16 %v3411, %v3407
    %v3496 = vpack.c.b16 %v3416, %v3412
    %v3497 = vpack.c.b16 %v3417, %v3413
    %v3498 = vpack.c.b16 %v3418, %v3414
    %v3499 = vpack.c.b16 %v3419, %v3415
    %v3500 = vpack.c.b16 %v3424, %v3420
    %v3501 = vpack.c.b16 %v3425, %v3421
    %v3502 = vpack.c.b16 %v3426, %v3422
    %v3503 = vpack.c.b16 %v3427, %v3423
    %v3504 = vpack.c.b16 %v3432, %v3428
    %v3505 = vpack.c.b16 %v3433, %v3429
    %v3506 = vpack.c.b16 %v3434, %v3430
    %v3507 = vpack.c.b16 %v3435, %v3431
    %v3508 = vpack.c.b16 %v3440, %v3436
    %v3509 = vpack.c.b16 %v3441, %v3437
    %v3510 = vpack.c.b16 %v3442, %v3438
    %v3511 = vpack.c.b16 %v3443, %v3439
    %v3512 = vpack.c.b16 %v3448, %v3444
    %v3513 = vpack.c.b16 %v3449, %v3445
    %v3514 = vpack.c.b16 %v3450, %v3446
    %v3515 = vpack.c.b16 %v3451, %v3447
    %3580 = vmatprep.subr.bf16.mxu0 %v3453
    %3581 = vmatpush1.bf16.msra.mxu0 %v3452
    %3582 = vmatprep.subr.bf16.mxu0 %v3457
    %3583 = vmatpush1.bf16.msra.mxu0 %v3456
    %3584 = vmatprep.subr.bf16.mxu0 %v3461
    %3585 = vmatpush1.bf16.msra.mxu0 %v3460
    %3586 = vmatprep.subr.bf16.mxu0 %v3465
    %3587 = vmatpush1.bf16.msra.mxu0 %v3464
    %3588 = vmatprep.subr.bf16.mxu0 %v3469
    %3589 = vmatpush1.bf16.msra.mxu0 %v3468
    %3590 = vmatprep.subr.bf16.mxu0 %v3473
    %3591 = vmatpush1.bf16.msra.mxu0 %v3472
    %3592 = vmatprep.subr.bf16.mxu0 %v3477
    %3593 = vmatpush1.bf16.msra.mxu0 %v3476
    %3594 = vmatprep.subr.bf16.mxu0 %v3481
    %3595 = vmatpush1.bf16.msra.mxu0 %v3480
    %3596 = vmatprep.subr.bf16.mxu0 %v3485
    %3597 = vmatpush1.bf16.msra.mxu0 %v3484
    %3598 = vmatprep.subr.bf16.mxu0 %v3489
    %3599 = vmatpush1.bf16.msra.mxu0 %v3488
    %3600 = vmatprep.subr.bf16.mxu0 %v3493
    %3601 = vmatpush1.bf16.msra.mxu0 %v3492
    %3602 = vmatprep.subr.bf16.mxu0 %v3497
    %3603 = vmatpush1.bf16.msra.mxu0 %v3496
    %3604 = vmatprep.subr.bf16.mxu0 %v3501
    %3605 = vmatpush1.bf16.msra.mxu0 %v3500
    %3606 = vmatprep.subr.bf16.mxu0 %v3505
    %3607 = vmatpush1.bf16.msra.mxu0 %v3504
    %3608 = vmatprep.subr.bf16.mxu0 %v3509
    %3609 = vmatpush1.bf16.msra.mxu0 %v3508
    %3610 = vmatprep.subr.bf16.mxu0 %v3513
    %3611 = vmatpush1.bf16.msra.mxu0 %v3512
    %3612 = vmatprep.mubr.bf16.mxu0 %v3195
    %3613 = vmatmul.mubr.bf16.gmra.mrb[0].mxu0 %v3194
    %v3614 = vpop.f32.mrb[0].mxu0
    %v3615 = vadd.f32 0.0, %v3614
    %v3616 = vpop.f32.mrb[0].mxu0
    %v3617 = vadd.f32 0.0, %v3616
    %v3618 = vpop.f32.mrb[0].mxu0
    %v3619 = vpop.f32.mrb[0].mxu0
    %3620 = vdwg.mxu0
    %3621 = vmatprep.subr.bf16.mxu0 %v3455
    %3622 = vmatpush1.bf16.msra.mxu0 %v3454
    %3623 = vmatprep.subr.bf16.mxu0 %v3459
    %3624 = vmatpush1.bf16.msra.mxu0 %v3458
    %3625 = vmatprep.subr.bf16.mxu0 %v3463
    %3626 = vmatpush1.bf16.msra.mxu0 %v3462
    %3627 = vmatprep.subr.bf16.mxu0 %v3467
    %3628 = vmatpush1.bf16.msra.mxu0 %v3466
    %3629 = vmatprep.subr.bf16.mxu0 %v3471
    %3630 = vmatpush1.bf16.msra.mxu0 %v3470
    %3631 = vmatprep.subr.bf16.mxu0 %v3475
    %3632 = vmatpush1.bf16.msra.mxu0 %v3474
    %3633 = vmatprep.subr.bf16.mxu0 %v3479
    %3634 = vmatpush1.bf16.msra.mxu0 %v3478
    %3635 = vmatprep.subr.bf16.mxu0 %v3483
    %3636 = vmatpush1.bf16.msra.mxu0 %v3482
    %3637 = vmatprep.subr.bf16.mxu0 %v3487
    %3638 = vmatpush1.bf16.msra.mxu0 %v3486
    %3639 = vmatprep.subr.bf16.mxu0 %v3491
    %3640 = vmatpush1.bf16.msra.mxu0 %v3490
    %3641 = vmatprep.subr.bf16.mxu0 %v3495
    %3642 = vmatpush1.bf16.msra.mxu0 %v3494
    %3643 = vmatprep.subr.bf16.mxu0 %v3499
    %3644 = vmatpush1.bf16.msra.mxu0 %v3498
    %3645 = vmatprep.subr.bf16.mxu0 %v3503
    %3646 = vmatpush1.bf16.msra.mxu0 %v3502
    %3647 = vmatprep.subr.bf16.mxu0 %v3507
    %3648 = vmatpush1.bf16.msra.mxu0 %v3506
    %3649 = vmatprep.subr.bf16.mxu0 %v3511
    %3650 = vmatpush1.bf16.msra.mxu0 %v3510
    %3651 = vmatprep.subr.bf16.mxu0 %v3515
    %3652 = vmatpush1.bf16.msra.mxu0 %v3514
    %3653 = vmatprep.mubr.bf16.mxu0 %v3195
    %3654 = vmatmul.mubr.bf16.gmra.mrb[0].mxu0 %v3194
    %v3655 = vpop.f32.mrb[0].mxu0
    %v3656 = vadd.f32 0.0, %v3655
    %v3657 = vpop.f32.mrb[0].mxu0
    %v3658 = vadd.f32 0.0, %v3657
    %v3659 = vpop.f32.mrb[0].mxu0
    %v3660 = vpop.f32.mrb[0].mxu0
    %3661 = vdwg.mxu0
    %v3662 = vrot.slane %v3615, 4
    %v3663 = vadd.f32 %v3615, %v3662
    %v3664 = vrot.slane %v3663, 2
    %v3665 = vadd.f32 %v3663, %v3664
    %v3666 = vrot.slane %v3665, 1
    %v3667 = vadd.f32 %v3665, %v3666
    %v3668 = vrot.slane %v3617, 4
    %v3669 = vadd.f32 %v3617, %v3668
    %v3670 = vrot.slane %v3669, 2
    %v3671 = vadd.f32 %v3669, %v3670
    %v3672 = vrot.slane %v3671, 1
    %v3673 = vadd.f32 %v3671, %v3672
    %v3674 = vrot.slane %v3656, 4
    %v3675 = vadd.f32 %v3656, %v3674
    %v3676 = vrot.slane %v3675, 2
    %v3677 = vadd.f32 %v3675, %v3676
    %v3678 = vrot.slane %v3677, 1
    %v3679 = vadd.f32 %v3677, %v3678
    %v3680 = vrot.slane %v3658, 4
    %v3681 = vadd.f32 %v3658, %v3680
    %v3682 = vrot.slane %v3681, 2
    %v3683 = vadd.f32 %v3681, %v3682
    %v3684 = vrot.slane %v3683, 1
    %v3685 = vadd.f32 %v3683, %v3684
    %v3686 = vrcp.pop 8.0
    %v3687 = vmul.f32 %v3667, %v3686
    %v3688 = vmul.f32 %v3673, %v3686
    %v3689 = vmul.f32 %v3679, %v3686
    %v3690 = vmul.f32 %v3685, %v3686
    %v3691 = vsub.f32 %v3615, %v3687
    %v3692 = vsub.f32 %v3617, %v3688
    %v3693 = vsub.f32 %v3656, %v3689
    %v3694 = vsub.f32 %v3658, %v3690
    %v3695 = vmul.f32 %v3691, %v3691
    %v3696 = vmul.f32 %v3692, %v3692
    %v3697 = vmul.f32 %v3693, %v3693
    %v3698 = vmul.f32 %v3694, %v3694
    %v3699 = vrot.slane %v3695, 4
    %v3700 = vadd.f32 %v3695, %v3699
    %v3701 = vrot.slane %v3700, 2
    %v3702 = vadd.f32 %v3700, %v3701
    %v3703 = vrot.slane %v3702, 1
    %v3704 = vadd.f32 %v3702, %v3703
    %v3705 = vrot.slane %v3696, 4
    %v3706 = vadd.f32 %v3696, %v3705
    %v3707 = vrot.slane %v3706, 2
    %v3708 = vadd.f32 %v3706, %v3707
    %v3709 = vrot.slane %v3708, 1
    %v3710 = vadd.f32 %v3708, %v3709
    %v3711 = vrot.slane %v3697, 4
    %v3712 = vadd.f32 %v3697, %v3711
    %v3713 = vrot.slane %v3712, 2
    %v3714 = vadd.f32 %v3712, %v3713
    %v3715 = vrot.slane %v3714, 1
    %v3716 = vadd.f32 %v3714, %v3715
    %v3717 = vrot.slane %v3698, 4
    %v3718 = vadd.f32 %v3698, %v3717
    %v3719 = vrot.slane %v3718, 2
    %v3720 = vadd.f32 %v3718, %v3719
    %v3721 = vrot.slane %v3720, 1
    %v3722 = vadd.f32 %v3720, %v3721
    %v3723 = vmul.f32 %v3704, %v3686
    %v3724 = vmul.f32 %v3710, %v3686
    %v3725 = vmul.f32 %v3716, %v3686
    %v3726 = vmul.f32 %v3722, %v3686
    %v3727 = vadd.f32 %v3723, 1e-05
    %v3728 = vadd.f32 %v3724, 1e-05
    %v3729 = vadd.f32 %v3725, 1e-05
    %v3730 = vadd.f32 %v3726, 1e-05
    %v3731 = vrsqrt.pop %v3727
    %v3732 = vrsqrt.pop %v3728
    %v3733 = vrsqrt.pop %v3729
    %v3734 = vrsqrt.pop %v3730
    %v3735 = vmul.f32 %v3691, %v3731
    %v3736 = vmul.f32 %v3692, %v3732
    %v3737 = vmul.f32 %v3693, %v3733
    %v3738 = vmul.f32 %v3694, %v3734
    %v3739 = vld [vmem:[%s12] sm:$0xf]
    %v3741 = vlaneseq
    %v3742 = vshrl.u32 %v3741, 7
    %v3743 = vsub.s32 0, %v3742
    %v3744 = vrot.slane %v3739, %v3743
    %v3745 = vlaneseq
    %v3746 = vshrl.u32 %v3745, 7
    %v3747 = vsub.s32 1, %v3746
    %v3748 = vrot.slane %v3739, %v3747
    %v3749 = vlaneseq
    %v3750 = vshrl.u32 %v3749, 7
    %v3751 = vsub.s32 2, %v3750
    %v3752 = vrot.slane %v3739, %v3751
    %v3753 = vlaneseq
    %v3754 = vshrl.u32 %v3753, 7
    %v3755 = vsub.s32 3, %v3754
    %v3756 = vrot.slane %v3739, %v3755
    %v3761 = vmul.f32 %v3735, %v3744
    %v3762 = vmul.f32 %v3736, %v3748
    %v3763 = vmul.f32 %v3737, %v3752
    %v3764 = vmul.f32 %v3738, %v3756
    %v3765 = vld [vmem:[%s13] sm:$0xf]
    %v3767 = vlaneseq
    %v3768 = vshrl.u32 %v3767, 7
    %v3769 = vsub.s32 0, %v3768
    %v3770 = vrot.slane %v3765, %v3769
    %v3771 = vlaneseq
    %v3772 = vshrl.u32 %v3771, 7
    %v3773 = vsub.s32 1, %v3772
    %v3774 = vrot.slane %v3765, %v3773
    %v3775 = vlaneseq
    %v3776 = vshrl.u32 %v3775, 7
    %v3777 = vsub.s32 2, %v3776
    %v3778 = vrot.slane %v3765, %v3777
    %v3779 = vlaneseq
    %v3780 = vshrl.u32 %v3779, 7
    %v3781 = vsub.s32 3, %v3780
    %v3782 = vrot.slane %v3765, %v3781
    %v3787 = vadd.f32 %v3761, %v3770
    %v3788 = vadd.f32 %v3762, %v3774
    %v3789 = vadd.f32 %v3763, %v3778
    %v3790 = vadd.f32 %v3764, %v3782
    %vm3791 = vcmp.gt.f32.partialorder %v3787, 0.0
    %vm3792 = vcmp.gt.f32.partialorder %v3788, 0.0
    %vm3793 = vcmp.gt.f32.partialorder %v3789, 0.0
    %vm3794 = vcmp.gt.f32.partialorder %v3790, 0.0
    %v3795 = vmul.f32 %v3787, 0.2
    %v3796 = vmul.f32 %v3788, 0.2
    %v3797 = vmul.f32 %v3789, 0.2
    %v3798 = vmul.f32 %v3790, 0.2
    %v3799 = vsel %vm3791, %v3787, %v3795
    %v3800 = vsel %vm3792, %v3788, %v3796
    %v3801 = vsel %vm3793, %v3789, %v3797
    %v3802 = vsel %vm3794, %v3790, %v3798
    %v3803 = vld [vmem:[%s14] sm:$0xf]
    %v3805 = vlaneseq
    %v3806 = vshrl.u32 %v3805, 7
    %v3807 = vsub.s32 0, %v3806
    %v3808 = vrot.slane %v3803, %v3807
    %v3809 = vlaneseq
    %v3810 = vshrl.u32 %v3809, 7
    %v3811 = vsub.s32 1, %v3810
    %v3812 = vrot.slane %v3803, %v3811
    %v3813 = vlaneseq
    %v3814 = vshrl.u32 %v3813, 7
    %v3815 = vsub.s32 2, %v3814
    %v3816 = vrot.slane %v3803, %v3815
    %v3817 = vlaneseq
    %v3818 = vshrl.u32 %v3817, 7
    %v3819 = vsub.s32 3, %v3818
    %v3820 = vrot.slane %v3803, %v3819
    %v3825 = vmul.f32 %v3799, %v3808
    %v3826 = vmul.f32 %v3800, %v3812
    %v3827 = vmul.f32 %v3801, %v3816
    %v3828 = vmul.f32 %v3802, %v3820
    %v3829 = vadd.f32 %v3825, %v3826
    %v3830 = vadd.f32 %v3829, %v3827
    %v3831 = vadd.f32 %v3830, %v3828
    %3832 = vadd.xlane.f32.xlu0 %v3831
    %v3833 = vpop.xlane.xlu0 %3832
    %v3834 = vmul.f32 %v3833, 0.5
    %v3835 = vtanh.pop %v3834
    %v3836 = vadd.f32 %v3835, 1.0
    %v3837 = vmul.f32 %v3836, 0.5
    %vm3838 = vcmask 7168
    %3839 = vst.msk [vmem:[%s15] sm:$0xff] %vm3838, %v3837
    // Predicated region
    $region66: #{discriminator_forward.1} parent=1 // pred_check
      _
    $region67: #{discriminator_forward.1} parent=1 // pred_check_branch
      %3841 = sbr.rel (0) target = $region69
    $region68: #{discriminator_forward.1} parent=1 // pred_region
      _
    $region69: #{discriminator_forward.1} parent=1 // pred_fallthru
      _
    // Predicated region
    $region70: #{discriminator_forward.1} parent=1 // pred_check
      _
    $region71: #{discriminator_forward.1} parent=1 // pred_check_branch
      %3843 = sbr.rel (0) target = $region73
    $region72: #{discriminator_forward.1} parent=1 // pred_region
      _
    $region73: #{discriminator_forward.1} parent=1 // pred_fallthru
      _
    %3844 = vsyncpa [#allocation3], 1

</llo_original>
